<compile_context>
chip_gen: v7x
topology: tpu7x:2x2x1
jax: 0.10.0
libtpu: 0.0.40
codegen_flags: <defaults>
</compile_context>

<pallas_src>
import functools

import jax
import jax.numpy as jnp
from jax import lax
from jax.experimental import pallas as pl
from jax.experimental.pallas import tpu as pltpu

LN_EPS = 1e-6                      # build_norm_layer default eps in the spec
VMEM_LIMIT = 64 * 1024 * 1024      # scoped-VMEM ceiling (<= physical on v7x)


# ----------------------------------------------------------------------------
# helpers
# ----------------------------------------------------------------------------
def _round_up(x, m):
    return (x + m - 1) // m * m


def _pick_l_tile(hw, cap=1024):
    # Largest multiple of 128 that divides H*W (<= cap).  cap=1024 keeps the
    # per-step VMEM of the fused MLP kernel modest on v7x (64 MiB); raise on
    # v6e/v5e (128 MiB) for real InternImage stage sizes.
    best = None
    t = 128
    while t <= min(hw, cap):
        if hw % t == 0:
            best = t
        t += 128
    return best if best is not None else hw


# Single-buffer grid-invariant operands (weights / biases / LN affine params):
# their block index never changes, so double-buffering is pure wasted VMEM.
try:
    pl.BlockSpec((8, 128), lambda i: (0, 0), pipeline_mode=pl.Buffered(1))
    _HAS_PIPELINE_MODE = True
except Exception:  # pragma: no cover - older jax without pipeline_mode
    _HAS_PIPELINE_MODE = False


def _const_spec(block_shape):
    idx = lambda *_: (0,) * len(block_shape)
    if _HAS_PIPELINE_MODE:
        return pl.BlockSpec(block_shape, idx, pipeline_mode=pl.Buffered(1))
    return pl.BlockSpec(block_shape, idx)


def _gelu(x):
    # TODO(synk): nn.GELU() defaults to the exact erf form; the tanh
    # approximation is used so the kernel only needs EUP tanh.
    return jax.nn.gelu(x, approximate=True)


def _ln_channels_first(x_cl, g_col, b_col):
    """LayerNorm over the channel axis of a (C, T) slab (channels-first layout).

    Lane axis = T (multiple of 128): loads/stores stay lane-dense and the
    reduction is cross-sublane/vreg VALU work instead of an XLU lane reduce.
    """
    mu = jnp.mean(x_cl, axis=0, keepdims=True)
    var = jnp.mean(jnp.square(x_cl - mu), axis=0, keepdims=True)
    return (x_cl - mu) * lax.rsqrt(var + LN_EPS) * g_col + b_col


def _ln_channels_last(x, g, b):
    mu = jnp.mean(x, axis=-1, keepdims=True)
    var = jnp.mean(jnp.square(x - mu), axis=-1, keepdims=True)
    return (x - mu) * lax.rsqrt(var + LN_EPS) * g + b


# ----------------------------------------------------------------------------
# Kernel A: norm1 (+ fused input_proj), reading NCHW slabs
#   outputs: x1 (normalized, NCHW layout, for the dw conv)
#            x_proj = x1 @ inp_w + inp_b (token layout, for the DCNv3 gather)
# ----------------------------------------------------------------------------
def _norm1_inproj_kernel(x_ref, g_ref, b_ref, w_ref, wb_ref, x1_ref, xp_ref):
    x = x_ref[...].astype(jnp.float32)                          # (C, T)
    xn = _ln_channels_first(x, g_ref[...], b_ref[...])
    x1_ref[...] = xn.astype(x1_ref.dtype)                       # lane-dense NCHW store
    # input_proj fused in the same pass; bf16 MXU operands, f32 accumulation.
    xp = jnp.dot(xn.T.astype(jnp.bfloat16), w_ref[...],
                 preferred_element_type=jnp.float32) + wb_ref[...]
    xp_ref[...] = xp.astype(xp_ref.dtype)


def norm1_and_input_proj(x_ncl, gamma, beta, inp_w_bf16, inp_b, *, l_tile):
    N, C, HW = x_ncl.shape
    assert HW % l_tile == 0
    t_per_n = HW // l_tile
    L = N * HW
    return pl.pallas_call(
        _norm1_inproj_kernel,
        out_shape=(jax.ShapeDtypeStruct((N, C, HW), x_ncl.dtype),   # x1 (NCHW)
                   jax.ShapeDtypeStruct((L, C), x_ncl.dtype)),      # x_proj (tokens)
        grid_spec=pltpu.PrefetchScalarGridSpec(
            num_scalar_prefetch=0,
            grid=(N, t_per_n),
            in_specs=[
                pl.BlockSpec((pl.Squeezed(), C, l_tile), lambda n, t: (n, 0, t)),
                _const_spec((C, 1)),
                _const_spec((C, 1)),
                _const_spec((C, C)),
                _const_spec((1, C)),
            ],
            out_specs=[
                pl.BlockSpec((pl.Squeezed(), C, l_tile), lambda n, t: (n, 0, t)),
                pl.BlockSpec((l_tile, C), lambda n, t: (n * t_per_n + t, 0)),
            ],
        ),
        compiler_params=pltpu.CompilerParams(
            dimension_semantics=("parallel", "parallel"),
            vmem_limit_bytes=VMEM_LIMIT),
    )(x_ncl, gamma.reshape(C, 1), beta.reshape(C, 1), inp_w_bf16,
      inp_b.reshape(1, C))


# ----------------------------------------------------------------------------
# Kernel B: dw-branch LN + GELU + concatenated offset/mask projection
#   (single lane-dense matmul, padded to a multiple of 128 output columns)
# ----------------------------------------------------------------------------
def _dwnorm_offmask_kernel(x_ref, g_ref, b_ref, w_ref, wb_ref, o_ref):
    x = x_ref[...].astype(jnp.float32)                          # (C, T) NCHW slab
    xn = _gelu(_ln_channels_first(x, g_ref[...], b_ref[...]))
    y = jnp.dot(xn.T.astype(jnp.bfloat16), w_ref[...],
                preferred_element_type=jnp.float32) + wb_ref[...]
    o_ref[...] = y.astype(o_ref.dtype)


def dwnorm_gelu_offset_mask(dw_ncl, gamma, beta, w_bf16, b_row, *, l_tile):
    N, C, HW = dw_ncl.shape
    Cout = w_bf16.shape[1]
    assert HW % l_tile == 0
    t_per_n = HW // l_tile
    L = N * HW
    return pl.pallas_call(
        _dwnorm_offmask_kernel,
        out_shape=jax.ShapeDtypeStruct((L, Cout), jnp.float32),
        grid_spec=pltpu.PrefetchScalarGridSpec(
            num_scalar_prefetch=0,
            grid=(N, t_per_n),
            in_specs=[
                pl.BlockSpec((pl.Squeezed(), C, l_tile), lambda n, t: (n, 0, t)),
                _const_spec((C, 1)),
                _const_spec((C, 1)),
                _const_spec((C, Cout)),
                _const_spec((1, Cout)),
            ],
            out_specs=pl.BlockSpec((l_tile, Cout),
                                   lambda n, t: (n * t_per_n + t, 0)),
        ),
        compiler_params=pltpu.CompilerParams(
            dimension_semantics=("parallel", "parallel"),
            vmem_limit_bytes=VMEM_LIMIT),
    )(dw_ncl, gamma.reshape(C, 1), beta.reshape(C, 1), w_bf16, b_row)


# ----------------------------------------------------------------------------
# Kernel C: output_proj + residual(NCHW) + norm2 + fc1/GELU/fc2 + residual,
# all in channels-first (C, T) layout so the result is stored straight back
# as lane-dense NCHW slabs with zero in-kernel transposes.
# ----------------------------------------------------------------------------
def _proj_res_ln_mlp_kernel(s_ref, wo_ref, bo_ref, r_ref, g2_ref, b2_ref,
                            w1_ref, b1_ref, w2_ref, bb2_ref, o_ref):
    s = s_ref[...].astype(jnp.bfloat16)                         # (T, C) sampled tokens
    # output_proj with the result already channels-first: contract the channel
    # axis of both operands (NT matmul) -> (C, T).
    y = lax.dot_general(wo_ref[...], s, (((1,), (1,)), ((), ())),
                        preferred_element_type=jnp.float32)
    xs = r_ref[...].astype(jnp.float32) + y + bo_ref[...]       # x = x + dcn(norm1(x))
    xn = _ln_channels_first(xs, g2_ref[...], b2_ref[...])       # norm2
    h = jnp.dot(w1_ref[...], xn.astype(jnp.bfloat16),
                preferred_element_type=jnp.float32) + b1_ref[...]   # (Hd, T)
    h = _gelu(h)
    y2 = jnp.dot(w2_ref[...], h.astype(jnp.bfloat16),
                 preferred_element_type=jnp.float32) + bb2_ref[...]  # (C, T)
    o_ref[...] = (xs + y2).astype(o_ref.dtype)                  # x = x + mlp(norm2(x))


def outproj_res_ln2_mlp(sampled_tok, out_w_t_bf16, out_b, x_ncl, g2, b2,
                        fc1_w_t_bf16, fc1_b, fc2_w_t_bf16, fc2_b, *, l_tile):
    N, C, HW = x_ncl.shape
    Hd = fc1_w_t_bf16.shape[0]
    L, Cin = sampled_tok.shape
    assert L == N * HW and HW % l_tile == 0
    t_per_n = HW // l_tile
    return pl.pallas_call(
        _proj_res_ln_mlp_kernel,
        out_shape=jax.ShapeDtypeStruct((N, C, HW), x_ncl.dtype),
        grid_spec=pltpu.PrefetchScalarGridSpec(
            num_scalar_prefetch=0,
            grid=(N, t_per_n),
            in_specs=[
                pl.BlockSpec((l_tile, Cin), lambda n, t: (n * t_per_n + t, 0)),
                _const_spec((C, Cin)),
                _const_spec((C, 1)),
                pl.BlockSpec((pl.Squeezed(), C, l_tile), lambda n, t: (n, 0, t)),
                _const_spec((C, 1)),
                _const_spec((C, 1)),
                _const_spec((Hd, C)),
                _const_spec((Hd, 1)),
                _const_spec((C, Hd)),
                _const_spec((C, 1)),
            ],
            out_specs=pl.BlockSpec((pl.Squeezed(), C, l_tile),
                                   lambda n, t: (n, 0, t)),
        ),
        compiler_params=pltpu.CompilerParams(
            dimension_semantics=("parallel", "parallel"),
            vmem_limit_bytes=VMEM_LIMIT),
    )(sampled_tok, out_w_t_bf16, out_b.reshape(C, 1), x_ncl,
      g2.reshape(C, 1), b2.reshape(C, 1), fc1_w_t_bf16, fc1_b.reshape(Hd, 1),
      fc2_w_t_bf16, fc2_b.reshape(C, 1))


# ----------------------------------------------------------------------------
# Plain-JAX pieces of the DCNv3 branch
# ----------------------------------------------------------------------------
def depthwise_conv3x3_nchw(x_nchw, w, b):
    # TODO(synk): depthwise 3x3 conv left to XLA; no clean standalone Pallas win.
    C = x_nchw.shape[1]
    y = lax.conv_general_dilated(
        x_nchw, w, window_strides=(1, 1), padding=((1, 1), (1, 1)),
        dimension_numbers=("NCHW", "OIHW", "NCHW"), feature_group_count=C)
    return y + b.reshape(1, C, 1, 1)


def dcnv3_sampling(x_nhwc, offset, mask, *, groups, offset_scale):
    # TODO(synk): the data-dependent bilinear gather stays in plain JAX (XLA
    # gather); a Pallas version needs per-row DMA gathers fused with the
    # mask-weighted sum + output_proj (dominant remaining HBM cost).
    N, H, W, C = x_nhwc.shape
    G = groups
    Gc = C // G
    K = mask.shape[-1]
    kk = int(round(K ** 0.5))
    dx = jnp.repeat(jnp.arange(kk, dtype=jnp.float32) - (kk - 1) / 2.0, kk)
    dy = jnp.tile(jnp.arange(kk, dtype=jnp.float32) - (kk - 1) / 2.0, kk)
    base_y = jnp.arange(H, dtype=jnp.float32)[None, :, None, None, None]
    base_x = jnp.arange(W, dtype=jnp.float32)[None, None, :, None, None]
    py = base_y + (dy[None, None, None, None, :] + offset[..., 1]) * offset_scale
    px = base_x + (dx[None, None, None, None, :] + offset[..., 0]) * offset_scale

    y0 = jnp.floor(py)
    x0 = jnp.floor(px)
    y1 = y0 + 1.0
    x1 = x0 + 1.0
    wy1 = py - y0
    wy0 = 1.0 - wy1
    wx1 = px - x0
    wx0 = 1.0 - wx1

    x5 = x_nhwc.reshape(N, H, W, G, Gc)
    n_idx = jnp.arange(N)[:, None, None, None, None]
    g_idx = jnp.arange(G)[None, None, None, :, None]

    def gather(yi, xi):
        valid = (yi >= 0) & (yi < H) & (xi >= 0) & (xi < W)
        yc = jnp.clip(yi, 0, H - 1).astype(jnp.int32)
        xc = jnp.clip(xi, 0, W - 1).astype(jnp.int32)
        v = x5[n_idx, yc, xc, g_idx]              # (N,H,W,G,K,Gc)
        return v * valid[..., None].astype(v.dtype)

    val = ((wy0 * wx0)[..., None] * gather(y0, x0)
           + (wy0 * wx1)[..., None] * gather(y0, x1)
           + (wy1 * wx0)[..., None] * gather(y1, x0)
           + (wy1 * wx1)[..., None] * gather(y1, x1))
    out = jnp.sum(mask[..., None] * val, axis=4)  # (N,H,W,G,Gc)
    return out.reshape(N, H, W, C)


# ----------------------------------------------------------------------------
# Full InternImageLayer forward (eval mode: DropPath / Dropout are identity)
# ----------------------------------------------------------------------------
def intern_image_layer_forward(x_nchw, p, *, groups, offset_scale=1.0, l_tile=None):
    N, C, H, W = x_nchw.shape
    HW = H * W
    L = N * HW
    if l_tile is None:
        l_tile = _pick_l_tile(HW)
    x_ncl = x_nchw.reshape(N, C, HW)              # free reshape, stays NCHW

    G = groups
    GK2 = p["off_w"].shape[1]                     # G*K*2
    GK = p["msk_w"].shape[1]                      # G*K
    K = GK // G

    # --- weight prep: bf16 MXU operands, concatenated + lane-padded off/mask,
    #     pre-transposed so kernel C's matmuls land directly in (C, T) layout.
    inp_w = p["inp_w"].astype(jnp.bfloat16)                        # (C, C)
    om_cols = GK2 + GK
    om_pad = _round_up(om_cols, 128) - om_cols
    offmsk_w = jnp.pad(jnp.concatenate([p["off_w"], p["msk_w"]], axis=1),
                       ((0, 0), (0, om_pad))).astype(jnp.bfloat16)  # (C, 128k)
    offmsk_b = jnp.pad(jnp.concatenate([p["off_b"], p["msk_b"]]), (0, om_pad))
    out_w_t = p["out_w"].T.astype(jnp.bfloat16)                    # (C, C)
    fc1_w_t = p["fc1_w"].T.astype(jnp.bfloat16)                    # (Hd, C)
    fc2_w_t = p["fc2_w"].T.astype(jnp.bfloat16)                    # (C, Hd)

    # ---- DCNv3 branch: x = x + dcn(norm1(x)) -------------------------------
    x1_ncl, x_proj = norm1_and_input_proj(x_ncl, p["ln1_g"], p["ln1_b"],
                                          inp_w, p["inp_b"], l_tile=l_tile)
    dw = depthwise_conv3x3_nchw(x1_ncl.reshape(N, C, H, W), p["dw_w"], p["dw_b"])
    offmsk = dwnorm_gelu_offset_mask(dw.reshape(N, C, HW), p["dwln_g"],
                                     p["dwln_b"], offmsk_w,
                                     offmsk_b.reshape(1, -1), l_tile=l_tile)
    offset = offmsk[:, :GK2].reshape(N, H, W, G, K, 2)
    mask = jax.nn.softmax(offmsk[:, GK2:GK2 + GK].reshape(N, H, W, G, K), axis=-1)
    sampled = dcnv3_sampling(x_proj.reshape(N, H, W, C), offset, mask,
                             groups=G, offset_scale=offset_scale)

    # ---- out_proj + residual + norm2 + MLP + residual, straight to NCHW -----
    out_ncl = outproj_res_ln2_mlp(sampled.reshape(L, C), out_w_t, p["out_b"],
                                  x_ncl, p["ln2_g"], p["ln2_b"],
                                  fc1_w_t, p["fc1_b"], fc2_w_t, p["fc2_b"],
                                  l_tile=l_tile)
    return out_ncl.reshape(N, C, H, W)


# ----------------------------------------------------------------------------
# Pure-JAX reference (f32, channels-last) for validation of the Pallas plumbing
# ----------------------------------------------------------------------------
def reference_forward(x_nchw, p, *, groups, offset_scale=1.0):
    N, C, H, W = x_nchw.shape
    x = jnp.transpose(x_nchw, (0, 2, 3, 1)).astype(jnp.float32)
    x1 = _ln_channels_last(x, p["ln1_g"], p["ln1_b"])
    x_proj = x1 @ p["inp_w"] + p["inp_b"]
    k = jnp.transpose(p["dw_w"], (2, 3, 1, 0))            # (C,1,3,3) -> (3,3,1,C)
    dw = lax.conv_general_dilated(
        x1, k, window_strides=(1, 1), padding=((1, 1), (1, 1)),
        dimension_numbers=("NHWC", "HWIO", "NHWC"), feature_group_count=C)
    dw = dw + p["dw_b"]
    dw = _gelu(_ln_channels_last(dw, p["dwln_g"], p["dwln_b"]))
    offset = (dw @ p["off_w"] + p["off_b"]).reshape(N, H, W, groups, -1, 2)
    K = offset.shape[4]
    mask = jax.nn.softmax(
        (dw @ p["msk_w"] + p["msk_b"]).reshape(N, H, W, groups, K), axis=-1)
    sampled = dcnv3_sampling(x_proj, offset, mask, groups=groups,
                             offset_scale=offset_scale)
    x = x + (sampled @ p["out_w"] + p["out_b"])
    xn = _ln_channels_last(x, p["ln2_g"], p["ln2_b"])
    h = _gelu(xn @ p["fc1_w"] + p["fc1_b"])
    x = x + (h @ p["fc2_w"] + p["fc2_b"])
    return jnp.transpose(x, (0, 3, 1, 2))


if __name__ == "__main__":
    N, C, H, W = 2, 64, 16, 16         # smallest InternImage-like stage
    G, K = 4, 9                        # groups, 3x3 sampling points
    Hd = 4 * C                         # mlp_ratio = 4

    key = jax.random.PRNGKey(0)
    keys = jax.random.split(key, 20)

    def nrm(k, shape, scale):
        return (scale * jax.random.normal(k, shape)).astype(jnp.float32)

    x = jax.random.normal(keys[0], (N, C, H, W), dtype=jnp.float32)
    p = {
        "ln1_g": 1.0 + nrm(keys[1], (C,), 0.1), "ln1_b": nrm(keys[2], (C,), 0.1),
        "inp_w": nrm(keys[3], (C, C), 0.05),    "inp_b": nrm(keys[4], (C,), 0.02),
        "dw_w":  nrm(keys[5], (C, 1, 3, 3), 0.1), "dw_b": nrm(keys[6], (C,), 0.02),
        "dwln_g": 1.0 + nrm(keys[7], (C,), 0.1), "dwln_b": nrm(keys[8], (C,), 0.1),
        "off_w": nrm(keys[9], (C, G * K * 2), 0.05),
        "off_b": nrm(keys[10], (G * K * 2,), 0.05),
        "msk_w": nrm(keys[11], (C, G * K), 0.05),
        "msk_b": nrm(keys[12], (G * K,), 0.05),
        "out_w": nrm(keys[13], (C, C), 0.05),   "out_b": nrm(keys[14], (C,), 0.02),
        "ln2_g": 1.0 + nrm(keys[15], (C,), 0.1), "ln2_b": nrm(keys[16], (C,), 0.1),
        "fc1_w": nrm(keys[17], (C, Hd), 0.05),  "fc1_b": nrm(keys[18], (Hd,), 0.02),
        "fc2_w": nrm(keys[19], (Hd, C), 0.05),
        "fc2_b": jnp.zeros((C,), jnp.float32),
    }

    fwd = jax.jit(functools.partial(intern_image_layer_forward,
                                    groups=G, offset_scale=1.0))
    out = jax.block_until_ready(fwd(x, p))

    ref = reference_forward(x, p, groups=G, offset_scale=1.0)
    assert out.shape == (N, C, H, W), out.shape
    assert out.dtype == x.dtype
    # bf16 MXU operands with f32 accumulation: allow a slightly looser tolerance
    # than the previous all-f32 version.
    err = float(jnp.max(jnp.abs(out - ref)))
    assert err < 5e-2, f"max abs err vs reference = {err}"

    print("KERNEL_OK")
</pallas_src>

<mosaic_0001>
module attributes {stable_mosaic.version = 11 : i64} {
  func.func @_norm1_inproj_kernel(%arg0: i32, %arg1: i32, %arg2: memref<1x64x256xf32, #tpu.memory_space<vmem>>, %arg3: memref<64x1xf32, #tpu.memory_space<vmem>>, %arg4: memref<64x1xf32, #tpu.memory_space<vmem>>, %arg5: memref<64x64xbf16, #tpu.memory_space<vmem>>, %arg6: memref<1x64xf32, #tpu.memory_space<vmem>>, %arg7: memref<1x64x256xf32, #tpu.memory_space<vmem>>, %arg8: memref<256x64xf32, #tpu.memory_space<vmem>>) attributes {dimension_semantics = [#tpu.dimension_semantics<parallel>, #tpu.dimension_semantics<parallel>], iteration_bounds = array<i64: 2, 1>, scalar_prefetch = 0 : i64, scratch_operands = 0 : i64, tpu.core_type = #tpu.core_type<tc>, window_params = [{transform_indices = @transform_0, window_bounds = array<i64: 1, 64, 256>}, {pipeline_mode = #tpu.pipeline_mode<synchronous>, transform_indices = @transform_1, window_bounds = array<i64: 64, 1>}, {pipeline_mode = #tpu.pipeline_mode<synchronous>, transform_indices = @transform_2, window_bounds = array<i64: 64, 1>}, {pipeline_mode = #tpu.pipeline_mode<synchronous>, transform_indices = @transform_3, window_bounds = array<i64: 64, 64>}, {pipeline_mode = #tpu.pipeline_mode<synchronous>, transform_indices = @transform_4, window_bounds = array<i64: 1, 64>}, {transform_indices = @transform_5, window_bounds = array<i64: 1, 64, 256>}, {transform_indices = @transform_6, window_bounds = array<i64: 256, 64>}]} {
    %c0 = arith.constant 0 : index
    %c0_0 = arith.constant 0 : index
    %c0_1 = arith.constant 0 : index
    %0 = vector.load %arg2[%c0, %c0_0, %c0_1] : memref<1x64x256xf32, #tpu.memory_space<vmem>>, vector<1x64x256xf32>
    %1 = vector.shape_cast %0 : vector<1x64x256xf32> to vector<64x256xf32>
    %c0_2 = arith.constant 0 : index
    %c0_3 = arith.constant 0 : index
    %2 = vector.load %arg3[%c0_2, %c0_3] : memref<64x1xf32, #tpu.memory_space<vmem>>, vector<64x1xf32>
    %c0_4 = arith.constant 0 : index
    %c0_5 = arith.constant 0 : index
    %3 = vector.load %arg4[%c0_4, %c0_5] : memref<64x1xf32, #tpu.memory_space<vmem>>, vector<64x1xf32>
    %cst = arith.constant dense<0.000000e+00> : vector<256xf32>
    %4 = vector.multi_reduction <add>, %1, %cst [0] : vector<64x256xf32> to vector<256xf32>
    %5 = vector.shape_cast %4 : vector<256xf32> to vector<1x256xf32>
    %cst_6 = arith.constant 6.400000e+01 : f32
    %6 = vector.broadcast %cst_6 : f32 to vector<1x256xf32>
    %7 = arith.divf %5, %6 : vector<1x256xf32>
    %8 = vector.broadcast %7 : vector<1x256xf32> to vector<64x256xf32>
    %9 = arith.subf %1, %8 : vector<64x256xf32>
    %10 = arith.mulf %9, %9 : vector<64x256xf32>
    %cst_7 = arith.constant dense<0.000000e+00> : vector<256xf32>
    %11 = vector.multi_reduction <add>, %10, %cst_7 [0] : vector<64x256xf32> to vector<256xf32>
    %12 = vector.shape_cast %11 : vector<256xf32> to vector<1x256xf32>
    %cst_8 = arith.constant 6.400000e+01 : f32
    %13 = vector.broadcast %cst_8 : f32 to vector<1x256xf32>
    %14 = arith.divf %12, %13 : vector<1x256xf32>
    %15 = vector.broadcast %7 : vector<1x256xf32> to vector<64x256xf32>
    %16 = arith.subf %1, %15 : vector<64x256xf32>
    %cst_9 = arith.constant 9.99999997E-7 : f32
    %17 = vector.broadcast %cst_9 : f32 to vector<1x256xf32>
    %18 = arith.addf %14, %17 : vector<1x256xf32>
    %19 = math.rsqrt %18 : vector<1x256xf32>
    %20 = vector.broadcast %19 : vector<1x256xf32> to vector<64x256xf32>
    %21 = arith.mulf %16, %20 : vector<64x256xf32>
    %22 = vector.broadcast %2 : vector<64x1xf32> to vector<64x256xf32>
    %23 = arith.mulf %21, %22 : vector<64x256xf32>
    %24 = vector.broadcast %3 : vector<64x1xf32> to vector<64x256xf32>
    %25 = arith.addf %23, %24 : vector<64x256xf32>
    %c0_10 = arith.constant 0 : index
    %c0_11 = arith.constant 0 : index
    %c0_12 = arith.constant 0 : index
    %26 = vector.load %arg7[%c0_10, %c0_11, %c0_12] : memref<1x64x256xf32, #tpu.memory_space<vmem>>, vector<1x64x256xf32>
    %27 = vector.shape_cast %26 : vector<1x64x256xf32> to vector<64x256xf32>
    %28 = vector.shape_cast %25 : vector<64x256xf32> to vector<1x64x256xf32>
    tpu.vector_store %arg7[%c0_10, %c0_11, %c0_12], %28 {strides = array<i32>} : memref<1x64x256xf32, #tpu.memory_space<vmem>>, vector<1x64x256xf32>,
    %29 = tpu.transpose %25, [1, 0] : vector<64x256xf32> -> vector<256x64xf32>
    %30 = arith.truncf %29 : vector<256x64xf32> to vector<256x64xbf16>
    %c0_13 = arith.constant 0 : index
    %c0_14 = arith.constant 0 : index
    %31 = vector.load %arg5[%c0_13, %c0_14] : memref<64x64xbf16, #tpu.memory_space<vmem>>, vector<64x64xbf16>
    %cst_15 = arith.constant dense<0.000000e+00> : vector<256x64xf32>
    %32 = tpu.matmul %30, %31, %cst_15 {dimension_numbers = #tpu.dot_dimension_numbers<[1], [0], [0], [1], [0, 0, 1, 1], [], []>} : vector<256x64xbf16>, vector<64x64xbf16>, vector<256x64xf32> -> vector<256x64xf32>
    %c0_16 = arith.constant 0 : index
    %c0_17 = arith.constant 0 : index
    %33 = vector.load %arg6[%c0_16, %c0_17] : memref<1x64xf32, #tpu.memory_space<vmem>>, vector<1x64xf32>
    %34 = vector.broadcast %33 : vector<1x64xf32> to vector<256x64xf32>
    %35 = arith.addf %32, %34 : vector<256x64xf32>
    %c0_18 = arith.constant 0 : index
    %c0_19 = arith.constant 0 : index
    %36 = vector.load %arg8[%c0_18, %c0_19] : memref<256x64xf32, #tpu.memory_space<vmem>>, vector<256x64xf32>
    tpu.vector_store %arg8[%c0_18, %c0_19], %35 {strides = array<i32>} : memref<256x64xf32, #tpu.memory_space<vmem>>, vector<256x64xf32>,
    return
  }
  func.func @transform_0(%arg0: i32, %arg1: i32) -> (i32, i32, i32) {
    %c0_i32 = arith.constant 0 : i32
    %c0_i32_0 = arith.constant 0 : i32
    return %arg0, %c0_i32, %arg1 : i32, i32, i32
  }
  func.func @transform_1(%arg0: i32, %arg1: i32) -> (i32, i32) {
    %c0_i32 = arith.constant 0 : i32
    %c0_i32_0 = arith.constant 0 : i32
    %c0_i32_1 = arith.constant 0 : i32
    return %c0_i32, %c0_i32_0 : i32, i32
  }
  func.func @transform_2(%arg0: i32, %arg1: i32) -> (i32, i32) {
    %c0_i32 = arith.constant 0 : i32
    %c0_i32_0 = arith.constant 0 : i32
    %c0_i32_1 = arith.constant 0 : i32
    return %c0_i32, %c0_i32_0 : i32, i32
  }
  func.func @transform_3(%arg0: i32, %arg1: i32) -> (i32, i32) {
    %c0_i32 = arith.constant 0 : i32
    %c0_i32_0 = arith.constant 0 : i32
    %c0_i32_1 = arith.constant 0 : i32
    return %c0_i32, %c0_i32_0 : i32, i32
  }
  func.func @transform_4(%arg0: i32, %arg1: i32) -> (i32, i32) {
    %c0_i32 = arith.constant 0 : i32
    %c0_i32_0 = arith.constant 0 : i32
    %c0_i32_1 = arith.constant 0 : i32
    return %c0_i32, %c0_i32_0 : i32, i32
  }
  func.func @transform_5(%arg0: i32, %arg1: i32) -> (i32, i32, i32) {
    %c0_i32 = arith.constant 0 : i32
    %c0_i32_0 = arith.constant 0 : i32
    return %arg0, %c0_i32, %arg1 : i32, i32, i32
  }
  func.func @transform_6(%arg0: i32, %arg1: i32) -> (i32, i32) {
    %c1_i32 = arith.constant 1 : i32
    %0 = arith.muli %arg0, %c1_i32 : i32
    %1 = arith.addi %0, %arg1 : i32
    %c0_i32 = arith.constant 0 : i32
    %c0_i32_0 = arith.constant 0 : i32
    return %1, %c0_i32 : i32, i32
  }
}

module attributes {stable_mosaic.version = 11 : i64} {
  func.func @_dwnorm_offmask_kernel(%arg0: i32, %arg1: i32, %arg2: memref<1x64x256xf32, #tpu.memory_space<vmem>>, %arg3: memref<64x1xf32, #tpu.memory_space<vmem>>, %arg4: memref<64x1xf32, #tpu.memory_space<vmem>>, %arg5: memref<64x128xbf16, #tpu.memory_space<vmem>>, %arg6: memref<1x128xf32, #tpu.memory_space<vmem>>, %arg7: memref<256x128xf32, #tpu.memory_space<vmem>>) attributes {dimension_semantics = [#tpu.dimension_semantics<parallel>, #tpu.dimension_semantics<parallel>], iteration_bounds = array<i64: 2, 1>, scalar_prefetch = 0 : i64, scratch_operands = 0 : i64, tpu.core_type = #tpu.core_type<tc>, window_params = [{transform_indices = @transform_0, window_bounds = array<i64: 1, 64, 256>}, {pipeline_mode = #tpu.pipeline_mode<synchronous>, transform_indices = @transform_1, window_bounds = array<i64: 64, 1>}, {pipeline_mode = #tpu.pipeline_mode<synchronous>, transform_indices = @transform_2, window_bounds = array<i64: 64, 1>}, {pipeline_mode = #tpu.pipeline_mode<synchronous>, transform_indices = @transform_3, window_bounds = array<i64: 64, 128>}, {pipeline_mode = #tpu.pipeline_mode<synchronous>, transform_indices = @transform_4, window_bounds = array<i64: 1, 128>}, {transform_indices = @transform_5, window_bounds = array<i64: 256, 128>}]} {
    %c0 = arith.constant 0 : index
    %c0_0 = arith.constant 0 : index
    %c0_1 = arith.constant 0 : index
    %0 = vector.load %arg2[%c0, %c0_0, %c0_1] : memref<1x64x256xf32, #tpu.memory_space<vmem>>, vector<1x64x256xf32>
    %1 = vector.shape_cast %0 : vector<1x64x256xf32> to vector<64x256xf32>
    %c0_2 = arith.constant 0 : index
    %c0_3 = arith.constant 0 : index
    %2 = vector.load %arg3[%c0_2, %c0_3] : memref<64x1xf32, #tpu.memory_space<vmem>>, vector<64x1xf32>
    %c0_4 = arith.constant 0 : index
    %c0_5 = arith.constant 0 : index
    %3 = vector.load %arg4[%c0_4, %c0_5] : memref<64x1xf32, #tpu.memory_space<vmem>>, vector<64x1xf32>
    %cst = arith.constant dense<0.000000e+00> : vector<256xf32>
    %4 = vector.multi_reduction <add>, %1, %cst [0] : vector<64x256xf32> to vector<256xf32>
    %5 = vector.shape_cast %4 : vector<256xf32> to vector<1x256xf32>
    %cst_6 = arith.constant 6.400000e+01 : f32
    %6 = vector.broadcast %cst_6 : f32 to vector<1x256xf32>
    %7 = arith.divf %5, %6 : vector<1x256xf32>
    %8 = vector.broadcast %7 : vector<1x256xf32> to vector<64x256xf32>
    %9 = arith.subf %1, %8 : vector<64x256xf32>
    %10 = arith.mulf %9, %9 : vector<64x256xf32>
    %cst_7 = arith.constant dense<0.000000e+00> : vector<256xf32>
    %11 = vector.multi_reduction <add>, %10, %cst_7 [0] : vector<64x256xf32> to vector<256xf32>
    %12 = vector.shape_cast %11 : vector<256xf32> to vector<1x256xf32>
    %cst_8 = arith.constant 6.400000e+01 : f32
    %13 = vector.broadcast %cst_8 : f32 to vector<1x256xf32>
    %14 = arith.divf %12, %13 : vector<1x256xf32>
    %15 = vector.broadcast %7 : vector<1x256xf32> to vector<64x256xf32>
    %16 = arith.subf %1, %15 : vector<64x256xf32>
    %cst_9 = arith.constant 9.99999997E-7 : f32
    %17 = vector.broadcast %cst_9 : f32 to vector<1x256xf32>
    %18 = arith.addf %14, %17 : vector<1x256xf32>
    %19 = math.rsqrt %18 : vector<1x256xf32>
    %20 = vector.broadcast %19 : vector<1x256xf32> to vector<64x256xf32>
    %21 = arith.mulf %16, %20 : vector<64x256xf32>
    %22 = vector.broadcast %2 : vector<64x1xf32> to vector<64x256xf32>
    %23 = arith.mulf %21, %22 : vector<64x256xf32>
    %24 = vector.broadcast %3 : vector<64x1xf32> to vector<64x256xf32>
    %25 = arith.addf %23, %24 : vector<64x256xf32>
    %26 = arith.mulf %25, %25 : vector<64x256xf32>
    %27 = arith.mulf %25, %26 : vector<64x256xf32>
    %cst_10 = arith.constant 4.471500e-02 : f32
    %28 = vector.broadcast %cst_10 : f32 to vector<64x256xf32>
    %29 = arith.mulf %28, %27 : vector<64x256xf32>
    %30 = arith.addf %25, %29 : vector<64x256xf32>
    %cst_11 = arith.constant 0.797884583 : f32
    %31 = vector.broadcast %cst_11 : f32 to vector<64x256xf32>
    %32 = arith.mulf %31, %30 : vector<64x256xf32>
    %33 = math.tanh %32 : vector<64x256xf32>
    %cst_12 = arith.constant 1.000000e+00 : f32
    %34 = vector.broadcast %cst_12 : f32 to vector<64x256xf32>
    %35 = arith.addf %34, %33 : vector<64x256xf32>
    %cst_13 = arith.constant 5.000000e-01 : f32
    %36 = vector.broadcast %cst_13 : f32 to vector<64x256xf32>
    %37 = arith.mulf %36, %35 : vector<64x256xf32>
    %38 = arith.mulf %25, %37 : vector<64x256xf32>
    %39 = tpu.transpose %38, [1, 0] : vector<64x256xf32> -> vector<256x64xf32>
    %40 = arith.truncf %39 : vector<256x64xf32> to vector<256x64xbf16>
    %c0_14 = arith.constant 0 : index
    %c0_15 = arith.constant 0 : index
    %41 = vector.load %arg5[%c0_14, %c0_15] : memref<64x128xbf16, #tpu.memory_space<vmem>>, vector<64x128xbf16>
    %cst_16 = arith.constant dense<0.000000e+00> : vector<256x128xf32>
    %42 = tpu.matmul %40, %41, %cst_16 {dimension_numbers = #tpu.dot_dimension_numbers<[1], [0], [0], [1], [0, 0, 1, 1], [], []>} : vector<256x64xbf16>, vector<64x128xbf16>, vector<256x128xf32> -> vector<256x128xf32>
    %c0_17 = arith.constant 0 : index
    %c0_18 = arith.constant 0 : index
    %43 = vector.load %arg6[%c0_17, %c0_18] : memref<1x128xf32, #tpu.memory_space<vmem>>, vector<1x128xf32>
    %44 = vector.broadcast %43 : vector<1x128xf32> to vector<256x128xf32>
    %45 = arith.addf %42, %44 : vector<256x128xf32>
    %c0_19 = arith.constant 0 : index
    %c0_20 = arith.constant 0 : index
    %46 = vector.load %arg7[%c0_19, %c0_20] : memref<256x128xf32, #tpu.memory_space<vmem>>, vector<256x128xf32>
    tpu.vector_store %arg7[%c0_19, %c0_20], %45 {strides = array<i32>} : memref<256x128xf32, #tpu.memory_space<vmem>>, vector<256x128xf32>,
    return
  }
  func.func @transform_0(%arg0: i32, %arg1: i32) -> (i32, i32, i32) {
    %c0_i32 = arith.constant 0 : i32
    %c0_i32_0 = arith.constant 0 : i32
    return %arg0, %c0_i32, %arg1 : i32, i32, i32
  }
  func.func @transform_1(%arg0: i32, %arg1: i32) -> (i32, i32) {
    %c0_i32 = arith.constant 0 : i32
    %c0_i32_0 = arith.constant 0 : i32
    %c0_i32_1 = arith.constant 0 : i32
    return %c0_i32, %c0_i32_0 : i32, i32
  }
  func.func @transform_2(%arg0: i32, %arg1: i32) -> (i32, i32) {
    %c0_i32 = arith.constant 0 : i32
    %c0_i32_0 = arith.constant 0 : i32
    %c0_i32_1 = arith.constant 0 : i32
    return %c0_i32, %c0_i32_0 : i32, i32
  }
  func.func @transform_3(%arg0: i32, %arg1: i32) -> (i32, i32) {
    %c0_i32 = arith.constant 0 : i32
    %c0_i32_0 = arith.constant 0 : i32
    %c0_i32_1 = arith.constant 0 : i32
    return %c0_i32, %c0_i32_0 : i32, i32
  }
  func.func @transform_4(%arg0: i32, %arg1: i32) -> (i32, i32) {
    %c0_i32 = arith.constant 0 : i32
    %c0_i32_0 = arith.constant 0 : i32
    %c0_i32_1 = arith.constant 0 : i32
    return %c0_i32, %c0_i32_0 : i32, i32
  }
  func.func @transform_5(%arg0: i32, %arg1: i32) -> (i32, i32) {
    %c1_i32 = arith.constant 1 : i32
    %0 = arith.muli %arg0, %c1_i32 : i32
    %1 = arith.addi %0, %arg1 : i32
    %c0_i32 = arith.constant 0 : i32
    %c0_i32_0 = arith.constant 0 : i32
    return %1, %c0_i32 : i32, i32
  }
}

module attributes {stable_mosaic.version = 11 : i64} {
  func.func @_proj_res_ln_mlp_kernel(%arg0: i32, %arg1: i32, %arg2: memref<256x64xf32, #tpu.memory_space<vmem>>, %arg3: memref<64x64xbf16, #tpu.memory_space<vmem>>, %arg4: memref<64x1xf32, #tpu.memory_space<vmem>>, %arg5: memref<1x64x256xf32, #tpu.memory_space<vmem>>, %arg6: memref<64x1xf32, #tpu.memory_space<vmem>>, %arg7: memref<64x1xf32, #tpu.memory_space<vmem>>, %arg8: memref<256x64xbf16, #tpu.memory_space<vmem>>, %arg9: memref<256x1xf32, #tpu.memory_space<vmem>>, %arg10: memref<64x256xbf16, #tpu.memory_space<vmem>>, %arg11: memref<64x1xf32, #tpu.memory_space<vmem>>, %arg12: memref<1x64x256xf32, #tpu.memory_space<vmem>>) attributes {dimension_semantics = [#tpu.dimension_semantics<parallel>, #tpu.dimension_semantics<parallel>], iteration_bounds = array<i64: 2, 1>, scalar_prefetch = 0 : i64, scratch_operands = 0 : i64, tpu.core_type = #tpu.core_type<tc>, window_params = [{transform_indices = @transform_0, window_bounds = array<i64: 256, 64>}, {pipeline_mode = #tpu.pipeline_mode<synchronous>, transform_indices = @transform_1, window_bounds = array<i64: 64, 64>}, {pipeline_mode = #tpu.pipeline_mode<synchronous>, transform_indices = @transform_2, window_bounds = array<i64: 64, 1>}, {transform_indices = @transform_3, window_bounds = array<i64: 1, 64, 256>}, {pipeline_mode = #tpu.pipeline_mode<synchronous>, transform_indices = @transform_4, window_bounds = array<i64: 64, 1>}, {pipeline_mode = #tpu.pipeline_mode<synchronous>, transform_indices = @transform_5, window_bounds = array<i64: 64, 1>}, {pipeline_mode = #tpu.pipeline_mode<synchronous>, transform_indices = @transform_6, window_bounds = array<i64: 256, 64>}, {pipeline_mode = #tpu.pipeline_mode<synchronous>, transform_indices = @transform_7, window_bounds = array<i64: 256, 1>}, {pipeline_mode = #tpu.pipeline_mode<synchronous>, transform_indices = @transform_8, window_bounds = array<i64: 64, 256>}, {pipeline_mode = #tpu.pipeline_mode<synchronous>, transform_indices = @transform_9, window_bounds = array<i64: 64, 1>}, {transform_indices = @transform_10, window_bounds = array<i64: 1, 64, 256>}]} {
    %c0 = arith.constant 0 : index
    %c0_0 = arith.constant 0 : index
    %0 = vector.load %arg2[%c0, %c0_0] : memref<256x64xf32, #tpu.memory_space<vmem>>, vector<256x64xf32>
    %1 = arith.truncf %0 : vector<256x64xf32> to vector<256x64xbf16>
    %c0_1 = arith.constant 0 : index
    %c0_2 = arith.constant 0 : index
    %2 = vector.load %arg3[%c0_1, %c0_2] : memref<64x64xbf16, #tpu.memory_space<vmem>>, vector<64x64xbf16>
    %cst = arith.constant dense<0.000000e+00> : vector<64x256xf32>
    %3 = tpu.matmul %2, %1, %cst {dimension_numbers = #tpu.dot_dimension_numbers<[1], [1], [0], [0], [0, 0, 1, 0], [], []>} : vector<64x64xbf16>, vector<256x64xbf16>, vector<64x256xf32> -> vector<64x256xf32>
    %c0_3 = arith.constant 0 : index
    %c0_4 = arith.constant 0 : index
    %c0_5 = arith.constant 0 : index
    %4 = vector.load %arg5[%c0_3, %c0_4, %c0_5] : memref<1x64x256xf32, #tpu.memory_space<vmem>>, vector<1x64x256xf32>
    %5 = vector.shape_cast %4 : vector<1x64x256xf32> to vector<64x256xf32>
    %6 = arith.addf %5, %3 : vector<64x256xf32>
    %c0_6 = arith.constant 0 : index
    %c0_7 = arith.constant 0 : index
    %7 = vector.load %arg4[%c0_6, %c0_7] : memref<64x1xf32, #tpu.memory_space<vmem>>, vector<64x1xf32>
    %8 = vector.broadcast %7 : vector<64x1xf32> to vector<64x256xf32>
    %9 = arith.addf %6, %8 : vector<64x256xf32>
    %c0_8 = arith.constant 0 : index
    %c0_9 = arith.constant 0 : index
    %10 = vector.load %arg6[%c0_8, %c0_9] : memref<64x1xf32, #tpu.memory_space<vmem>>, vector<64x1xf32>
    %c0_10 = arith.constant 0 : index
    %c0_11 = arith.constant 0 : index
    %11 = vector.load %arg7[%c0_10, %c0_11] : memref<64x1xf32, #tpu.memory_space<vmem>>, vector<64x1xf32>
    %cst_12 = arith.constant dense<0.000000e+00> : vector<256xf32>
    %12 = vector.multi_reduction <add>, %9, %cst_12 [0] : vector<64x256xf32> to vector<256xf32>
    %13 = vector.shape_cast %12 : vector<256xf32> to vector<1x256xf32>
    %cst_13 = arith.constant 6.400000e+01 : f32
    %14 = vector.broadcast %cst_13 : f32 to vector<1x256xf32>
    %15 = arith.divf %13, %14 : vector<1x256xf32>
    %16 = vector.broadcast %15 : vector<1x256xf32> to vector<64x256xf32>
    %17 = arith.subf %9, %16 : vector<64x256xf32>
    %18 = arith.mulf %17, %17 : vector<64x256xf32>
    %cst_14 = arith.constant dense<0.000000e+00> : vector<256xf32>
    %19 = vector.multi_reduction <add>, %18, %cst_14 [0] : vector<64x256xf32> to vector<256xf32>
    %20 = vector.shape_cast %19 : vector<256xf32> to vector<1x256xf32>
    %cst_15 = arith.constant 6.400000e+01 : f32
    %21 = vector.broadcast %cst_15 : f32 to vector<1x256xf32>
    %22 = arith.divf %20, %21 : vector<1x256xf32>
    %23 = vector.broadcast %15 : vector<1x256xf32> to vector<64x256xf32>
    %24 = arith.subf %9, %23 : vector<64x256xf32>
    %cst_16 = arith.constant 9.99999997E-7 : f32
    %25 = vector.broadcast %cst_16 : f32 to vector<1x256xf32>
    %26 = arith.addf %22, %25 : vector<1x256xf32>
    %27 = math.rsqrt %26 : vector<1x256xf32>
    %28 = vector.broadcast %27 : vector<1x256xf32> to vector<64x256xf32>
    %29 = arith.mulf %24, %28 : vector<64x256xf32>
    %30 = vector.broadcast %10 : vector<64x1xf32> to vector<64x256xf32>
    %31 = arith.mulf %29, %30 : vector<64x256xf32>
    %32 = vector.broadcast %11 : vector<64x1xf32> to vector<64x256xf32>
    %33 = arith.addf %31, %32 : vector<64x256xf32>
    %c0_17 = arith.constant 0 : index
    %c0_18 = arith.constant 0 : index
    %34 = vector.load %arg8[%c0_17, %c0_18] : memref<256x64xbf16, #tpu.memory_space<vmem>>, vector<256x64xbf16>
    %35 = arith.truncf %33 : vector<64x256xf32> to vector<64x256xbf16>
    %cst_19 = arith.constant dense<0.000000e+00> : vector<256x256xf32>
    %36 = tpu.matmul %34, %35, %cst_19 {dimension_numbers = #tpu.dot_dimension_numbers<[1], [0], [0], [1], [0, 0, 1, 1], [], []>} : vector<256x64xbf16>, vector<64x256xbf16>, vector<256x256xf32> -> vector<256x256xf32>
    %c0_20 = arith.constant 0 : index
    %c0_21 = arith.constant 0 : index
    %37 = vector.load %arg9[%c0_20, %c0_21] : memref<256x1xf32, #tpu.memory_space<vmem>>, vector<256x1xf32>
    %38 = vector.broadcast %37 : vector<256x1xf32> to vector<256x256xf32>
    %39 = arith.addf %36, %38 : vector<256x256xf32>
    %40 = arith.mulf %39, %39 : vector<256x256xf32>
    %41 = arith.mulf %39, %40 : vector<256x256xf32>
    %cst_22 = arith.constant 4.471500e-02 : f32
    %42 = vector.broadcast %cst_22 : f32 to vector<256x256xf32>
    %43 = arith.mulf %42, %41 : vector<256x256xf32>
    %44 = arith.addf %39, %43 : vector<256x256xf32>
    %cst_23 = arith.constant 0.797884583 : f32
    %45 = vector.broadcast %cst_23 : f32 to vector<256x256xf32>
    %46 = arith.mulf %45, %44 : vector<256x256xf32>
    %47 = math.tanh %46 : vector<256x256xf32>
    %cst_24 = arith.constant 1.000000e+00 : f32
    %48 = vector.broadcast %cst_24 : f32 to vector<256x256xf32>
    %49 = arith.addf %48, %47 : vector<256x256xf32>
    %cst_25 = arith.constant 5.000000e-01 : f32
    %50 = vector.broadcast %cst_25 : f32 to vector<256x256xf32>
    %51 = arith.mulf %50, %49 : vector<256x256xf32>
    %52 = arith.mulf %39, %51 : vector<256x256xf32>
    %c0_26 = arith.constant 0 : index
    %c0_27 = arith.constant 0 : index
    %53 = vector.load %arg10[%c0_26, %c0_27] : memref<64x256xbf16, #tpu.memory_space<vmem>>, vector<64x256xbf16>
    %54 = arith.truncf %52 : vector<256x256xf32> to vector<256x256xbf16>
    %cst_28 = arith.constant dense<0.000000e+00> : vector<64x256xf32>
    %55 = tpu.matmul %53, %54, %cst_28 {dimension_numbers = #tpu.dot_dimension_numbers<[1], [0], [0], [1], [0, 0, 1, 1], [], []>} : vector<64x256xbf16>, vector<256x256xbf16>, vector<64x256xf32> -> vector<64x256xf32>
    %c0_29 = arith.constant 0 : index
    %c0_30 = arith.constant 0 : index
    %56 = vector.load %arg11[%c0_29, %c0_30] : memref<64x1xf32, #tpu.memory_space<vmem>>, vector<64x1xf32>
    %57 = vector.broadcast %56 : vector<64x1xf32> to vector<64x256xf32>
    %58 = arith.addf %55, %57 : vector<64x256xf32>
    %59 = arith.addf %9, %58 : vector<64x256xf32>
    %c0_31 = arith.constant 0 : index
    %c0_32 = arith.constant 0 : index
    %c0_33 = arith.constant 0 : index
    %60 = vector.load %arg12[%c0_31, %c0_32, %c0_33] : memref<1x64x256xf32, #tpu.memory_space<vmem>>, vector<1x64x256xf32>
    %61 = vector.shape_cast %60 : vector<1x64x256xf32> to vector<64x256xf32>
    %62 = vector.shape_cast %59 : vector<64x256xf32> to vector<1x64x256xf32>
    tpu.vector_store %arg12[%c0_31, %c0_32, %c0_33], %62 {strides = array<i32>} : memref<1x64x256xf32, #tpu.memory_space<vmem>>, vector<1x64x256xf32>,
    return
  }
  func.func @transform_0(%arg0: i32, %arg1: i32) -> (i32, i32) {
    %c1_i32 = arith.constant 1 : i32
    %0 = arith.muli %arg0, %c1_i32 : i32
    %1 = arith.addi %0, %arg1 : i32
    %c0_i32 = arith.constant 0 : i32
    %c0_i32_0 = arith.constant 0 : i32
    return %1, %c0_i32 : i32, i32
  }
  func.func @transform_1(%arg0: i32, %arg1: i32) -> (i32, i32) {
    %c0_i32 = arith.constant 0 : i32
    %c0_i32_0 = arith.constant 0 : i32
    %c0_i32_1 = arith.constant 0 : i32
    return %c0_i32, %c0_i32_0 : i32, i32
  }
  func.func @transform_2(%arg0: i32, %arg1: i32) -> (i32, i32) {
    %c0_i32 = arith.constant 0 : i32
    %c0_i32_0 = arith.constant 0 : i32
    %c0_i32_1 = arith.constant 0 : i32
    return %c0_i32, %c0_i32_0 : i32, i32
  }
  func.func @transform_3(%arg0: i32, %arg1: i32) -> (i32, i32, i32) {
    %c0_i32 = arith.constant 0 : i32
    %c0_i32_0 = arith.constant 0 : i32
    return %arg0, %c0_i32, %arg1 : i32, i32, i32
  }
  func.func @transform_4(%arg0: i32, %arg1: i32) -> (i32, i32) {
    %c0_i32 = arith.constant 0 : i32
    %c0_i32_0 = arith.constant 0 : i32
    %c0_i32_1 = arith.constant 0 : i32
    return %c0_i32, %c0_i32_0 : i32, i32
  }
  func.func @transform_5(%arg0: i32, %arg1: i32) -> (i32, i32) {
    %c0_i32 = arith.constant 0 : i32
    %c0_i32_0 = arith.constant 0 : i32
    %c0_i32_1 = arith.constant 0 : i32
    return %c0_i32, %c0_i32_0 : i32, i32
  }
  func.func @transform_6(%arg0: i32, %arg1: i32) -> (i32, i32) {
    %c0_i32 = arith.constant 0 : i32
    %c0_i32_0 = arith.constant 0 : i32
    %c0_i32_1 = arith.constant 0 : i32
    return %c0_i32, %c0_i32_0 : i32, i32
  }
  func.func @transform_7(%arg0: i32, %arg1: i32) -> (i32, i32) {
    %c0_i32 = arith.constant 0 : i32
    %c0_i32_0 = arith.constant 0 : i32
    %c0_i32_1 = arith.constant 0 : i32
    return %c0_i32, %c0_i32_0 : i32, i32
  }
  func.func @transform_8(%arg0: i32, %arg1: i32) -> (i32, i32) {
    %c0_i32 = arith.constant 0 : i32
    %c0_i32_0 = arith.constant 0 : i32
    %c0_i32_1 = arith.constant 0 : i32
    return %c0_i32, %c0_i32_0 : i32, i32
  }
  func.func @transform_9(%arg0: i32, %arg1: i32) -> (i32, i32) {
    %c0_i32 = arith.constant 0 : i32
    %c0_i32_0 = arith.constant 0 : i32
    %c0_i32_1 = arith.constant 0 : i32
    return %c0_i32, %c0_i32_0 : i32, i32
  }
  func.func @transform_10(%arg0: i32, %arg1: i32) -> (i32, i32, i32) {
    %c0_i32 = arith.constant 0 : i32
    %c0_i32_0 = arith.constant 0 : i32
    return %arg0, %c0_i32, %arg1 : i32, i32, i32
  }
}

</mosaic_0001>

<llo_original>
// kernel: intern_image_layer_forward.3
$region0: #{intern_image_layer_forward.3}
  #allocation0 [shape = 'u32[]', space=smem, size = 0x4, offset = 0x4, fixed_abs, tag = 'smem constant byte address 0x4 - core index']
  #allocation1 [shape = 'u32[144,128]{1,0:T(1,128)}', space=vmem, size = 0x12000, scoped, tag = 'internal scratch']
  %s0 = inlined_call_operand.hbm [shape: f32[2,64,256], index: 0, kind: input, shape index: {}]
  %s1 = inlined_call_operand.hbm [shape: f32[64,1], index: 1, kind: input, shape index: {}]
  %s2 = inlined_call_operand.hbm [shape: f32[64,1], index: 2, kind: input, shape index: {}]
  %s3 = inlined_call_operand.hbm [shape: bf16[64,64], index: 3, kind: input, shape index: {}]
  %s4 = inlined_call_operand.hbm [shape: f32[1,64], index: 4, kind: input, shape index: {}]
  %s5 = inlined_call_operand.hbm [shape: f32[2,64,256], index: 5, kind: output, shape index: {0}]
  %s6 = inlined_call_operand.hbm [shape: f32[512,64], index: 6, kind: output, shape index: {1}]
  %7 = xla_tuple %s5, %s6
  %s8 = sld [smem:[#allocation0]]
  $region81: #{intern_image_layer_forward.3} parent=0
    _
  %s10 = ssub.s32 1, %s8
  %s11 = scalar_select 0, %s10, %s8
  $region1: #{intern_image_layer_forward.3} parent=0
    #allocation2 [shape = 'u8[131072]{0}', space=vmem, size = 0x20000, scoped, tag = 'input window, operand 0']
    #allocation3 [shape = 's32[2]{0}', space=sflag, size = 0x8, scoped, tag = 'scoped memory for intern_image_layer_forward.3']
    #allocation4 [shape = 's32[2]{0}', space=sflag, size = 0x8, scoped, tag = 'scoped memory for intern_image_layer_forward.3']
    #allocation5 [shape = 'u8[32768]{0}', space=vmem, size = 0x8000, scoped, tag = 'input window, operand 1, single buffered']
    #allocation6 [shape = 's32[1]{0}', space=sflag, size = 0x4, scoped, tag = 'scoped memory for intern_image_layer_forward.3']
    #allocation7 [shape = 'u8[32768]{0}', space=vmem, size = 0x8000, scoped, tag = 'input window, operand 2, single buffered']
    #allocation8 [shape = 'u8[16384]{0}', space=vmem, size = 0x4000, scoped, tag = 'input window, operand 3, single buffered']
    #allocation9 [shape = 's32[1]{0}', space=sflag, size = 0x4, scoped, tag = 'scoped memory for intern_image_layer_forward.3']
    #allocation10 [shape = 'u8[512]{0}', space=vmem, size = 0x400, scoped, tag = 'input window, operand 4, single buffered']
    #allocation11 [shape = 'u8[131072]{0}', space=vmem, size = 0x20000, scoped, tag = 'output window, operand 0']
    #allocation12 [shape = 'u8[262144]{0}', space=vmem, size = 0x40000, scoped, tag = 'output window, operand 1']
    #allocation13 [shape = 's32[2]{0}', space=sflag, size = 0x8, scoped, tag = 'scoped memory for intern_image_layer_forward.3']
    %12 = vsyncpa [#allocation3], 0
    %s13 = scalar_lea.sflag [#allocation3], 1
    %14 = vsyncpa %s13, 0
    %15 = vsyncpa [#allocation6], 0
    %16 = vsyncpa [#allocation9], 0
    %17 = vsyncpa [#allocation4], 0
    %s18 = scalar_lea.sflag [#allocation4], 1
    %19 = vsyncpa %s18, 0
    %20 = vsyncpa [#allocation13], 0
    %s21 = scalar_lea.sflag [#allocation13], 1
    %22 = vsyncpa %s21, 0
    loop: start=0, step=1, limit=4
    $region2: #{intern_image_layer_forward.3} parent=1 // loop_pre_header
      _
    $region3: #{intern_image_layer_forward.3} parent=1 // loop_header
      %s24 = sphi 0, %s28
      %p25 = scmp.ge.s32.totalorder %s24, 4
      %s31 = sphi 0, %s43
      %s32 = sphi 0, %s39
      %s33 = sphi 0, %s31
      %s34 = sphi 0, %s32
      %s35 = sphi 0, %s33
      %s36 = sphi 0, %s34
      %s48 = sphi 0, %s50
      %s51 = sphi 0, %s48
      %s52 = sphi 0, %s51
      %s68 = sphi 0, %s52
      %s72 = sphi 0, %s72
      %s74 = sphi 0, %s72
      %s75 = sphi 0, %s74
      %s89 = sphi 0, %s75
      %s93 = sphi 0, %s93
      %s95 = sphi 0, %s93
      %s96 = sphi 0, %s95
      %s110 = sphi 0, %s96
      %s114 = sphi 0, %s114
      %s116 = sphi 0, %s114
      %s117 = sphi 0, %s116
      %s131 = sphi 0, %s117
      %s135 = sphi 0, %s135
      %s137 = sphi 0, %s135
      %s138 = sphi 0, %s137
      %s152 = sphi 0, %s138
      %s160 = sphi 0, %s162
      %s163 = sphi 0, %s160
      %s164 = sphi 0, %s163
      %s180 = sphi 0, %s164
      %s188 = sphi 0, %s190
      %s191 = sphi 0, %s188
      %s192 = sphi 0, %s191
      %s208 = sphi 0, %s192
    $region4: #{intern_image_layer_forward.3} parent=1 // loop_header_branch
      %27 = sbr.rel (%p25) target = $region8
    $region5: #{intern_image_layer_forward.3} parent=1 // loop_body
      %s29 = ssub.s32 %s24, 1
      %s30 = ssub.s32 %s24, 2
      %s37 = sadd.s32 1, %s32
      %p38 = scmp.ge.s32.totalorder %s37, 1
      %s39 = scalar_select %p38, 0, %s37
      %s40 = sadd.s32 1, %s31
      %s41 = scalar_select %p38, %s40, %s31
      %p42 = scmp.ge.s32.totalorder %s41, 2
      %s43 = scalar_select %p42, 0, %s41
      %s44 = ssub.s32 %s31, %s43
      %s45 = ssub.s32 %s32, %s39
      %s46 = sor.u32 %s44, %s45
      %p47 = scmp.eq.s32.totalorder %s46, 0
      %s49 = sadd.s32 %s48, 1
      %s50 = scalar_select %p47, %s48, %s49
      %p53 = pneg %p47
      %p54 = scmp.eq.s32.totalorder %s24, 1
      %p55 = por %p53, %p54
      %p56 = scmp.ne.s32.totalorder %s48, %s51
      %p57 = scmp.eq.s32.totalorder %s24, 0
      %p58 = por %p56, %p57
      %p59 = scmp.ne.s32.totalorder %s48, %s51
      %p60 = scmp.eq.s32.totalorder %s29, 1
      %p61 = por %p59, %p60
      %p62 = scmp.ne.s32.totalorder %s51, %s52
      %p63 = scmp.eq.s32.totalorder %s29, 0
      %p64 = por %p62, %p63
      %p65 = scmp.ne.s32.totalorder %s51, %s52
      %p66 = scmp.eq.s32.totalorder %s30, 1
      %p67 = por %p65, %p66
      %p69 = scmp.ne.s32.totalorder %s52, %s68
      %p70 = scmp.eq.s32.totalorder %s30, 0
      %p71 = por %p69, %p70
      %s73 = sadd.s32 %s72, 1
      %p76 = scmp.eq.s32.totalorder %s24, 1
      %p77 = scmp.ne.s32.totalorder %s72, %s74
      %p78 = scmp.eq.s32.totalorder %s24, 0
      %p79 = por %p77, %p78
      %p80 = scmp.ne.s32.totalorder %s72, %s74
      %p81 = scmp.eq.s32.totalorder %s29, 1
      %p82 = por %p80, %p81
      %p83 = scmp.ne.s32.totalorder %s74, %s75
      %p84 = scmp.eq.s32.totalorder %s29, 0
      %p85 = por %p83, %p84
      %p86 = scmp.ne.s32.totalorder %s74, %s75
      %p87 = scmp.eq.s32.totalorder %s30, 1
      %p88 = por %p86, %p87
      %p90 = scmp.ne.s32.totalorder %s75, %s89
      %p91 = scmp.eq.s32.totalorder %s30, 0
      %p92 = por %p90, %p91
      %s94 = sadd.s32 %s93, 1
      %p97 = scmp.eq.s32.totalorder %s24, 1
      %p98 = scmp.ne.s32.totalorder %s93, %s95
      %p99 = scmp.eq.s32.totalorder %s24, 0
      %p100 = por %p98, %p99
      %p101 = scmp.ne.s32.totalorder %s93, %s95
      %p102 = scmp.eq.s32.totalorder %s29, 1
      %p103 = por %p101, %p102
      %p104 = scmp.ne.s32.totalorder %s95, %s96
      %p105 = scmp.eq.s32.totalorder %s29, 0
      %p106 = por %p104, %p105
      %p107 = scmp.ne.s32.totalorder %s95, %s96
      %p108 = scmp.eq.s32.totalorder %s30, 1
      %p109 = por %p107, %p108
      %p111 = scmp.ne.s32.totalorder %s96, %s110
      %p112 = scmp.eq.s32.totalorder %s30, 0
      %p113 = por %p111, %p112
      %s115 = sadd.s32 %s114, 1
      %p118 = scmp.eq.s32.totalorder %s24, 1
      %p119 = scmp.ne.s32.totalorder %s114, %s116
      %p120 = scmp.eq.s32.totalorder %s24, 0
      %p121 = por %p119, %p120
      %p122 = scmp.ne.s32.totalorder %s114, %s116
      %p123 = scmp.eq.s32.totalorder %s29, 1
      %p124 = por %p122, %p123
      %p125 = scmp.ne.s32.totalorder %s116, %s117
      %p126 = scmp.eq.s32.totalorder %s29, 0
      %p127 = por %p125, %p126
      %p128 = scmp.ne.s32.totalorder %s116, %s117
      %p129 = scmp.eq.s32.totalorder %s30, 1
      %p130 = por %p128, %p129
      %p132 = scmp.ne.s32.totalorder %s117, %s131
      %p133 = scmp.eq.s32.totalorder %s30, 0
      %p134 = por %p132, %p133
      %s136 = sadd.s32 %s135, 1
      %p139 = scmp.eq.s32.totalorder %s24, 1
      %p140 = scmp.ne.s32.totalorder %s135, %s137
      %p141 = scmp.eq.s32.totalorder %s24, 0
      %p142 = por %p140, %p141
      %p143 = scmp.ne.s32.totalorder %s135, %s137
      %p144 = scmp.eq.s32.totalorder %s29, 1
      %p145 = por %p143, %p144
      %p146 = scmp.ne.s32.totalorder %s137, %s138
      %p147 = scmp.eq.s32.totalorder %s29, 0
      %p148 = por %p146, %p147
      %p149 = scmp.ne.s32.totalorder %s137, %s138
      %p150 = scmp.eq.s32.totalorder %s30, 1
      %p151 = por %p149, %p150
      %p153 = scmp.ne.s32.totalorder %s138, %s152
      %p154 = scmp.eq.s32.totalorder %s30, 0
      %p155 = por %p153, %p154
      %s156 = ssub.s32 %s31, %s43
      %s157 = ssub.s32 %s32, %s39
      %s158 = sor.u32 %s156, %s157
      %p159 = scmp.eq.s32.totalorder %s158, 0
      %s161 = sadd.s32 %s160, 1
      %s162 = scalar_select %p159, %s160, %s161
      %p165 = pneg %p159
      %p166 = scmp.eq.s32.totalorder %s24, 1
      %p167 = por %p165, %p166
      %p168 = scmp.ne.s32.totalorder %s160, %s163
      %p169 = scmp.eq.s32.totalorder %s24, 0
      %p170 = por %p168, %p169
      %p171 = scmp.ne.s32.totalorder %s160, %s163
      %p172 = scmp.eq.s32.totalorder %s29, 1
      %p173 = por %p171, %p172
      %p174 = scmp.ne.s32.totalorder %s163, %s164
      %p175 = scmp.eq.s32.totalorder %s29, 0
      %p176 = por %p174, %p175
      %p177 = scmp.ne.s32.totalorder %s163, %s164
      %p178 = scmp.eq.s32.totalorder %s30, 1
      %p179 = por %p177, %p178
      %p181 = scmp.ne.s32.totalorder %s164, %s180
      %p182 = scmp.eq.s32.totalorder %s30, 0
      %p183 = por %p181, %p182
      %s184 = sadd.s32 %s31, %s32
      %s185 = sadd.s32 %s43, %s39
      %s186 = ssub.s32 %s184, %s185
      %p187 = scmp.eq.s32.totalorder %s186, 0
      %s189 = sadd.s32 %s188, 1
      %s190 = scalar_select %p187, %s188, %s189
      %p193 = pneg %p187
      %p194 = scmp.eq.s32.totalorder %s24, 1
      %p195 = por %p193, %p194
      %p196 = scmp.ne.s32.totalorder %s188, %s191
      %p197 = scmp.eq.s32.totalorder %s24, 0
      %p198 = por %p196, %p197
      %p199 = scmp.ne.s32.totalorder %s188, %s191
      %p200 = scmp.eq.s32.totalorder %s29, 1
      %p201 = por %p199, %p200
      %p202 = scmp.ne.s32.totalorder %s191, %s192
      %p203 = scmp.eq.s32.totalorder %s29, 0
      %p204 = por %p202, %p203
      %p205 = scmp.ne.s32.totalorder %s191, %s192
      %p206 = scmp.eq.s32.totalorder %s30, 1
      %p207 = por %p205, %p206
      %p209 = scmp.ne.s32.totalorder %s192, %s208
      %p210 = scmp.eq.s32.totalorder %s30, 0
      %p211 = por %p209, %p210
      %p212 = scmp.le.s32.totalorder 1, %s24
      %p213 = scmp.lt.s32.totalorder %s24, 3
      %p214 = pnand %p212, %p213
      %p215 = pneg %p214
      // Predicated region
      $region9: #{intern_image_layer_forward.3} parent=5 // pred_check
        _
      $region10: #{intern_image_layer_forward.3} parent=5 // pred_check_branch
        %217 = sbr.rel (%p214) target = $region12
      $region11: #{intern_image_layer_forward.3} parent=5 // pred_region
        %s218 = ssub.s32 %s24, 1
        // Predicated region
        $region13: #{intern_image_layer_forward.3} parent=11 // pred_check
          %p219 = pneg %p85
        $region14: #{intern_image_layer_forward.3} parent=11 // pred_check_branch
          %221 = sbr.rel (%p219) target = $region16
        $region15: #{intern_image_layer_forward.3} parent=11 // pred_region
          %s223 = ssub.s32 1024, 1024
          %224 = vsyncadd [#allocation6], %s223
          %s225 = sshll.u32 [#allocation5], 4
          %s226 = int_to_ptr.vmem [resolvable:$true] %s225
          %231 = dma.hbm_to_vmem [thread:$0]  %s1, 1024, %s226, [#allocation6], 128, 128, 8
        $region16: #{intern_image_layer_forward.3} parent=11 // pred_fallthru
          _
        // Predicated region
        $region17: #{intern_image_layer_forward.3} parent=11 // pred_check
          %p232 = pneg %p106
        $region18: #{intern_image_layer_forward.3} parent=11 // pred_check_branch
          %234 = sbr.rel (%p232) target = $region20
        $region19: #{intern_image_layer_forward.3} parent=11 // pred_region
          %s236 = ssub.s32 1024, 1024
          %237 = vsyncadd [#allocation6], %s236
          %s238 = sshll.u32 [#allocation7], 4
          %s239 = int_to_ptr.vmem [resolvable:$true] %s238
          %244 = dma.hbm_to_vmem [thread:$0]  %s2, 1024, %s239, [#allocation6], 128, 128, 8
        $region20: #{intern_image_layer_forward.3} parent=11 // pred_fallthru
          _
        // Predicated region
        $region21: #{intern_image_layer_forward.3} parent=11 // pred_check
          %p245 = pneg %p127
        $region22: #{intern_image_layer_forward.3} parent=11 // pred_check_branch
          %247 = sbr.rel (%p245) target = $region24
        $region23: #{intern_image_layer_forward.3} parent=11 // pred_region
          %s249 = ssub.s32 512, 512
          %250 = vsyncadd [#allocation9], %s249
          %s251 = sshll.u32 [#allocation8], 4
          %s252 = int_to_ptr.vmem [resolvable:$true] %s251
          %257 = dma.hbm_to_vmem [thread:$0]  %s3, 512, %s252, [#allocation9], 64, 64, 4
        $region24: #{intern_image_layer_forward.3} parent=11 // pred_fallthru
          _
        // Predicated region
        $region25: #{intern_image_layer_forward.3} parent=11 // pred_check
          %p258 = pneg %p148
        $region26: #{intern_image_layer_forward.3} parent=11 // pred_check_branch
          %260 = sbr.rel (%p258) target = $region28
        $region27: #{intern_image_layer_forward.3} parent=11 // pred_region
          %s262 = ssub.s32 16, 16
          %263 = vsyncadd [#allocation9], %s262
          %s265 = sshll.u32 [#allocation10], 4
          %s266 = int_to_ptr.vmem [resolvable:$true] %s265
          %268 = dma.hbm_to_vmem [thread:$0]  %s4, 16, %s266, [#allocation9]
        $region28: #{intern_image_layer_forward.3} parent=11 // pred_fallthru
          _
      $region12: #{intern_image_layer_forward.3} parent=5 // pred_fallthru
        _
      %p269 = scmp.lt.s32.totalorder %s24, 2
      // Predicated region
      $region29: #{intern_image_layer_forward.3} parent=5 // pred_check
        %p270 = pneg %p269
      $region30: #{intern_image_layer_forward.3} parent=5 // pred_check_branch
        %272 = sbr.rel (%p270) target = $region32
      $region31: #{intern_image_layer_forward.3} parent=5 // pred_region
        // Predicated region
        $region33: #{intern_image_layer_forward.3} parent=31 // pred_check
          %p273 = pneg %p58
        $region34: #{intern_image_layer_forward.3} parent=31 // pred_check_branch
          %275 = sbr.rel (%p273) target = $region36
        $region35: #{intern_image_layer_forward.3} parent=31 // pred_region
          %s276 = sand.u32 %s48, 1
          %s277 = scalar_lea.sflag [#allocation3], %s276
          %s278 = sand.u32 %s48, 1
          %s279 = smul.addr %s278, 128
          %s280 = scalar_lea.vmem [#allocation2], %s279
          %s281 = smul.u32 2, %s32
          %s283 = ssub.s32 2048, 2048
          %284 = vsyncadd %s277, %s283
          %s285 = smul.addr %s31, 16
          %s286 = sadd.s32 %s281, %s285
          %s287 = smul.addr %s286, 128
          %s288 = scalar_lea.hbm %s0, %s287
          %s289 = sshll.u32 %s280, 4
          %s290 = int_to_ptr.vmem [resolvable:$true] %s289
          %295 = dma.hbm_to_vmem [thread:$0]  %s288, 2048, %s290, %s277, 256, 256, 16
        $region36: #{intern_image_layer_forward.3} parent=31 // pred_fallthru
          _
      $region32: #{intern_image_layer_forward.3} parent=5 // pred_fallthru
        _
      %p296 = scmp.le.s32.totalorder 1, %s24
      %p297 = scmp.lt.s32.totalorder %s24, 3
      %p298 = pnand %p296, %p297
      %p299 = pneg %p298
      // Predicated region
      $region37: #{intern_image_layer_forward.3} parent=5 // pred_check
        _
      $region38: #{intern_image_layer_forward.3} parent=5 // pred_check_branch
        %301 = sbr.rel (%p298) target = $region40
      $region39: #{intern_image_layer_forward.3} parent=5 // pred_region
        %s302 = ssub.s32 %s24, 1
        %s303 = sand.u32 %s51, 1
        %s304 = scalar_lea.sflag [#allocation3], %s303
        %s305 = sand.u32 %s51, 1
        %s306 = smul.addr %s305, 128
        %s307 = scalar_lea.vmem [#allocation2], %s306
        // Predicated region
        $region41: #{intern_image_layer_forward.3} parent=39 // pred_check
          %p308 = pneg %p64
        $region42: #{intern_image_layer_forward.3} parent=39 // pred_check_branch
          %310 = sbr.rel (%p308) target = $region44
        $region43: #{intern_image_layer_forward.3} parent=39 // pred_region
          %311 = dma.done %s304, 2048
        $region44: #{intern_image_layer_forward.3} parent=39 // pred_fallthru
          _
        // Predicated region
        $region45: #{intern_image_layer_forward.3} parent=39 // pred_check
          %p312 = pneg %p85
        $region46: #{intern_image_layer_forward.3} parent=39 // pred_check_branch
          %314 = sbr.rel (%p312) target = $region48
        $region47: #{intern_image_layer_forward.3} parent=39 // pred_region
          %315 = dma.done [#allocation6], 1024
        $region48: #{intern_image_layer_forward.3} parent=39 // pred_fallthru
          _
        // Predicated region
        $region49: #{intern_image_layer_forward.3} parent=39 // pred_check
          %p316 = pneg %p106
        $region50: #{intern_image_layer_forward.3} parent=39 // pred_check_branch
          %318 = sbr.rel (%p316) target = $region52
        $region51: #{intern_image_layer_forward.3} parent=39 // pred_region
          %319 = dma.done [#allocation6], 1024
        $region52: #{intern_image_layer_forward.3} parent=39 // pred_fallthru
          _
        // Predicated region
        $region53: #{intern_image_layer_forward.3} parent=39 // pred_check
          %p320 = pneg %p127
        $region54: #{intern_image_layer_forward.3} parent=39 // pred_check_branch
          %322 = sbr.rel (%p320) target = $region56
        $region55: #{intern_image_layer_forward.3} parent=39 // pred_region
          %323 = dma.done [#allocation9], 512
        $region56: #{intern_image_layer_forward.3} parent=39 // pred_fallthru
          _
        // Predicated region
        $region57: #{intern_image_layer_forward.3} parent=39 // pred_check
          %p324 = pneg %p148
        $region58: #{intern_image_layer_forward.3} parent=39 // pred_check_branch
          %326 = sbr.rel (%p324) target = $region60
        $region59: #{intern_image_layer_forward.3} parent=39 // pred_region
          %327 = dma.done [#allocation9], 16
        $region60: #{intern_image_layer_forward.3} parent=39 // pred_fallthru
          _
        %s328 = sand.u32 %s51, 1
        %s329 = scalar_lea.sflag [#allocation3], %s328
        %s330 = sand.u32 %s51, 1
        %s331 = smul.addr %s330, 128
        %s332 = scalar_lea.vmem [#allocation2], %s331
        %p333 = pneg %p64
        %p334 = pneg %p61
        %p335 = pneg %p85
        %p336 = pneg %p82
        %p337 = pneg %p106
        %p338 = pneg %p103
        %p339 = pneg %p127
        %p340 = pneg %p124
        %p341 = pneg %p148
        %p342 = pneg %p145
        %p343 = pneg %p176
        %p344 = pneg %p173
        %s345 = sand.u32 %s163, 1
        %s346 = scalar_lea.sflag [#allocation4], %s345
        %s347 = sand.u32 %s163, 1
        %s348 = smul.addr %s347, 128
        %s349 = scalar_lea.vmem [#allocation11], %s348
        %p350 = pneg %p204
        %p351 = pneg %p201
        %s352 = sand.u32 %s191, 1
        %s353 = scalar_lea.sflag [#allocation13], %s352
        %s354 = sand.u32 %s191, 1
        %s355 = smul.addr %s354, 256
        %s356 = scalar_lea.vmem [#allocation12], %s355
        %s357 = smul.u32 2, %s34
        %s358 = smul.u32 2, %s34
        %s359 = sadd.s32 %s33, %s34
        %s360 = smul.u32 32, %s359
        %v362 = vld [vmem:[%s307] sm:$0xff]
        %v363 = vld [vmem:[%s307 + $0x8] sm:$0xff]
        %v364 = vld [vmem:[%s307 + $0x10] sm:$0xff]
        %v365 = vld [vmem:[%s307 + $0x18] sm:$0xff]
        %v366 = vld [vmem:[%s307 + $0x20] sm:$0xff]
        %v367 = vld [vmem:[%s307 + $0x28] sm:$0xff]
        %v368 = vld [vmem:[%s307 + $0x30] sm:$0xff]
        %v369 = vld [vmem:[%s307 + $0x38] sm:$0xff]
        %v370 = vld [vmem:[%s307 + $0x40] sm:$0xff]
        %v371 = vld [vmem:[%s307 + $0x48] sm:$0xff]
        %v372 = vld [vmem:[%s307 + $0x50] sm:$0xff]
        %v373 = vld [vmem:[%s307 + $0x58] sm:$0xff]
        %v374 = vld [vmem:[%s307 + $0x60] sm:$0xff]
        %v375 = vld [vmem:[%s307 + $0x68] sm:$0xff]
        %v376 = vld [vmem:[%s307 + $0x70] sm:$0xff]
        %v377 = vld [vmem:[%s307 + $0x78] sm:$0xff]
        %v378 = vld [vmem:[#allocation5] sm:$0xff]
        %v379 = vld [vmem:[#allocation5 + $0x8] sm:$0xff]
        %v380 = vld [vmem:[#allocation5 + $0x10] sm:$0xff]
        %v381 = vld [vmem:[#allocation5 + $0x18] sm:$0xff]
        %v382 = vld [vmem:[#allocation5 + $0x20] sm:$0xff]
        %v383 = vld [vmem:[#allocation5 + $0x28] sm:$0xff]
        %v384 = vld [vmem:[#allocation5 + $0x30] sm:$0xff]
        %v385 = vld [vmem:[#allocation5 + $0x38] sm:$0xff]
        %v386 = vld [vmem:[#allocation7] sm:$0xff]
        %v387 = vld [vmem:[#allocation7 + $0x8] sm:$0xff]
        %v388 = vld [vmem:[#allocation7 + $0x10] sm:$0xff]
        %v389 = vld [vmem:[#allocation7 + $0x18] sm:$0xff]
        %v390 = vld [vmem:[#allocation7 + $0x20] sm:$0xff]
        %v391 = vld [vmem:[#allocation7 + $0x28] sm:$0xff]
        %v392 = vld [vmem:[#allocation7 + $0x30] sm:$0xff]
        %v393 = vld [vmem:[#allocation7 + $0x38] sm:$0xff]
        %v394 = vadd.f32 %v362, %v364
        %v395 = vadd.f32 %v394, %v366
        %v396 = vadd.f32 %v395, %v368
        %v397 = vadd.f32 %v396, %v370
        %v398 = vadd.f32 %v397, %v372
        %v399 = vadd.f32 %v398, %v374
        %v400 = vadd.f32 %v399, %v376
        %v401 = vrot.slane %v400, 4
        %v402 = vadd.f32 %v400, %v401
        %v403 = vrot.slane %v402, 2
        %v404 = vadd.f32 %v402, %v403
        %v405 = vrot.slane %v404, 1
        %v406 = vadd.f32 %v404, %v405
        %v407 = vadd.f32 %v363, %v365
        %v408 = vadd.f32 %v407, %v367
        %v409 = vadd.f32 %v408, %v369
        %v410 = vadd.f32 %v409, %v371
        %v411 = vadd.f32 %v410, %v373
        %v412 = vadd.f32 %v411, %v375
        %v413 = vadd.f32 %v412, %v377
        %v414 = vrot.slane %v413, 4
        %v415 = vadd.f32 %v413, %v414
        %v416 = vrot.slane %v415, 2
        %v417 = vadd.f32 %v415, %v416
        %v418 = vrot.slane %v417, 1
        %v419 = vadd.f32 %v417, %v418
        %v420 = vrcp.pop 64.0
        %v421 = vmul.f32 %v406, %v420
        %v422 = vmul.f32 %v419, %v420
        %v423 = vsub.f32 %v362, %v421
        %v424 = vsub.f32 %v363, %v422
        %v425 = vsub.f32 %v364, %v421
        %v426 = vsub.f32 %v365, %v422
        %v427 = vsub.f32 %v366, %v421
        %v428 = vsub.f32 %v367, %v422
        %v429 = vsub.f32 %v368, %v421
        %v430 = vsub.f32 %v369, %v422
        %v431 = vsub.f32 %v370, %v421
        %v432 = vsub.f32 %v371, %v422
        %v433 = vsub.f32 %v372, %v421
        %v434 = vsub.f32 %v373, %v422
        %v435 = vsub.f32 %v374, %v421
        %v436 = vsub.f32 %v375, %v422
        %v437 = vsub.f32 %v376, %v421
        %v438 = vsub.f32 %v377, %v422
        %v439 = vmul.f32 %v423, %v423
        %v440 = vmul.f32 %v424, %v424
        %v441 = vmul.f32 %v425, %v425
        %v442 = vmul.f32 %v426, %v426
        %v443 = vmul.f32 %v427, %v427
        %v444 = vmul.f32 %v428, %v428
        %v445 = vmul.f32 %v429, %v429
        %v446 = vmul.f32 %v430, %v430
        %v447 = vmul.f32 %v431, %v431
        %v448 = vmul.f32 %v432, %v432
        %v449 = vmul.f32 %v433, %v433
        %v450 = vmul.f32 %v434, %v434
        %v451 = vmul.f32 %v435, %v435
        %v452 = vmul.f32 %v436, %v436
        %v453 = vmul.f32 %v437, %v437
        %v454 = vmul.f32 %v438, %v438
        %v455 = vadd.f32 %v439, %v441
        %v456 = vadd.f32 %v455, %v443
        %v457 = vadd.f32 %v456, %v445
        %v458 = vadd.f32 %v457, %v447
        %v459 = vadd.f32 %v458, %v449
        %v460 = vadd.f32 %v459, %v451
        %v461 = vadd.f32 %v460, %v453
        %v462 = vrot.slane %v461, 4
        %v463 = vadd.f32 %v461, %v462
        %v464 = vrot.slane %v463, 2
        %v465 = vadd.f32 %v463, %v464
        %v466 = vrot.slane %v465, 1
        %v467 = vadd.f32 %v465, %v466
        %v468 = vadd.f32 %v440, %v442
        %v469 = vadd.f32 %v468, %v444
        %v470 = vadd.f32 %v469, %v446
        %v471 = vadd.f32 %v470, %v448
        %v472 = vadd.f32 %v471, %v450
        %v473 = vadd.f32 %v472, %v452
        %v474 = vadd.f32 %v473, %v454
        %v475 = vrot.slane %v474, 4
        %v476 = vadd.f32 %v474, %v475
        %v477 = vrot.slane %v476, 2
        %v478 = vadd.f32 %v476, %v477
        %v479 = vrot.slane %v478, 1
        %v480 = vadd.f32 %v478, %v479
        %v481 = vmul.f32 %v467, %v420
        %v482 = vmul.f32 %v480, %v420
        %v483 = vadd.f32 %v481, 1e-06
        %v484 = vadd.f32 %v482, 1e-06
        %v485 = vrsqrt.pop %v483
        %v486 = vrsqrt.pop %v484
        %v487 = vmul.f32 %v423, %v485
        %v488 = vmul.f32 %v424, %v486
        %v489 = vmul.f32 %v425, %v485
        %v490 = vmul.f32 %v426, %v486
        %v491 = vmul.f32 %v427, %v485
        %v492 = vmul.f32 %v428, %v486
        %v493 = vmul.f32 %v429, %v485
        %v494 = vmul.f32 %v430, %v486
        %v495 = vmul.f32 %v431, %v485
        %v496 = vmul.f32 %v432, %v486
        %v497 = vmul.f32 %v433, %v485
        %v498 = vmul.f32 %v434, %v486
        %v499 = vmul.f32 %v435, %v485
        %v500 = vmul.f32 %v436, %v486
        %v501 = vmul.f32 %v437, %v485
        %v502 = vmul.f32 %v438, %v486
        %504 = vset.pattern.permute.xlu0 0
        %505 = vperm.xlu0 %504, %v378
        %v506 = vpop.permute.xlu0 %505
        %509 = vset.pattern.permute.xlu0 0
        %510 = vperm.xlu0 %509, %v379
        %v511 = vpop.permute.xlu0 %510
        %514 = vset.pattern.permute.xlu0 0
        %515 = vperm.xlu0 %514, %v380
        %v516 = vpop.permute.xlu0 %515
        %519 = vset.pattern.permute.xlu0 0
        %520 = vperm.xlu0 %519, %v381
        %v521 = vpop.permute.xlu0 %520
        %524 = vset.pattern.permute.xlu0 0
        %525 = vperm.xlu0 %524, %v382
        %v526 = vpop.permute.xlu0 %525
        %529 = vset.pattern.permute.xlu0 0
        %530 = vperm.xlu0 %529, %v383
        %v531 = vpop.permute.xlu0 %530
        %534 = vset.pattern.permute.xlu0 0
        %535 = vperm.xlu0 %534, %v384
        %v536 = vpop.permute.xlu0 %535
        %539 = vset.pattern.permute.xlu0 0
        %540 = vperm.xlu0 %539, %v385
        %v541 = vpop.permute.xlu0 %540
        %v543 = vmul.f32 %v487, %v506
        %v544 = vmul.f32 %v488, %v506
        %v545 = vmul.f32 %v489, %v511
        %v546 = vmul.f32 %v490, %v511
        %v547 = vmul.f32 %v491, %v516
        %v548 = vmul.f32 %v492, %v516
        %v549 = vmul.f32 %v493, %v521
        %v550 = vmul.f32 %v494, %v521
        %v551 = vmul.f32 %v495, %v526
        %v552 = vmul.f32 %v496, %v526
        %v553 = vmul.f32 %v497, %v531
        %v554 = vmul.f32 %v498, %v531
        %v555 = vmul.f32 %v499, %v536
        %v556 = vmul.f32 %v500, %v536
        %v557 = vmul.f32 %v501, %v541
        %v558 = vmul.f32 %v502, %v541
        %560 = vset.pattern.permute.xlu0 0
        %561 = vperm.xlu0 %560, %v386
        %v562 = vpop.permute.xlu0 %561
        %565 = vset.pattern.permute.xlu0 0
        %566 = vperm.xlu0 %565, %v387
        %v567 = vpop.permute.xlu0 %566
        %570 = vset.pattern.permute.xlu0 0
        %571 = vperm.xlu0 %570, %v388
        %v572 = vpop.permute.xlu0 %571
        %575 = vset.pattern.permute.xlu0 0
        %576 = vperm.xlu0 %575, %v389
        %v577 = vpop.permute.xlu0 %576
        %580 = vset.pattern.permute.xlu0 0
        %581 = vperm.xlu0 %580, %v390
        %v582 = vpop.permute.xlu0 %581
        %585 = vset.pattern.permute.xlu0 0
        %586 = vperm.xlu0 %585, %v391
        %v587 = vpop.permute.xlu0 %586
        %590 = vset.pattern.permute.xlu0 0
        %591 = vperm.xlu0 %590, %v392
        %v592 = vpop.permute.xlu0 %591
        %595 = vset.pattern.permute.xlu0 0
        %596 = vperm.xlu0 %595, %v393
        %v597 = vpop.permute.xlu0 %596
        %v599 = vadd.f32 %v543, %v562
        %v600 = vadd.f32 %v544, %v562
        %v601 = vadd.f32 %v545, %v567
        %v602 = vadd.f32 %v546, %v567
        %v603 = vadd.f32 %v547, %v572
        %v604 = vadd.f32 %v548, %v572
        %v605 = vadd.f32 %v549, %v577
        %v606 = vadd.f32 %v550, %v577
        %v607 = vadd.f32 %v551, %v582
        %v608 = vadd.f32 %v552, %v582
        %v609 = vadd.f32 %v553, %v587
        %v610 = vadd.f32 %v554, %v587
        %v611 = vadd.f32 %v555, %v592
        %v612 = vadd.f32 %v556, %v592
        %v613 = vadd.f32 %v557, %v597
        %v614 = vadd.f32 %v558, %v597
        %615 = vst [vmem:[%s349] sm:$0xff] %v599
        %616 = vst [vmem:[%s349 + $0x8] sm:$0xff] %v600
        %617 = vst [vmem:[%s349 + $0x10] sm:$0xff] %v601
        %618 = vst [vmem:[%s349 + $0x18] sm:$0xff] %v602
        %619 = vst [vmem:[%s349 + $0x20] sm:$0xff] %v603
        %620 = vst [vmem:[%s349 + $0x28] sm:$0xff] %v604
        %621 = vst [vmem:[%s349 + $0x30] sm:$0xff] %v605
        %622 = vst [vmem:[%s349 + $0x38] sm:$0xff] %v606
        %623 = vst [vmem:[%s349 + $0x40] sm:$0xff] %v607
        %624 = vst [vmem:[%s349 + $0x48] sm:$0xff] %v608
        %625 = vst [vmem:[%s349 + $0x50] sm:$0xff] %v609
        %626 = vst [vmem:[%s349 + $0x58] sm:$0xff] %v610
        %627 = vst [vmem:[%s349 + $0x60] sm:$0xff] %v611
        %628 = vst [vmem:[%s349 + $0x68] sm:$0xff] %v612
        %629 = vst [vmem:[%s349 + $0x70] sm:$0xff] %v613
        %630 = vst [vmem:[%s349 + $0x78] sm:$0xff] %v614
        %631 = vxpose.xlu0.b32.start [1/16] %v599, 128
        %632 = vxpose.xlu0.b32.cont [2/16] %v601, 128
        %633 = vxpose.xlu0.b32.cont [3/16] %v603, 128
        %634 = vxpose.xlu0.b32.cont [4/16] %v605, 128
        %635 = vxpose.xlu0.b32.cont [5/16] %v607, 128
        %636 = vxpose.xlu0.b32.cont [6/16] %v609, 128
        %637 = vxpose.xlu0.b32.cont [7/16] %v611, 128
        %638 = vxpose.xlu0.b32.cont [8/16] %v613, 128
        %639 = vxpose.xlu0.b32.cont [9/16] 0.0, 128
        %640 = vxpose.xlu0.b32.cont [10/16] 0.0, 128
        %641 = vxpose.xlu0.b32.cont [11/16] 0.0, 128
        %642 = vxpose.xlu0.b32.cont [12/16] 0.0, 128
        %643 = vxpose.xlu0.b32.cont [13/16] 0.0, 128
        %644 = vxpose.xlu0.b32.cont [14/16] 0.0, 128
        %645 = vxpose.xlu0.b32.cont [15/16] 0.0, 128
        %646 = vxpose.xlu0.b32.end [16/16] 0.0, 128
        %v647 = vpop.trf.xlu0
        %v648 = vpop.trf.xlu0
        %v649 = vpop.trf.xlu0
        %v650 = vpop.trf.xlu0
        %v651 = vpop.trf.xlu0
        %v652 = vpop.trf.xlu0
        %v653 = vpop.trf.xlu0
        %v654 = vpop.trf.xlu0
        %v655 = vpop.trf.xlu0
        %v656 = vpop.trf.xlu0
        %v657 = vpop.trf.xlu0
        %v658 = vpop.trf.xlu0
        %v659 = vpop.trf.xlu0
        %v660 = vpop.trf.xlu0
        %v661 = vpop.trf.xlu0
        %v662 = vpop.trf.xlu0
        %663 = vxpose.xlu0.b32.start [1/16] %v600, 128
        %664 = vxpose.xlu0.b32.cont [2/16] %v602, 128
        %665 = vxpose.xlu0.b32.cont [3/16] %v604, 128
        %666 = vxpose.xlu0.b32.cont [4/16] %v606, 128
        %667 = vxpose.xlu0.b32.cont [5/16] %v608, 128
        %668 = vxpose.xlu0.b32.cont [6/16] %v610, 128
        %669 = vxpose.xlu0.b32.cont [7/16] %v612, 128
        %670 = vxpose.xlu0.b32.cont [8/16] %v614, 128
        %671 = vxpose.xlu0.b32.cont [9/16] 0.0, 128
        %672 = vxpose.xlu0.b32.cont [10/16] 0.0, 128
        %673 = vxpose.xlu0.b32.cont [11/16] 0.0, 128
        %674 = vxpose.xlu0.b32.cont [12/16] 0.0, 128
        %675 = vxpose.xlu0.b32.cont [13/16] 0.0, 128
        %676 = vxpose.xlu0.b32.cont [14/16] 0.0, 128
        %677 = vxpose.xlu0.b32.cont [15/16] 0.0, 128
        %678 = vxpose.xlu0.b32.end [16/16] 0.0, 128
        %v679 = vpop.trf.xlu0
        %v680 = vpop.trf.xlu0
        %v681 = vpop.trf.xlu0
        %v682 = vpop.trf.xlu0
        %v683 = vpop.trf.xlu0
        %v684 = vpop.trf.xlu0
        %v685 = vpop.trf.xlu0
        %v686 = vpop.trf.xlu0
        %v687 = vpop.trf.xlu0
        %v688 = vpop.trf.xlu0
        %v689 = vpop.trf.xlu0
        %v690 = vpop.trf.xlu0
        %v691 = vpop.trf.xlu0
        %v692 = vpop.trf.xlu0
        %v693 = vpop.trf.xlu0
        %v694 = vpop.trf.xlu0
        %v695 = vpack.c.bf16 %v648, %v647
        %v696 = vpack.c.bf16 %v650, %v649
        %v697 = vpack.c.bf16 %v652, %v651
        %v698 = vpack.c.bf16 %v654, %v653
        %v699 = vpack.c.bf16 %v656, %v655
        %v700 = vpack.c.bf16 %v658, %v657
        %v701 = vpack.c.bf16 %v660, %v659
        %v702 = vpack.c.bf16 %v662, %v661
        %v703 = vpack.c.bf16 %v680, %v679
        %v704 = vpack.c.bf16 %v682, %v681
        %v705 = vpack.c.bf16 %v684, %v683
        %v706 = vpack.c.bf16 %v686, %v685
        %v707 = vpack.c.bf16 %v688, %v687
        %v708 = vpack.c.bf16 %v690, %v689
        %v709 = vpack.c.bf16 %v692, %v691
        %v710 = vpack.c.bf16 %v694, %v693
        %v711 = vld [vmem:[#allocation8] sm:$0xf]
        %v712 = vld [vmem:[#allocation8 + $0x4] sm:$0xf]
        %v713 = vld [vmem:[#allocation8 + $0x8] sm:$0xf]
        %v714 = vld [vmem:[#allocation8 + $0xc] sm:$0xf]
        %v715 = vld [vmem:[#allocation8 + $0x10] sm:$0xf]
        %v716 = vld [vmem:[#allocation8 + $0x14] sm:$0xf]
        %v717 = vld [vmem:[#allocation8 + $0x18] sm:$0xf]
        %v718 = vld [vmem:[#allocation8 + $0x1c] sm:$0xf]
        %v719 = vld [vmem:[#allocation10] sm:$0x1]
        %v721 = vlaneseq
        %v722 = vshrl.u32 %v721, 7
        %v723 = vsub.s32 0, %v722
        %v724 = vrot.slane %v719, %v723
        %v734 = vunpack.c.l.b16 %v711
        %v735 = vunpack.c.l.b16 %v712
        %v736 = vunpack.c.l.b16 %v713
        %v737 = vunpack.c.l.b16 %v714
        %v738 = vunpack.c.l.b16 %v715
        %v739 = vunpack.c.l.b16 %v716
        %v740 = vunpack.c.l.b16 %v717
        %v741 = vunpack.c.l.b16 %v718
        %v742 = vpack.c.b16 %v735, %v734
        %v743 = vpack.c.b16 %v737, %v736
        %v744 = vpack.c.b16 %v739, %v738
        %v745 = vpack.c.b16 %v741, %v740
        %vm750 = vcmask 523264
        %v752 = vsel %vm750, %v695, 0
        %v755 = vsel %vm750, %v696, 0
        %v758 = vsel %vm750, %v697, 0
        %v761 = vsel %vm750, %v698, 0
        %v764 = vsel %vm750, %v699, 0
        %v767 = vsel %vm750, %v700, 0
        %v770 = vsel %vm750, %v701, 0
        %v773 = vsel %vm750, %v702, 0
        %v776 = vsel %vm750, %v703, 0
        %v779 = vsel %vm750, %v704, 0
        %v782 = vsel %vm750, %v705, 0
        %v785 = vsel %vm750, %v706, 0
        %v788 = vsel %vm750, %v707, 0
        %v791 = vsel %vm750, %v708, 0
        %v794 = vsel %vm750, %v709, 0
        %v797 = vsel %vm750, %v710, 0
        %799 = vmatprep.subr.bf16.mxu0 0
        %800 = vmatpush1.bf16.msra.mxu0 %v742
        %801 = vmatprep.subr.bf16.mxu0 0
        %802 = vmatpush1.bf16.msra.mxu0 %v743
        %803 = vmatprep.subr.bf16.mxu0 0
        %804 = vmatpush1.bf16.msra.mxu0 %v744
        %805 = vmatprep.subr.bf16.mxu0 0
        %806 = vmatpush1.bf16.msra.mxu0 %v745
        %807 = vmatprep.subr.bf16.mxu0 0
        %808 = vmatpush1.bf16.msra.mxu0 0
        %809 = vmatprep.subr.bf16.mxu0 0
        %810 = vmatpush1.bf16.msra.mxu0 0
        %811 = vmatprep.subr.bf16.mxu0 0
        %812 = vmatpush1.bf16.msra.mxu0 0
        %813 = vmatprep.subr.bf16.mxu0 0
        %814 = vmatpush1.bf16.msra.mxu0 0
        %815 = vmatprep.subr.bf16.mxu0 0
        %816 = vmatpush1.bf16.msra.mxu0 0
        %817 = vmatprep.subr.bf16.mxu0 0
        %818 = vmatpush1.bf16.msra.mxu0 0
        %819 = vmatprep.subr.bf16.mxu0 0
        %820 = vmatpush1.bf16.msra.mxu0 0
        %821 = vmatprep.subr.bf16.mxu0 0
        %822 = vmatpush1.bf16.msra.mxu0 0
        %823 = vmatprep.subr.bf16.mxu0 0
        %824 = vmatpush1.bf16.msra.mxu0 0
        %825 = vmatprep.subr.bf16.mxu0 0
        %826 = vmatpush1.bf16.msra.mxu0 0
        %827 = vmatprep.subr.bf16.mxu0 0
        %828 = vmatpush1.bf16.msra.mxu0 0
        %829 = vmatprep.subr.bf16.mxu0 0
        %830 = vmatpush1.bf16.msra.mxu0 0
        %831 = vmatprep.mubr.bf16.mxu0 0
        %832 = vmatmul.mubr.bf16.gmra.mrb[0].mxu0 %v752
        %v833 = vpop.f32.mrb[0].mxu0
        %v834 = vadd.f32 %v724, %v833
        %v835 = vpop.f32.mrb[0].mxu0
        %v836 = vpop.f32.mrb[0].mxu0
        %v837 = vadd.f32 %v724, %v836
        %v838 = vpop.f32.mrb[0].mxu0
        %839 = vmatprep.mubr.bf16.mxu0 0
        %840 = vmatmul.mubr.bf16.gmra.mrb[0].mxu0 %v755
        %v841 = vpop.f32.mrb[0].mxu0
        %v842 = vadd.f32 %v724, %v841
        %v843 = vpop.f32.mrb[0].mxu0
        %v844 = vpop.f32.mrb[0].mxu0
        %v845 = vadd.f32 %v724, %v844
        %v846 = vpop.f32.mrb[0].mxu0
        %847 = vmatprep.mubr.bf16.mxu0 0
        %848 = vmatmul.mubr.bf16.gmra.mrb[0].mxu0 %v758
        %v849 = vpop.f32.mrb[0].mxu0
        %v850 = vadd.f32 %v724, %v849
        %v851 = vpop.f32.mrb[0].mxu0
        %v852 = vpop.f32.mrb[0].mxu0
        %v853 = vadd.f32 %v724, %v852
        %v854 = vpop.f32.mrb[0].mxu0
        %855 = vmatprep.mubr.bf16.mxu0 0
        %856 = vmatmul.mubr.bf16.gmra.mrb[0].mxu0 %v761
        %v857 = vpop.f32.mrb[0].mxu0
        %v858 = vadd.f32 %v724, %v857
        %v859 = vpop.f32.mrb[0].mxu0
        %v860 = vpop.f32.mrb[0].mxu0
        %v861 = vadd.f32 %v724, %v860
        %v862 = vpop.f32.mrb[0].mxu0
        %863 = vmatprep.mubr.bf16.mxu0 0
        %864 = vmatmul.mubr.bf16.gmra.mrb[0].mxu0 %v764
        %v865 = vpop.f32.mrb[0].mxu0
        %v866 = vadd.f32 %v724, %v865
        %v867 = vpop.f32.mrb[0].mxu0
        %v868 = vpop.f32.mrb[0].mxu0
        %v869 = vadd.f32 %v724, %v868
        %v870 = vpop.f32.mrb[0].mxu0
        %871 = vmatprep.mubr.bf16.mxu0 0
        %872 = vmatmul.mubr.bf16.gmra.mrb[0].mxu0 %v767
        %v873 = vpop.f32.mrb[0].mxu0
        %v874 = vadd.f32 %v724, %v873
        %v875 = vpop.f32.mrb[0].mxu0
        %v876 = vpop.f32.mrb[0].mxu0
        %v877 = vadd.f32 %v724, %v876
        %v878 = vpop.f32.mrb[0].mxu0
        %879 = vmatprep.mubr.bf16.mxu0 0
        %880 = vmatmul.mubr.bf16.gmra.mrb[0].mxu0 %v770
        %v881 = vpop.f32.mrb[0].mxu0
        %v882 = vadd.f32 %v724, %v881
        %v883 = vpop.f32.mrb[0].mxu0
        %v884 = vpop.f32.mrb[0].mxu0
        %v885 = vadd.f32 %v724, %v884
        %v886 = vpop.f32.mrb[0].mxu0
        %887 = vmatprep.mubr.bf16.mxu0 0
        %888 = vmatmul.mubr.bf16.gmra.mrb[0].mxu0 %v773
        %v889 = vpop.f32.mrb[0].mxu0
        %v890 = vadd.f32 %v724, %v889
        %v891 = vpop.f32.mrb[0].mxu0
        %v892 = vpop.f32.mrb[0].mxu0
        %v893 = vadd.f32 %v724, %v892
        %v894 = vpop.f32.mrb[0].mxu0
        %895 = vmatprep.mubr.bf16.mxu0 0
        %896 = vmatmul.mubr.bf16.gmra.mrb[0].mxu0 %v776
        %v897 = vpop.f32.mrb[0].mxu0
        %v898 = vadd.f32 %v724, %v897
        %v899 = vpop.f32.mrb[0].mxu0
        %v900 = vpop.f32.mrb[0].mxu0
        %v901 = vadd.f32 %v724, %v900
        %v902 = vpop.f32.mrb[0].mxu0
        %903 = vmatprep.mubr.bf16.mxu0 0
        %904 = vmatmul.mubr.bf16.gmra.mrb[0].mxu0 %v779
        %v905 = vpop.f32.mrb[0].mxu0
        %v906 = vadd.f32 %v724, %v905
        %v907 = vpop.f32.mrb[0].mxu0
        %v908 = vpop.f32.mrb[0].mxu0
        %v909 = vadd.f32 %v724, %v908
        %v910 = vpop.f32.mrb[0].mxu0
        %911 = vmatprep.mubr.bf16.mxu0 0
        %912 = vmatmul.mubr.bf16.gmra.mrb[0].mxu0 %v782
        %v913 = vpop.f32.mrb[0].mxu0
        %v914 = vadd.f32 %v724, %v913
        %v915 = vpop.f32.mrb[0].mxu0
        %v916 = vpop.f32.mrb[0].mxu0
        %v917 = vadd.f32 %v724, %v916
        %v918 = vpop.f32.mrb[0].mxu0
        %919 = vmatprep.mubr.bf16.mxu0 0
        %920 = vmatmul.mubr.bf16.gmra.mrb[0].mxu0 %v785
        %v921 = vpop.f32.mrb[0].mxu0
        %v922 = vadd.f32 %v724, %v921
        %v923 = vpop.f32.mrb[0].mxu0
        %v924 = vpop.f32.mrb[0].mxu0
        %v925 = vadd.f32 %v724, %v924
        %v926 = vpop.f32.mrb[0].mxu0
        %927 = vmatprep.mubr.bf16.mxu0 0
        %928 = vmatmul.mubr.bf16.gmra.mrb[0].mxu0 %v788
        %v929 = vpop.f32.mrb[0].mxu0
        %v930 = vadd.f32 %v724, %v929
        %v931 = vpop.f32.mrb[0].mxu0
        %v932 = vpop.f32.mrb[0].mxu0
        %v933 = vadd.f32 %v724, %v932
        %v934 = vpop.f32.mrb[0].mxu0
        %935 = vmatprep.mubr.bf16.mxu0 0
        %936 = vmatmul.mubr.bf16.gmra.mrb[0].mxu0 %v791
        %v937 = vpop.f32.mrb[0].mxu0
        %v938 = vadd.f32 %v724, %v937
        %v939 = vpop.f32.mrb[0].mxu0
        %v940 = vpop.f32.mrb[0].mxu0
        %v941 = vadd.f32 %v724, %v940
        %v942 = vpop.f32.mrb[0].mxu0
        %943 = vmatprep.mubr.bf16.mxu0 0
        %944 = vmatmul.mubr.bf16.gmra.mrb[0].mxu0 %v794
        %v945 = vpop.f32.mrb[0].mxu0
        %v946 = vadd.f32 %v724, %v945
        %v947 = vpop.f32.mrb[0].mxu0
        %v948 = vpop.f32.mrb[0].mxu0
        %v949 = vadd.f32 %v724, %v948
        %v950 = vpop.f32.mrb[0].mxu0
        %951 = vmatprep.mubr.bf16.mxu0 0
        %952 = vmatmul.mubr.bf16.gmra.mrb[0].mxu0 %v797
        %v953 = vpop.f32.mrb[0].mxu0
        %v954 = vadd.f32 %v724, %v953
        %v955 = vpop.f32.mrb[0].mxu0
        %v956 = vpop.f32.mrb[0].mxu0
        %v957 = vadd.f32 %v724, %v956
        %v958 = vpop.f32.mrb[0].mxu0
        %959 = vdwg.mxu0
        %960 = vst.msk [vmem:[%s356] sm:$0xff] %vm750, %v834
        %961 = vst.msk [vmem:[%s356 + $0x8] sm:$0xff] %vm750, %v837
        %962 = vst.msk [vmem:[%s356 + $0x10] sm:$0xff] %vm750, %v842
        %963 = vst.msk [vmem:[%s356 + $0x18] sm:$0xff] %vm750, %v845
        %964 = vst.msk [vmem:[%s356 + $0x20] sm:$0xff] %vm750, %v850
        %965 = vst.msk [vmem:[%s356 + $0x28] sm:$0xff] %vm750, %v853
        %966 = vst.msk [vmem:[%s356 + $0x30] sm:$0xff] %vm750, %v858
        %967 = vst.msk [vmem:[%s356 + $0x38] sm:$0xff] %vm750, %v861
        %968 = vst.msk [vmem:[%s356 + $0x40] sm:$0xff] %vm750, %v866
        %969 = vst.msk [vmem:[%s356 + $0x48] sm:$0xff] %vm750, %v869
        %970 = vst.msk [vmem:[%s356 + $0x50] sm:$0xff] %vm750, %v874
        %971 = vst.msk [vmem:[%s356 + $0x58] sm:$0xff] %vm750, %v877
        %972 = vst.msk [vmem:[%s356 + $0x60] sm:$0xff] %vm750, %v882
        %973 = vst.msk [vmem:[%s356 + $0x68] sm:$0xff] %vm750, %v885
        %974 = vst.msk [vmem:[%s356 + $0x70] sm:$0xff] %vm750, %v890
        %975 = vst.msk [vmem:[%s356 + $0x78] sm:$0xff] %vm750, %v893
        %976 = vst.msk [vmem:[%s356 + $0x80] sm:$0xff] %vm750, %v898
        %977 = vst.msk [vmem:[%s356 + $0x88] sm:$0xff] %vm750, %v901
        %978 = vst.msk [vmem:[%s356 + $0x90] sm:$0xff] %vm750, %v906
        %979 = vst.msk [vmem:[%s356 + $0x98] sm:$0xff] %vm750, %v909
        %980 = vst.msk [vmem:[%s356 + $0xa0] sm:$0xff] %vm750, %v914
        %981 = vst.msk [vmem:[%s356 + $0xa8] sm:$0xff] %vm750, %v917
        %982 = vst.msk [vmem:[%s356 + $0xb0] sm:$0xff] %vm750, %v922
        %983 = vst.msk [vmem:[%s356 + $0xb8] sm:$0xff] %vm750, %v925
        %984 = vst.msk [vmem:[%s356 + $0xc0] sm:$0xff] %vm750, %v930
        %985 = vst.msk [vmem:[%s356 + $0xc8] sm:$0xff] %vm750, %v933
        %986 = vst.msk [vmem:[%s356 + $0xd0] sm:$0xff] %vm750, %v938
        %987 = vst.msk [vmem:[%s356 + $0xd8] sm:$0xff] %vm750, %v941
        %988 = vst.msk [vmem:[%s356 + $0xe0] sm:$0xff] %vm750, %v946
        %989 = vst.msk [vmem:[%s356 + $0xe8] sm:$0xff] %vm750, %v949
        %990 = vst.msk [vmem:[%s356 + $0xf0] sm:$0xff] %vm750, %v954
        %991 = vst.msk [vmem:[%s356 + $0xf8] sm:$0xff] %vm750, %v957
        %s992 = sand.u32 %s163, 1
        %s993 = scalar_lea.sflag [#allocation4], %s992
        %s994 = sand.u32 %s163, 1
        %s995 = smul.addr %s994, 128
        %s996 = scalar_lea.vmem [#allocation11], %s995
        %s997 = sand.u32 %s191, 1
        %s998 = scalar_lea.sflag [#allocation13], %s997
        %s999 = sand.u32 %s191, 1
        %s1000 = smul.addr %s999, 256
        %s1001 = scalar_lea.vmem [#allocation12], %s1000
        // Predicated region
        $region61: #{intern_image_layer_forward.3} parent=39 // pred_check
          %p1002 = pneg %p173
        $region62: #{intern_image_layer_forward.3} parent=39 // pred_check_branch
          %1004 = sbr.rel (%p1002) target = $region64
        $region63: #{intern_image_layer_forward.3} parent=39 // pred_region
          %s1005 = smul.u32 2, %s34
          %s1007 = ssub.s32 2048, 2048
          %1008 = vsyncadd %s993, %s1007
          %s1009 = smul.addr %s33, 16
          %s1010 = sadd.s32 %s1005, %s1009
          %s1011 = smul.addr %s1010, 128
          %s1012 = scalar_lea.hbm %s5, %s1011
          %s1013 = sshll.u32 %s996, 4
          %s1014 = int_to_ptr.vmem [resolvable:$true] %s1013
          %1019 = dma.vmem_to_hbm [thread:$0]  %s1014, 2048, %s1012, %s993, 256, 256, 16
        $region64: #{intern_image_layer_forward.3} parent=39 // pred_fallthru
          _
        // Predicated region
        $region65: #{intern_image_layer_forward.3} parent=39 // pred_check
          %p1020 = pneg %p201
        $region66: #{intern_image_layer_forward.3} parent=39 // pred_check_branch
          %1022 = sbr.rel (%p1020) target = $region68
        $region67: #{intern_image_layer_forward.3} parent=39 // pred_region
          %s1023 = sadd.s32 %s33, %s34
          %s1024 = smul.u32 32, %s1023
          %s1026 = ssub.s32 4096, 4096
          %1027 = vsyncadd %s998, %s1026
          %s1028 = smul.addr %s1024, 128
          %s1029 = scalar_lea.hbm %s6, %s1028
          %s1030 = sshll.u32 %s1001, 4
          %s1031 = int_to_ptr.vmem [resolvable:$true] %s1030
          %1036 = dma.vmem_to_hbm [thread:$0]  %s1031, 4096, %s1029, %s998, 128, 128, 8
        $region68: #{intern_image_layer_forward.3} parent=39 // pred_fallthru
          _
      $region40: #{intern_image_layer_forward.3} parent=5 // pred_fallthru
        _
      %p1037 = scmp.le.s32.totalorder 2, %s24
      // Predicated region
      $region69: #{intern_image_layer_forward.3} parent=5 // pred_check
        %p1038 = pneg %p1037
      $region70: #{intern_image_layer_forward.3} parent=5 // pred_check_branch
        %1040 = sbr.rel (%p1038) target = $region72
      $region71: #{intern_image_layer_forward.3} parent=5 // pred_region
        %s1041 = ssub.s32 %s24, 2
        // Predicated region
        $region73: #{intern_image_layer_forward.3} parent=71 // pred_check
          %p1042 = pneg %p179
        $region74: #{intern_image_layer_forward.3} parent=71 // pred_check_branch
          %1044 = sbr.rel (%p1042) target = $region76
        $region75: #{intern_image_layer_forward.3} parent=71 // pred_region
          %s1045 = sand.u32 %s164, 1
          %s1046 = scalar_lea.sflag [#allocation4], %s1045
          %s1047 = sand.u32 %s164, 1
          %s1048 = smul.addr %s1047, 128
          %s1049 = scalar_lea.vmem [#allocation11], %s1048
          %1050 = dma.done %s1046, 2048
        $region76: #{intern_image_layer_forward.3} parent=71 // pred_fallthru
          _
        // Predicated region
        $region77: #{intern_image_layer_forward.3} parent=71 // pred_check
          %p1051 = pneg %p207
        $region78: #{intern_image_layer_forward.3} parent=71 // pred_check_branch
          %1053 = sbr.rel (%p1051) target = $region80
        $region79: #{intern_image_layer_forward.3} parent=71 // pred_region
          %s1054 = sand.u32 %s192, 1
          %s1055 = scalar_lea.sflag [#allocation13], %s1054
          %s1056 = sand.u32 %s192, 1
          %s1057 = smul.addr %s1056, 256
          %s1058 = scalar_lea.vmem [#allocation12], %s1057
          %1059 = dma.done %s1055, 4096
        $region80: #{intern_image_layer_forward.3} parent=71 // pred_fallthru
          _
      $region72: #{intern_image_layer_forward.3} parent=5 // pred_fallthru
        _
    $region6: #{intern_image_layer_forward.3} parent=1 // loop_footer
      %s28 = sadd.s32 1, %s24
    $region7: #{intern_image_layer_forward.3} parent=1 // loop_footer_branch
      %23 = sbr.rel target = $region3
    $region8: #{intern_image_layer_forward.3} parent=1 // loop_exit
      _
    %1060 = vsyncpa [#allocation3], 1
    %s1061 = scalar_lea.sflag [#allocation3], 1
    %1062 = vsyncpa %s1061, 1
    %1063 = vsyncpa [#allocation6], 1
    %1064 = vsyncpa [#allocation9], 1
    %1065 = vsyncpa [#allocation4], 1
    %s1066 = scalar_lea.sflag [#allocation4], 1
    %1067 = vsyncpa %s1066, 1
    %1068 = vsyncpa [#allocation13], 1
    %s1069 = scalar_lea.sflag [#allocation13], 1
    %1070 = vsyncpa %s1069, 1

// kernel: tile.8
$region0: #{tile.8}
  #allocation0 [shape = 's32[1]{0}', space=sflag, size = 0x4, scoped, tag = 'scoped memory for tile.8']
  %s0 = inlined_call_operand.vmem [shape: f32[3], index: 0, kind: input, shape index: {}]
  %s1 = inlined_call_operand.vmem [shape: f32[3,3], index: 1, kind: output, shape index: {}]
  // Predicated region
  $region2: #{tile.8} parent=0 // pred_check
    _
  $region3: #{tile.8} parent=0 // pred_check_branch
    %3 = sbr.rel (0) target = $region5
  $region4: #{tile.8} parent=0 // pred_region
    _
  $region5: #{tile.8} parent=0 // pred_fallthru
    _
  %v4 = vld [vmem:[%s0] ss:$0 sm:$0xff]
  %5 = vst [vmem:[%s1] sm:$0xf] %v4

// kernel: intern_image_layer_forward.4
$region0: #{intern_image_layer_forward.4}
  #allocation0 [shape = 'u32[]', space=smem, size = 0x4, offset = 0x4, fixed_abs, tag = 'smem constant byte address 0x4 - core index']
  #allocation1 [shape = 'u32[144,128]{1,0:T(1,128)}', space=vmem, size = 0x12000, scoped, tag = 'internal scratch']
  %s0 = inlined_call_operand.hbm [shape: f32[2,64,256], index: 0, kind: input, shape index: {}]
  %s1 = inlined_call_operand.hbm [shape: f32[64,1], index: 1, kind: input, shape index: {}]
  %s2 = inlined_call_operand.hbm [shape: f32[64,1], index: 2, kind: input, shape index: {}]
  %s3 = inlined_call_operand.hbm [shape: bf16[64,128], index: 3, kind: input, shape index: {}]
  %s4 = inlined_call_operand.hbm [shape: f32[1,128], index: 4, kind: input, shape index: {}]
  %s5 = inlined_call_operand.hbm [shape: f32[512,128], index: 5, kind: output, shape index: {}]
  %s6 = sld [smem:[#allocation0]]
  $region73: #{intern_image_layer_forward.4} parent=0
    _
  %s8 = ssub.s32 1, %s6
  %s9 = scalar_select 0, %s8, %s6
  $region1: #{intern_image_layer_forward.4} parent=0
    #allocation2 [shape = 'u8[131072]{0}', space=vmem, size = 0x20000, scoped, tag = 'input window, operand 0']
    #allocation3 [shape = 's32[2]{0}', space=sflag, size = 0x8, scoped, tag = 'scoped memory for intern_image_layer_forward.4']
    #allocation4 [shape = 's32[2]{0}', space=sflag, size = 0x8, scoped, tag = 'scoped memory for intern_image_layer_forward.4']
    #allocation5 [shape = 'u8[32768]{0}', space=vmem, size = 0x8000, scoped, tag = 'input window, operand 1, single buffered']
    #allocation6 [shape = 's32[1]{0}', space=sflag, size = 0x4, scoped, tag = 'scoped memory for intern_image_layer_forward.4']
    #allocation7 [shape = 'u8[32768]{0}', space=vmem, size = 0x8000, scoped, tag = 'input window, operand 2, single buffered']
    #allocation8 [shape = 'u8[16384]{0}', space=vmem, size = 0x4000, scoped, tag = 'input window, operand 3, single buffered']
    #allocation9 [shape = 's32[1]{0}', space=sflag, size = 0x4, scoped, tag = 'scoped memory for intern_image_layer_forward.4']
    #allocation10 [shape = 'u8[512]{0}', space=vmem, size = 0x400, scoped, tag = 'input window, operand 4, single buffered']
    #allocation11 [shape = 'u8[262144]{0}', space=vmem, size = 0x40000, scoped, tag = 'output window, operand 0']
    %10 = vsyncpa [#allocation3], 0
    %s11 = scalar_lea.sflag [#allocation3], 1
    %12 = vsyncpa %s11, 0
    %13 = vsyncpa [#allocation6], 0
    %14 = vsyncpa [#allocation9], 0
    %15 = vsyncpa [#allocation4], 0
    %s16 = scalar_lea.sflag [#allocation4], 1
    %17 = vsyncpa %s16, 0
    loop: start=0, step=1, limit=4
    $region2: #{intern_image_layer_forward.4} parent=1 // loop_pre_header
      _
    $region3: #{intern_image_layer_forward.4} parent=1 // loop_header
      %s19 = sphi 0, %s23
      %p20 = scmp.ge.s32.totalorder %s19, 4
      %s26 = sphi 0, %s38
      %s27 = sphi 0, %s34
      %s28 = sphi 0, %s26
      %s29 = sphi 0, %s27
      %s30 = sphi 0, %s28
      %s31 = sphi 0, %s29
      %s43 = sphi 0, %s45
      %s46 = sphi 0, %s43
      %s47 = sphi 0, %s46
      %s63 = sphi 0, %s47
      %s67 = sphi 0, %s67
      %s69 = sphi 0, %s67
      %s70 = sphi 0, %s69
      %s84 = sphi 0, %s70
      %s88 = sphi 0, %s88
      %s90 = sphi 0, %s88
      %s91 = sphi 0, %s90
      %s105 = sphi 0, %s91
      %s109 = sphi 0, %s109
      %s111 = sphi 0, %s109
      %s112 = sphi 0, %s111
      %s126 = sphi 0, %s112
      %s130 = sphi 0, %s130
      %s132 = sphi 0, %s130
      %s133 = sphi 0, %s132
      %s147 = sphi 0, %s133
      %s155 = sphi 0, %s157
      %s158 = sphi 0, %s155
      %s159 = sphi 0, %s158
      %s175 = sphi 0, %s159
    $region4: #{intern_image_layer_forward.4} parent=1 // loop_header_branch
      %22 = sbr.rel (%p20) target = $region8
    $region5: #{intern_image_layer_forward.4} parent=1 // loop_body
      %s24 = ssub.s32 %s19, 1
      %s25 = ssub.s32 %s19, 2
      %s32 = sadd.s32 1, %s27
      %p33 = scmp.ge.s32.totalorder %s32, 1
      %s34 = scalar_select %p33, 0, %s32
      %s35 = sadd.s32 1, %s26
      %s36 = scalar_select %p33, %s35, %s26
      %p37 = scmp.ge.s32.totalorder %s36, 2
      %s38 = scalar_select %p37, 0, %s36
      %s39 = ssub.s32 %s26, %s38
      %s40 = ssub.s32 %s27, %s34
      %s41 = sor.u32 %s39, %s40
      %p42 = scmp.eq.s32.totalorder %s41, 0
      %s44 = sadd.s32 %s43, 1
      %s45 = scalar_select %p42, %s43, %s44
      %p48 = pneg %p42
      %p49 = scmp.eq.s32.totalorder %s19, 1
      %p50 = por %p48, %p49
      %p51 = scmp.ne.s32.totalorder %s43, %s46
      %p52 = scmp.eq.s32.totalorder %s19, 0
      %p53 = por %p51, %p52
      %p54 = scmp.ne.s32.totalorder %s43, %s46
      %p55 = scmp.eq.s32.totalorder %s24, 1
      %p56 = por %p54, %p55
      %p57 = scmp.ne.s32.totalorder %s46, %s47
      %p58 = scmp.eq.s32.totalorder %s24, 0
      %p59 = por %p57, %p58
      %p60 = scmp.ne.s32.totalorder %s46, %s47
      %p61 = scmp.eq.s32.totalorder %s25, 1
      %p62 = por %p60, %p61
      %p64 = scmp.ne.s32.totalorder %s47, %s63
      %p65 = scmp.eq.s32.totalorder %s25, 0
      %p66 = por %p64, %p65
      %s68 = sadd.s32 %s67, 1
      %p71 = scmp.eq.s32.totalorder %s19, 1
      %p72 = scmp.ne.s32.totalorder %s67, %s69
      %p73 = scmp.eq.s32.totalorder %s19, 0
      %p74 = por %p72, %p73
      %p75 = scmp.ne.s32.totalorder %s67, %s69
      %p76 = scmp.eq.s32.totalorder %s24, 1
      %p77 = por %p75, %p76
      %p78 = scmp.ne.s32.totalorder %s69, %s70
      %p79 = scmp.eq.s32.totalorder %s24, 0
      %p80 = por %p78, %p79
      %p81 = scmp.ne.s32.totalorder %s69, %s70
      %p82 = scmp.eq.s32.totalorder %s25, 1
      %p83 = por %p81, %p82
      %p85 = scmp.ne.s32.totalorder %s70, %s84
      %p86 = scmp.eq.s32.totalorder %s25, 0
      %p87 = por %p85, %p86
      %s89 = sadd.s32 %s88, 1
      %p92 = scmp.eq.s32.totalorder %s19, 1
      %p93 = scmp.ne.s32.totalorder %s88, %s90
      %p94 = scmp.eq.s32.totalorder %s19, 0
      %p95 = por %p93, %p94
      %p96 = scmp.ne.s32.totalorder %s88, %s90
      %p97 = scmp.eq.s32.totalorder %s24, 1
      %p98 = por %p96, %p97
      %p99 = scmp.ne.s32.totalorder %s90, %s91
      %p100 = scmp.eq.s32.totalorder %s24, 0
      %p101 = por %p99, %p100
      %p102 = scmp.ne.s32.totalorder %s90, %s91
      %p103 = scmp.eq.s32.totalorder %s25, 1
      %p104 = por %p102, %p103
      %p106 = scmp.ne.s32.totalorder %s91, %s105
      %p107 = scmp.eq.s32.totalorder %s25, 0
      %p108 = por %p106, %p107
      %s110 = sadd.s32 %s109, 1
      %p113 = scmp.eq.s32.totalorder %s19, 1
      %p114 = scmp.ne.s32.totalorder %s109, %s111
      %p115 = scmp.eq.s32.totalorder %s19, 0
      %p116 = por %p114, %p115
      %p117 = scmp.ne.s32.totalorder %s109, %s111
      %p118 = scmp.eq.s32.totalorder %s24, 1
      %p119 = por %p117, %p118
      %p120 = scmp.ne.s32.totalorder %s111, %s112
      %p121 = scmp.eq.s32.totalorder %s24, 0
      %p122 = por %p120, %p121
      %p123 = scmp.ne.s32.totalorder %s111, %s112
      %p124 = scmp.eq.s32.totalorder %s25, 1
      %p125 = por %p123, %p124
      %p127 = scmp.ne.s32.totalorder %s112, %s126
      %p128 = scmp.eq.s32.totalorder %s25, 0
      %p129 = por %p127, %p128
      %s131 = sadd.s32 %s130, 1
      %p134 = scmp.eq.s32.totalorder %s19, 1
      %p135 = scmp.ne.s32.totalorder %s130, %s132
      %p136 = scmp.eq.s32.totalorder %s19, 0
      %p137 = por %p135, %p136
      %p138 = scmp.ne.s32.totalorder %s130, %s132
      %p139 = scmp.eq.s32.totalorder %s24, 1
      %p140 = por %p138, %p139
      %p141 = scmp.ne.s32.totalorder %s132, %s133
      %p142 = scmp.eq.s32.totalorder %s24, 0
      %p143 = por %p141, %p142
      %p144 = scmp.ne.s32.totalorder %s132, %s133
      %p145 = scmp.eq.s32.totalorder %s25, 1
      %p146 = por %p144, %p145
      %p148 = scmp.ne.s32.totalorder %s133, %s147
      %p149 = scmp.eq.s32.totalorder %s25, 0
      %p150 = por %p148, %p149
      %s151 = sadd.s32 %s26, %s27
      %s152 = sadd.s32 %s38, %s34
      %s153 = ssub.s32 %s151, %s152
      %p154 = scmp.eq.s32.totalorder %s153, 0
      %s156 = sadd.s32 %s155, 1
      %s157 = scalar_select %p154, %s155, %s156
      %p160 = pneg %p154
      %p161 = scmp.eq.s32.totalorder %s19, 1
      %p162 = por %p160, %p161
      %p163 = scmp.ne.s32.totalorder %s155, %s158
      %p164 = scmp.eq.s32.totalorder %s19, 0
      %p165 = por %p163, %p164
      %p166 = scmp.ne.s32.totalorder %s155, %s158
      %p167 = scmp.eq.s32.totalorder %s24, 1
      %p168 = por %p166, %p167
      %p169 = scmp.ne.s32.totalorder %s158, %s159
      %p170 = scmp.eq.s32.totalorder %s24, 0
      %p171 = por %p169, %p170
      %p172 = scmp.ne.s32.totalorder %s158, %s159
      %p173 = scmp.eq.s32.totalorder %s25, 1
      %p174 = por %p172, %p173
      %p176 = scmp.ne.s32.totalorder %s159, %s175
      %p177 = scmp.eq.s32.totalorder %s25, 0
      %p178 = por %p176, %p177
      %p179 = scmp.le.s32.totalorder 1, %s19
      %p180 = scmp.lt.s32.totalorder %s19, 3
      %p181 = pnand %p179, %p180
      %p182 = pneg %p181
      // Predicated region
      $region9: #{intern_image_layer_forward.4} parent=5 // pred_check
        _
      $region10: #{intern_image_layer_forward.4} parent=5 // pred_check_branch
        %184 = sbr.rel (%p181) target = $region12
      $region11: #{intern_image_layer_forward.4} parent=5 // pred_region
        %s185 = ssub.s32 %s19, 1
        // Predicated region
        $region13: #{intern_image_layer_forward.4} parent=11 // pred_check
          %p186 = pneg %p80
        $region14: #{intern_image_layer_forward.4} parent=11 // pred_check_branch
          %188 = sbr.rel (%p186) target = $region16
        $region15: #{intern_image_layer_forward.4} parent=11 // pred_region
          %s190 = ssub.s32 1024, 1024
          %191 = vsyncadd [#allocation6], %s190
          %s192 = sshll.u32 [#allocation5], 4
          %s193 = int_to_ptr.vmem [resolvable:$true] %s192
          %198 = dma.hbm_to_vmem [thread:$0]  %s1, 1024, %s193, [#allocation6], 128, 128, 8
        $region16: #{intern_image_layer_forward.4} parent=11 // pred_fallthru
          _
        // Predicated region
        $region17: #{intern_image_layer_forward.4} parent=11 // pred_check
          %p199 = pneg %p101
        $region18: #{intern_image_layer_forward.4} parent=11 // pred_check_branch
          %201 = sbr.rel (%p199) target = $region20
        $region19: #{intern_image_layer_forward.4} parent=11 // pred_region
          %s203 = ssub.s32 1024, 1024
          %204 = vsyncadd [#allocation6], %s203
          %s205 = sshll.u32 [#allocation7], 4
          %s206 = int_to_ptr.vmem [resolvable:$true] %s205
          %211 = dma.hbm_to_vmem [thread:$0]  %s2, 1024, %s206, [#allocation6], 128, 128, 8
        $region20: #{intern_image_layer_forward.4} parent=11 // pred_fallthru
          _
        // Predicated region
        $region21: #{intern_image_layer_forward.4} parent=11 // pred_check
          %p212 = pneg %p122
        $region22: #{intern_image_layer_forward.4} parent=11 // pred_check_branch
          %214 = sbr.rel (%p212) target = $region24
        $region23: #{intern_image_layer_forward.4} parent=11 // pred_region
          %s216 = ssub.s32 512, 512
          %217 = vsyncadd [#allocation9], %s216
          %s218 = sshll.u32 [#allocation8], 4
          %s219 = int_to_ptr.vmem [resolvable:$true] %s218
          %224 = dma.hbm_to_vmem [thread:$0]  %s3, 512, %s219, [#allocation9], 64, 64, 4
        $region24: #{intern_image_layer_forward.4} parent=11 // pred_fallthru
          _
        // Predicated region
        $region25: #{intern_image_layer_forward.4} parent=11 // pred_check
          %p225 = pneg %p143
        $region26: #{intern_image_layer_forward.4} parent=11 // pred_check_branch
          %227 = sbr.rel (%p225) target = $region28
        $region27: #{intern_image_layer_forward.4} parent=11 // pred_region
          %s229 = ssub.s32 16, 16
          %230 = vsyncadd [#allocation9], %s229
          %s232 = sshll.u32 [#allocation10], 4
          %s233 = int_to_ptr.vmem [resolvable:$true] %s232
          %235 = dma.hbm_to_vmem [thread:$0]  %s4, 16, %s233, [#allocation9]
        $region28: #{intern_image_layer_forward.4} parent=11 // pred_fallthru
          _
      $region12: #{intern_image_layer_forward.4} parent=5 // pred_fallthru
        _
      %p236 = scmp.lt.s32.totalorder %s19, 2
      // Predicated region
      $region29: #{intern_image_layer_forward.4} parent=5 // pred_check
        %p237 = pneg %p236
      $region30: #{intern_image_layer_forward.4} parent=5 // pred_check_branch
        %239 = sbr.rel (%p237) target = $region32
      $region31: #{intern_image_layer_forward.4} parent=5 // pred_region
        // Predicated region
        $region33: #{intern_image_layer_forward.4} parent=31 // pred_check
          %p240 = pneg %p53
        $region34: #{intern_image_layer_forward.4} parent=31 // pred_check_branch
          %242 = sbr.rel (%p240) target = $region36
        $region35: #{intern_image_layer_forward.4} parent=31 // pred_region
          %s243 = sand.u32 %s43, 1
          %s244 = scalar_lea.sflag [#allocation3], %s243
          %s245 = sand.u32 %s43, 1
          %s246 = smul.addr %s245, 128
          %s247 = scalar_lea.vmem [#allocation2], %s246
          %s248 = smul.u32 2, %s27
          %s250 = ssub.s32 2048, 2048
          %251 = vsyncadd %s244, %s250
          %s252 = smul.addr %s26, 16
          %s253 = sadd.s32 %s248, %s252
          %s254 = smul.addr %s253, 128
          %s255 = scalar_lea.hbm %s0, %s254
          %s256 = sshll.u32 %s247, 4
          %s257 = int_to_ptr.vmem [resolvable:$true] %s256
          %262 = dma.hbm_to_vmem [thread:$0]  %s255, 2048, %s257, %s244, 256, 256, 16
        $region36: #{intern_image_layer_forward.4} parent=31 // pred_fallthru
          _
      $region32: #{intern_image_layer_forward.4} parent=5 // pred_fallthru
        _
      %p263 = scmp.le.s32.totalorder 1, %s19
      %p264 = scmp.lt.s32.totalorder %s19, 3
      %p265 = pnand %p263, %p264
      %p266 = pneg %p265
      // Predicated region
      $region37: #{intern_image_layer_forward.4} parent=5 // pred_check
        _
      $region38: #{intern_image_layer_forward.4} parent=5 // pred_check_branch
        %268 = sbr.rel (%p265) target = $region40
      $region39: #{intern_image_layer_forward.4} parent=5 // pred_region
        %s269 = ssub.s32 %s19, 1
        %s270 = sand.u32 %s46, 1
        %s271 = scalar_lea.sflag [#allocation3], %s270
        %s272 = sand.u32 %s46, 1
        %s273 = smul.addr %s272, 128
        %s274 = scalar_lea.vmem [#allocation2], %s273
        // Predicated region
        $region41: #{intern_image_layer_forward.4} parent=39 // pred_check
          %p275 = pneg %p59
        $region42: #{intern_image_layer_forward.4} parent=39 // pred_check_branch
          %277 = sbr.rel (%p275) target = $region44
        $region43: #{intern_image_layer_forward.4} parent=39 // pred_region
          %278 = dma.done %s271, 2048
        $region44: #{intern_image_layer_forward.4} parent=39 // pred_fallthru
          _
        // Predicated region
        $region45: #{intern_image_layer_forward.4} parent=39 // pred_check
          %p279 = pneg %p80
        $region46: #{intern_image_layer_forward.4} parent=39 // pred_check_branch
          %281 = sbr.rel (%p279) target = $region48
        $region47: #{intern_image_layer_forward.4} parent=39 // pred_region
          %282 = dma.done [#allocation6], 1024
        $region48: #{intern_image_layer_forward.4} parent=39 // pred_fallthru
          _
        // Predicated region
        $region49: #{intern_image_layer_forward.4} parent=39 // pred_check
          %p283 = pneg %p101
        $region50: #{intern_image_layer_forward.4} parent=39 // pred_check_branch
          %285 = sbr.rel (%p283) target = $region52
        $region51: #{intern_image_layer_forward.4} parent=39 // pred_region
          %286 = dma.done [#allocation6], 1024
        $region52: #{intern_image_layer_forward.4} parent=39 // pred_fallthru
          _
        // Predicated region
        $region53: #{intern_image_layer_forward.4} parent=39 // pred_check
          %p287 = pneg %p122
        $region54: #{intern_image_layer_forward.4} parent=39 // pred_check_branch
          %289 = sbr.rel (%p287) target = $region56
        $region55: #{intern_image_layer_forward.4} parent=39 // pred_region
          %290 = dma.done [#allocation9], 512
        $region56: #{intern_image_layer_forward.4} parent=39 // pred_fallthru
          _
        // Predicated region
        $region57: #{intern_image_layer_forward.4} parent=39 // pred_check
          %p291 = pneg %p143
        $region58: #{intern_image_layer_forward.4} parent=39 // pred_check_branch
          %293 = sbr.rel (%p291) target = $region60
        $region59: #{intern_image_layer_forward.4} parent=39 // pred_region
          %294 = dma.done [#allocation9], 16
        $region60: #{intern_image_layer_forward.4} parent=39 // pred_fallthru
          _
        %s295 = sand.u32 %s46, 1
        %s296 = scalar_lea.sflag [#allocation3], %s295
        %s297 = sand.u32 %s46, 1
        %s298 = smul.addr %s297, 128
        %s299 = scalar_lea.vmem [#allocation2], %s298
        %p300 = pneg %p59
        %p301 = pneg %p56
        %p302 = pneg %p80
        %p303 = pneg %p77
        %p304 = pneg %p101
        %p305 = pneg %p98
        %p306 = pneg %p122
        %p307 = pneg %p119
        %p308 = pneg %p143
        %p309 = pneg %p140
        %p310 = pneg %p171
        %p311 = pneg %p168
        %s312 = sand.u32 %s158, 1
        %s313 = scalar_lea.sflag [#allocation4], %s312
        %s314 = sand.u32 %s158, 1
        %s315 = smul.addr %s314, 256
        %s316 = scalar_lea.vmem [#allocation11], %s315
        %s317 = smul.u32 2, %s29
        %s318 = sadd.s32 %s28, %s29
        %s319 = smul.u32 32, %s318
        %v321 = vld [vmem:[%s274] sm:$0xff]
        %v322 = vld [vmem:[%s274 + $0x8] sm:$0xff]
        %v323 = vld [vmem:[%s274 + $0x10] sm:$0xff]
        %v324 = vld [vmem:[%s274 + $0x18] sm:$0xff]
        %v325 = vld [vmem:[%s274 + $0x20] sm:$0xff]
        %v326 = vld [vmem:[%s274 + $0x28] sm:$0xff]
        %v327 = vld [vmem:[%s274 + $0x30] sm:$0xff]
        %v328 = vld [vmem:[%s274 + $0x38] sm:$0xff]
        %v329 = vld [vmem:[%s274 + $0x40] sm:$0xff]
        %v330 = vld [vmem:[%s274 + $0x48] sm:$0xff]
        %v331 = vld [vmem:[%s274 + $0x50] sm:$0xff]
        %v332 = vld [vmem:[%s274 + $0x58] sm:$0xff]
        %v333 = vld [vmem:[%s274 + $0x60] sm:$0xff]
        %v334 = vld [vmem:[%s274 + $0x68] sm:$0xff]
        %v335 = vld [vmem:[%s274 + $0x70] sm:$0xff]
        %v336 = vld [vmem:[%s274 + $0x78] sm:$0xff]
        %v337 = vld [vmem:[#allocation5] sm:$0xff]
        %v338 = vld [vmem:[#allocation5 + $0x8] sm:$0xff]
        %v339 = vld [vmem:[#allocation5 + $0x10] sm:$0xff]
        %v340 = vld [vmem:[#allocation5 + $0x18] sm:$0xff]
        %v341 = vld [vmem:[#allocation5 + $0x20] sm:$0xff]
        %v342 = vld [vmem:[#allocation5 + $0x28] sm:$0xff]
        %v343 = vld [vmem:[#allocation5 + $0x30] sm:$0xff]
        %v344 = vld [vmem:[#allocation5 + $0x38] sm:$0xff]
        %v345 = vld [vmem:[#allocation7] sm:$0xff]
        %v346 = vld [vmem:[#allocation7 + $0x8] sm:$0xff]
        %v347 = vld [vmem:[#allocation7 + $0x10] sm:$0xff]
        %v348 = vld [vmem:[#allocation7 + $0x18] sm:$0xff]
        %v349 = vld [vmem:[#allocation7 + $0x20] sm:$0xff]
        %v350 = vld [vmem:[#allocation7 + $0x28] sm:$0xff]
        %v351 = vld [vmem:[#allocation7 + $0x30] sm:$0xff]
        %v352 = vld [vmem:[#allocation7 + $0x38] sm:$0xff]
        %v353 = vadd.f32 %v321, %v323
        %v354 = vadd.f32 %v353, %v325
        %v355 = vadd.f32 %v354, %v327
        %v356 = vadd.f32 %v355, %v329
        %v357 = vadd.f32 %v356, %v331
        %v358 = vadd.f32 %v357, %v333
        %v359 = vadd.f32 %v358, %v335
        %v360 = vrot.slane %v359, 4
        %v361 = vadd.f32 %v359, %v360
        %v362 = vrot.slane %v361, 2
        %v363 = vadd.f32 %v361, %v362
        %v364 = vrot.slane %v363, 1
        %v365 = vadd.f32 %v363, %v364
        %v366 = vadd.f32 %v322, %v324
        %v367 = vadd.f32 %v366, %v326
        %v368 = vadd.f32 %v367, %v328
        %v369 = vadd.f32 %v368, %v330
        %v370 = vadd.f32 %v369, %v332
        %v371 = vadd.f32 %v370, %v334
        %v372 = vadd.f32 %v371, %v336
        %v373 = vrot.slane %v372, 4
        %v374 = vadd.f32 %v372, %v373
        %v375 = vrot.slane %v374, 2
        %v376 = vadd.f32 %v374, %v375
        %v377 = vrot.slane %v376, 1
        %v378 = vadd.f32 %v376, %v377
        %v379 = vrcp.pop 64.0
        %v380 = vmul.f32 %v365, %v379
        %v381 = vmul.f32 %v378, %v379
        %v382 = vsub.f32 %v321, %v380
        %v383 = vsub.f32 %v322, %v381
        %v384 = vsub.f32 %v323, %v380
        %v385 = vsub.f32 %v324, %v381
        %v386 = vsub.f32 %v325, %v380
        %v387 = vsub.f32 %v326, %v381
        %v388 = vsub.f32 %v327, %v380
        %v389 = vsub.f32 %v328, %v381
        %v390 = vsub.f32 %v329, %v380
        %v391 = vsub.f32 %v330, %v381
        %v392 = vsub.f32 %v331, %v380
        %v393 = vsub.f32 %v332, %v381
        %v394 = vsub.f32 %v333, %v380
        %v395 = vsub.f32 %v334, %v381
        %v396 = vsub.f32 %v335, %v380
        %v397 = vsub.f32 %v336, %v381
        %v398 = vmul.f32 %v382, %v382
        %v399 = vmul.f32 %v383, %v383
        %v400 = vmul.f32 %v384, %v384
        %v401 = vmul.f32 %v385, %v385
        %v402 = vmul.f32 %v386, %v386
        %v403 = vmul.f32 %v387, %v387
        %v404 = vmul.f32 %v388, %v388
        %v405 = vmul.f32 %v389, %v389
        %v406 = vmul.f32 %v390, %v390
        %v407 = vmul.f32 %v391, %v391
        %v408 = vmul.f32 %v392, %v392
        %v409 = vmul.f32 %v393, %v393
        %v410 = vmul.f32 %v394, %v394
        %v411 = vmul.f32 %v395, %v395
        %v412 = vmul.f32 %v396, %v396
        %v413 = vmul.f32 %v397, %v397
        %v414 = vadd.f32 %v398, %v400
        %v415 = vadd.f32 %v414, %v402
        %v416 = vadd.f32 %v415, %v404
        %v417 = vadd.f32 %v416, %v406
        %v418 = vadd.f32 %v417, %v408
        %v419 = vadd.f32 %v418, %v410
        %v420 = vadd.f32 %v419, %v412
        %v421 = vrot.slane %v420, 4
        %v422 = vadd.f32 %v420, %v421
        %v423 = vrot.slane %v422, 2
        %v424 = vadd.f32 %v422, %v423
        %v425 = vrot.slane %v424, 1
        %v426 = vadd.f32 %v424, %v425
        %v427 = vadd.f32 %v399, %v401
        %v428 = vadd.f32 %v427, %v403
        %v429 = vadd.f32 %v428, %v405
        %v430 = vadd.f32 %v429, %v407
        %v431 = vadd.f32 %v430, %v409
        %v432 = vadd.f32 %v431, %v411
        %v433 = vadd.f32 %v432, %v413
        %v434 = vrot.slane %v433, 4
        %v435 = vadd.f32 %v433, %v434
        %v436 = vrot.slane %v435, 2
        %v437 = vadd.f32 %v435, %v436
        %v438 = vrot.slane %v437, 1
        %v439 = vadd.f32 %v437, %v438
        %v440 = vmul.f32 %v426, %v379
        %v441 = vmul.f32 %v439, %v379
        %v442 = vadd.f32 %v440, 1e-06
        %v443 = vadd.f32 %v441, 1e-06
        %v444 = vrsqrt.pop %v442
        %v445 = vrsqrt.pop %v443
        %v446 = vmul.f32 %v382, %v444
        %v447 = vmul.f32 %v383, %v445
        %v448 = vmul.f32 %v384, %v444
        %v449 = vmul.f32 %v385, %v445
        %v450 = vmul.f32 %v386, %v444
        %v451 = vmul.f32 %v387, %v445
        %v452 = vmul.f32 %v388, %v444
        %v453 = vmul.f32 %v389, %v445
        %v454 = vmul.f32 %v390, %v444
        %v455 = vmul.f32 %v391, %v445
        %v456 = vmul.f32 %v392, %v444
        %v457 = vmul.f32 %v393, %v445
        %v458 = vmul.f32 %v394, %v444
        %v459 = vmul.f32 %v395, %v445
        %v460 = vmul.f32 %v396, %v444
        %v461 = vmul.f32 %v397, %v445
        %463 = vset.pattern.permute.xlu0 0
        %464 = vperm.xlu0 %463, %v337
        %v465 = vpop.permute.xlu0 %464
        %468 = vset.pattern.permute.xlu0 0
        %469 = vperm.xlu0 %468, %v338
        %v470 = vpop.permute.xlu0 %469
        %473 = vset.pattern.permute.xlu0 0
        %474 = vperm.xlu0 %473, %v339
        %v475 = vpop.permute.xlu0 %474
        %478 = vset.pattern.permute.xlu0 0
        %479 = vperm.xlu0 %478, %v340
        %v480 = vpop.permute.xlu0 %479
        %483 = vset.pattern.permute.xlu0 0
        %484 = vperm.xlu0 %483, %v341
        %v485 = vpop.permute.xlu0 %484
        %488 = vset.pattern.permute.xlu0 0
        %489 = vperm.xlu0 %488, %v342
        %v490 = vpop.permute.xlu0 %489
        %493 = vset.pattern.permute.xlu0 0
        %494 = vperm.xlu0 %493, %v343
        %v495 = vpop.permute.xlu0 %494
        %498 = vset.pattern.permute.xlu0 0
        %499 = vperm.xlu0 %498, %v344
        %v500 = vpop.permute.xlu0 %499
        %v502 = vmul.f32 %v446, %v465
        %v503 = vmul.f32 %v447, %v465
        %v504 = vmul.f32 %v448, %v470
        %v505 = vmul.f32 %v449, %v470
        %v506 = vmul.f32 %v450, %v475
        %v507 = vmul.f32 %v451, %v475
        %v508 = vmul.f32 %v452, %v480
        %v509 = vmul.f32 %v453, %v480
        %v510 = vmul.f32 %v454, %v485
        %v511 = vmul.f32 %v455, %v485
        %v512 = vmul.f32 %v456, %v490
        %v513 = vmul.f32 %v457, %v490
        %v514 = vmul.f32 %v458, %v495
        %v515 = vmul.f32 %v459, %v495
        %v516 = vmul.f32 %v460, %v500
        %v517 = vmul.f32 %v461, %v500
        %519 = vset.pattern.permute.xlu0 0
        %520 = vperm.xlu0 %519, %v345
        %v521 = vpop.permute.xlu0 %520
        %524 = vset.pattern.permute.xlu0 0
        %525 = vperm.xlu0 %524, %v346
        %v526 = vpop.permute.xlu0 %525
        %529 = vset.pattern.permute.xlu0 0
        %530 = vperm.xlu0 %529, %v347
        %v531 = vpop.permute.xlu0 %530
        %534 = vset.pattern.permute.xlu0 0
        %535 = vperm.xlu0 %534, %v348
        %v536 = vpop.permute.xlu0 %535
        %539 = vset.pattern.permute.xlu0 0
        %540 = vperm.xlu0 %539, %v349
        %v541 = vpop.permute.xlu0 %540
        %544 = vset.pattern.permute.xlu0 0
        %545 = vperm.xlu0 %544, %v350
        %v546 = vpop.permute.xlu0 %545
        %549 = vset.pattern.permute.xlu0 0
        %550 = vperm.xlu0 %549, %v351
        %v551 = vpop.permute.xlu0 %550
        %554 = vset.pattern.permute.xlu0 0
        %555 = vperm.xlu0 %554, %v352
        %v556 = vpop.permute.xlu0 %555
        %v558 = vadd.f32 %v502, %v521
        %v559 = vadd.f32 %v503, %v521
        %v560 = vadd.f32 %v504, %v526
        %v561 = vadd.f32 %v505, %v526
        %v562 = vadd.f32 %v506, %v531
        %v563 = vadd.f32 %v507, %v531
        %v564 = vadd.f32 %v508, %v536
        %v565 = vadd.f32 %v509, %v536
        %v566 = vadd.f32 %v510, %v541
        %v567 = vadd.f32 %v511, %v541
        %v568 = vadd.f32 %v512, %v546
        %v569 = vadd.f32 %v513, %v546
        %v570 = vadd.f32 %v514, %v551
        %v571 = vadd.f32 %v515, %v551
        %v572 = vadd.f32 %v516, %v556
        %v573 = vadd.f32 %v517, %v556
        %v574 = vmul.f32 %v558, %v558
        %v575 = vmul.f32 %v559, %v559
        %v576 = vmul.f32 %v560, %v560
        %v577 = vmul.f32 %v561, %v561
        %v578 = vmul.f32 %v562, %v562
        %v579 = vmul.f32 %v563, %v563
        %v580 = vmul.f32 %v564, %v564
        %v581 = vmul.f32 %v565, %v565
        %v582 = vmul.f32 %v566, %v566
        %v583 = vmul.f32 %v567, %v567
        %v584 = vmul.f32 %v568, %v568
        %v585 = vmul.f32 %v569, %v569
        %v586 = vmul.f32 %v570, %v570
        %v587 = vmul.f32 %v571, %v571
        %v588 = vmul.f32 %v572, %v572
        %v589 = vmul.f32 %v573, %v573
        %v590 = vmul.f32 %v558, %v574
        %v591 = vmul.f32 %v559, %v575
        %v592 = vmul.f32 %v560, %v576
        %v593 = vmul.f32 %v561, %v577
        %v594 = vmul.f32 %v562, %v578
        %v595 = vmul.f32 %v563, %v579
        %v596 = vmul.f32 %v564, %v580
        %v597 = vmul.f32 %v565, %v581
        %v598 = vmul.f32 %v566, %v582
        %v599 = vmul.f32 %v567, %v583
        %v600 = vmul.f32 %v568, %v584
        %v601 = vmul.f32 %v569, %v585
        %v602 = vmul.f32 %v570, %v586
        %v603 = vmul.f32 %v571, %v587
        %v604 = vmul.f32 %v572, %v588
        %v605 = vmul.f32 %v573, %v589
        %v606 = vmul.f32 %v590, 0.044715
        %v607 = vmul.f32 %v591, 0.044715
        %v608 = vmul.f32 %v592, 0.044715
        %v609 = vmul.f32 %v593, 0.044715
        %v610 = vmul.f32 %v594, 0.044715
        %v611 = vmul.f32 %v595, 0.044715
        %v612 = vmul.f32 %v596, 0.044715
        %v613 = vmul.f32 %v597, 0.044715
        %v614 = vmul.f32 %v598, 0.044715
        %v615 = vmul.f32 %v599, 0.044715
        %v616 = vmul.f32 %v600, 0.044715
        %v617 = vmul.f32 %v601, 0.044715
        %v618 = vmul.f32 %v602, 0.044715
        %v619 = vmul.f32 %v603, 0.044715
        %v620 = vmul.f32 %v604, 0.044715
        %v621 = vmul.f32 %v605, 0.044715
        %v622 = vadd.f32 %v558, %v606
        %v623 = vadd.f32 %v559, %v607
        %v624 = vadd.f32 %v560, %v608
        %v625 = vadd.f32 %v561, %v609
        %v626 = vadd.f32 %v562, %v610
        %v627 = vadd.f32 %v563, %v611
        %v628 = vadd.f32 %v564, %v612
        %v629 = vadd.f32 %v565, %v613
        %v630 = vadd.f32 %v566, %v614
        %v631 = vadd.f32 %v567, %v615
        %v632 = vadd.f32 %v568, %v616
        %v633 = vadd.f32 %v569, %v617
        %v634 = vadd.f32 %v570, %v618
        %v635 = vadd.f32 %v571, %v619
        %v636 = vadd.f32 %v572, %v620
        %v637 = vadd.f32 %v573, %v621
        %v638 = vmul.f32 %v622, 0.7978846
        %v639 = vmul.f32 %v623, 0.7978846
        %v640 = vmul.f32 %v624, 0.7978846
        %v641 = vmul.f32 %v625, 0.7978846
        %v642 = vmul.f32 %v626, 0.7978846
        %v643 = vmul.f32 %v627, 0.7978846
        %v644 = vmul.f32 %v628, 0.7978846
        %v645 = vmul.f32 %v629, 0.7978846
        %v646 = vmul.f32 %v630, 0.7978846
        %v647 = vmul.f32 %v631, 0.7978846
        %v648 = vmul.f32 %v632, 0.7978846
        %v649 = vmul.f32 %v633, 0.7978846
        %v650 = vmul.f32 %v634, 0.7978846
        %v651 = vmul.f32 %v635, 0.7978846
        %v652 = vmul.f32 %v636, 0.7978846
        %v653 = vmul.f32 %v637, 0.7978846
        %v654 = vtanh.pop %v638
        %v655 = vtanh.pop %v639
        %v656 = vtanh.pop %v640
        %v657 = vtanh.pop %v641
        %v658 = vtanh.pop %v642
        %v659 = vtanh.pop %v643
        %v660 = vtanh.pop %v644
        %v661 = vtanh.pop %v645
        %v662 = vtanh.pop %v646
        %v663 = vtanh.pop %v647
        %v664 = vtanh.pop %v648
        %v665 = vtanh.pop %v649
        %v666 = vtanh.pop %v650
        %v667 = vtanh.pop %v651
        %v668 = vtanh.pop %v652
        %v669 = vtanh.pop %v653
        %v670 = vadd.f32 %v654, 1.0
        %v671 = vadd.f32 %v655, 1.0
        %v672 = vadd.f32 %v656, 1.0
        %v673 = vadd.f32 %v657, 1.0
        %v674 = vadd.f32 %v658, 1.0
        %v675 = vadd.f32 %v659, 1.0
        %v676 = vadd.f32 %v660, 1.0
        %v677 = vadd.f32 %v661, 1.0
        %v678 = vadd.f32 %v662, 1.0
        %v679 = vadd.f32 %v663, 1.0
        %v680 = vadd.f32 %v664, 1.0
        %v681 = vadd.f32 %v665, 1.0
        %v682 = vadd.f32 %v666, 1.0
        %v683 = vadd.f32 %v667, 1.0
        %v684 = vadd.f32 %v668, 1.0
        %v685 = vadd.f32 %v669, 1.0
        %v686 = vmul.f32 %v670, 0.5
        %v687 = vmul.f32 %v671, 0.5
        %v688 = vmul.f32 %v672, 0.5
        %v689 = vmul.f32 %v673, 0.5
        %v690 = vmul.f32 %v674, 0.5
        %v691 = vmul.f32 %v675, 0.5
        %v692 = vmul.f32 %v676, 0.5
        %v693 = vmul.f32 %v677, 0.5
        %v694 = vmul.f32 %v678, 0.5
        %v695 = vmul.f32 %v679, 0.5
        %v696 = vmul.f32 %v680, 0.5
        %v697 = vmul.f32 %v681, 0.5
        %v698 = vmul.f32 %v682, 0.5
        %v699 = vmul.f32 %v683, 0.5
        %v700 = vmul.f32 %v684, 0.5
        %v701 = vmul.f32 %v685, 0.5
        %v702 = vmul.f32 %v558, %v686
        %v703 = vmul.f32 %v559, %v687
        %v704 = vmul.f32 %v560, %v688
        %v705 = vmul.f32 %v561, %v689
        %v706 = vmul.f32 %v562, %v690
        %v707 = vmul.f32 %v563, %v691
        %v708 = vmul.f32 %v564, %v692
        %v709 = vmul.f32 %v565, %v693
        %v710 = vmul.f32 %v566, %v694
        %v711 = vmul.f32 %v567, %v695
        %v712 = vmul.f32 %v568, %v696
        %v713 = vmul.f32 %v569, %v697
        %v714 = vmul.f32 %v570, %v698
        %v715 = vmul.f32 %v571, %v699
        %v716 = vmul.f32 %v572, %v700
        %v717 = vmul.f32 %v573, %v701
        %718 = vxpose.xlu0.b32.start [1/16] %v702, 128
        %719 = vxpose.xlu0.b32.cont [2/16] %v704, 128
        %720 = vxpose.xlu0.b32.cont [3/16] %v706, 128
        %721 = vxpose.xlu0.b32.cont [4/16] %v708, 128
        %722 = vxpose.xlu0.b32.cont [5/16] %v710, 128
        %723 = vxpose.xlu0.b32.cont [6/16] %v712, 128
        %724 = vxpose.xlu0.b32.cont [7/16] %v714, 128
        %725 = vxpose.xlu0.b32.cont [8/16] %v716, 128
        %726 = vxpose.xlu0.b32.cont [9/16] 0.0, 128
        %727 = vxpose.xlu0.b32.cont [10/16] 0.0, 128
        %728 = vxpose.xlu0.b32.cont [11/16] 0.0, 128
        %729 = vxpose.xlu0.b32.cont [12/16] 0.0, 128
        %730 = vxpose.xlu0.b32.cont [13/16] 0.0, 128
        %731 = vxpose.xlu0.b32.cont [14/16] 0.0, 128
        %732 = vxpose.xlu0.b32.cont [15/16] 0.0, 128
        %733 = vxpose.xlu0.b32.end [16/16] 0.0, 128
        %v734 = vpop.trf.xlu0
        %v735 = vpop.trf.xlu0
        %v736 = vpop.trf.xlu0
        %v737 = vpop.trf.xlu0
        %v738 = vpop.trf.xlu0
        %v739 = vpop.trf.xlu0
        %v740 = vpop.trf.xlu0
        %v741 = vpop.trf.xlu0
        %v742 = vpop.trf.xlu0
        %v743 = vpop.trf.xlu0
        %v744 = vpop.trf.xlu0
        %v745 = vpop.trf.xlu0
        %v746 = vpop.trf.xlu0
        %v747 = vpop.trf.xlu0
        %v748 = vpop.trf.xlu0
        %v749 = vpop.trf.xlu0
        %750 = vxpose.xlu0.b32.start [1/16] %v703, 128
        %751 = vxpose.xlu0.b32.cont [2/16] %v705, 128
        %752 = vxpose.xlu0.b32.cont [3/16] %v707, 128
        %753 = vxpose.xlu0.b32.cont [4/16] %v709, 128
        %754 = vxpose.xlu0.b32.cont [5/16] %v711, 128
        %755 = vxpose.xlu0.b32.cont [6/16] %v713, 128
        %756 = vxpose.xlu0.b32.cont [7/16] %v715, 128
        %757 = vxpose.xlu0.b32.cont [8/16] %v717, 128
        %758 = vxpose.xlu0.b32.cont [9/16] 0.0, 128
        %759 = vxpose.xlu0.b32.cont [10/16] 0.0, 128
        %760 = vxpose.xlu0.b32.cont [11/16] 0.0, 128
        %761 = vxpose.xlu0.b32.cont [12/16] 0.0, 128
        %762 = vxpose.xlu0.b32.cont [13/16] 0.0, 128
        %763 = vxpose.xlu0.b32.cont [14/16] 0.0, 128
        %764 = vxpose.xlu0.b32.cont [15/16] 0.0, 128
        %765 = vxpose.xlu0.b32.end [16/16] 0.0, 128
        %v766 = vpop.trf.xlu0
        %v767 = vpop.trf.xlu0
        %v768 = vpop.trf.xlu0
        %v769 = vpop.trf.xlu0
        %v770 = vpop.trf.xlu0
        %v771 = vpop.trf.xlu0
        %v772 = vpop.trf.xlu0
        %v773 = vpop.trf.xlu0
        %v774 = vpop.trf.xlu0
        %v775 = vpop.trf.xlu0
        %v776 = vpop.trf.xlu0
        %v777 = vpop.trf.xlu0
        %v778 = vpop.trf.xlu0
        %v779 = vpop.trf.xlu0
        %v780 = vpop.trf.xlu0
        %v781 = vpop.trf.xlu0
        %v782 = vpack.c.bf16 %v735, %v734
        %v783 = vpack.c.bf16 %v737, %v736
        %v784 = vpack.c.bf16 %v739, %v738
        %v785 = vpack.c.bf16 %v741, %v740
        %v786 = vpack.c.bf16 %v743, %v742
        %v787 = vpack.c.bf16 %v745, %v744
        %v788 = vpack.c.bf16 %v747, %v746
        %v789 = vpack.c.bf16 %v749, %v748
        %v790 = vpack.c.bf16 %v767, %v766
        %v791 = vpack.c.bf16 %v769, %v768
        %v792 = vpack.c.bf16 %v771, %v770
        %v793 = vpack.c.bf16 %v773, %v772
        %v794 = vpack.c.bf16 %v775, %v774
        %v795 = vpack.c.bf16 %v777, %v776
        %v796 = vpack.c.bf16 %v779, %v778
        %v797 = vpack.c.bf16 %v781, %v780
        %v798 = vld [vmem:[#allocation8] sm:$0xf]
        %v799 = vld [vmem:[#allocation8 + $0x4] sm:$0xf]
        %v800 = vld [vmem:[#allocation8 + $0x8] sm:$0xf]
        %v801 = vld [vmem:[#allocation8 + $0xc] sm:$0xf]
        %v802 = vld [vmem:[#allocation8 + $0x10] sm:$0xf]
        %v803 = vld [vmem:[#allocation8 + $0x14] sm:$0xf]
        %v804 = vld [vmem:[#allocation8 + $0x18] sm:$0xf]
        %v805 = vld [vmem:[#allocation8 + $0x1c] sm:$0xf]
        %v806 = vld [vmem:[#allocation10] sm:$0x1]
        %v808 = vlaneseq
        %v809 = vshrl.u32 %v808, 7
        %v810 = vsub.s32 0, %v809
        %v811 = vrot.slane %v806, %v810
        %v821 = vunpack.c.l.b16 %v798
        %v822 = vunpack.c.l.b16 %v799
        %v823 = vunpack.c.l.b16 %v800
        %v824 = vunpack.c.l.b16 %v801
        %v825 = vunpack.c.l.b16 %v802
        %v826 = vunpack.c.l.b16 %v803
        %v827 = vunpack.c.l.b16 %v804
        %v828 = vunpack.c.l.b16 %v805
        %v829 = vpack.c.b16 %v822, %v821
        %v830 = vpack.c.b16 %v824, %v823
        %v831 = vpack.c.b16 %v826, %v825
        %v832 = vpack.c.b16 %v828, %v827
        %vm837 = vcmask 523264
        %v839 = vsel %vm837, %v782, 0
        %v842 = vsel %vm837, %v783, 0
        %v845 = vsel %vm837, %v784, 0
        %v848 = vsel %vm837, %v785, 0
        %v851 = vsel %vm837, %v786, 0
        %v854 = vsel %vm837, %v787, 0
        %v857 = vsel %vm837, %v788, 0
        %v860 = vsel %vm837, %v789, 0
        %v863 = vsel %vm837, %v790, 0
        %v866 = vsel %vm837, %v791, 0
        %v869 = vsel %vm837, %v792, 0
        %v872 = vsel %vm837, %v793, 0
        %v875 = vsel %vm837, %v794, 0
        %v878 = vsel %vm837, %v795, 0
        %v881 = vsel %vm837, %v796, 0
        %v884 = vsel %vm837, %v797, 0
        %886 = vmatprep.subr.bf16.mxu0 0
        %887 = vmatpush1.bf16.msra.mxu0 %v829
        %888 = vmatprep.subr.bf16.mxu0 0
        %889 = vmatpush1.bf16.msra.mxu0 %v830
        %890 = vmatprep.subr.bf16.mxu0 0
        %891 = vmatpush1.bf16.msra.mxu0 %v831
        %892 = vmatprep.subr.bf16.mxu0 0
        %893 = vmatpush1.bf16.msra.mxu0 %v832
        %894 = vmatprep.subr.bf16.mxu0 0
        %895 = vmatpush1.bf16.msra.mxu0 0
        %896 = vmatprep.subr.bf16.mxu0 0
        %897 = vmatpush1.bf16.msra.mxu0 0
        %898 = vmatprep.subr.bf16.mxu0 0
        %899 = vmatpush1.bf16.msra.mxu0 0
        %900 = vmatprep.subr.bf16.mxu0 0
        %901 = vmatpush1.bf16.msra.mxu0 0
        %902 = vmatprep.subr.bf16.mxu0 0
        %903 = vmatpush1.bf16.msra.mxu0 0
        %904 = vmatprep.subr.bf16.mxu0 0
        %905 = vmatpush1.bf16.msra.mxu0 0
        %906 = vmatprep.subr.bf16.mxu0 0
        %907 = vmatpush1.bf16.msra.mxu0 0
        %908 = vmatprep.subr.bf16.mxu0 0
        %909 = vmatpush1.bf16.msra.mxu0 0
        %910 = vmatprep.subr.bf16.mxu0 0
        %911 = vmatpush1.bf16.msra.mxu0 0
        %912 = vmatprep.subr.bf16.mxu0 0
        %913 = vmatpush1.bf16.msra.mxu0 0
        %914 = vmatprep.subr.bf16.mxu0 0
        %915 = vmatpush1.bf16.msra.mxu0 0
        %916 = vmatprep.subr.bf16.mxu0 0
        %917 = vmatpush1.bf16.msra.mxu0 0
        %918 = vmatprep.mubr.bf16.mxu0 0
        %919 = vmatmul.mubr.bf16.gmra.mrb[0].mxu0 %v839
        %v920 = vpop.f32.mrb[0].mxu0
        %v921 = vadd.f32 %v811, %v920
        %v922 = vpop.f32.mrb[0].mxu0
        %v923 = vpop.f32.mrb[0].mxu0
        %v924 = vadd.f32 %v811, %v923
        %v925 = vpop.f32.mrb[0].mxu0
        %926 = vmatprep.mubr.bf16.mxu0 0
        %927 = vmatmul.mubr.bf16.gmra.mrb[0].mxu0 %v842
        %v928 = vpop.f32.mrb[0].mxu0
        %v929 = vadd.f32 %v811, %v928
        %v930 = vpop.f32.mrb[0].mxu0
        %v931 = vpop.f32.mrb[0].mxu0
        %v932 = vadd.f32 %v811, %v931
        %v933 = vpop.f32.mrb[0].mxu0
        %934 = vmatprep.mubr.bf16.mxu0 0
        %935 = vmatmul.mubr.bf16.gmra.mrb[0].mxu0 %v845
        %v936 = vpop.f32.mrb[0].mxu0
        %v937 = vadd.f32 %v811, %v936
        %v938 = vpop.f32.mrb[0].mxu0
        %v939 = vpop.f32.mrb[0].mxu0
        %v940 = vadd.f32 %v811, %v939
        %v941 = vpop.f32.mrb[0].mxu0
        %942 = vmatprep.mubr.bf16.mxu0 0
        %943 = vmatmul.mubr.bf16.gmra.mrb[0].mxu0 %v848
        %v944 = vpop.f32.mrb[0].mxu0
        %v945 = vadd.f32 %v811, %v944
        %v946 = vpop.f32.mrb[0].mxu0
        %v947 = vpop.f32.mrb[0].mxu0
        %v948 = vadd.f32 %v811, %v947
        %v949 = vpop.f32.mrb[0].mxu0
        %950 = vmatprep.mubr.bf16.mxu0 0
        %951 = vmatmul.mubr.bf16.gmra.mrb[0].mxu0 %v851
        %v952 = vpop.f32.mrb[0].mxu0
        %v953 = vadd.f32 %v811, %v952
        %v954 = vpop.f32.mrb[0].mxu0
        %v955 = vpop.f32.mrb[0].mxu0
        %v956 = vadd.f32 %v811, %v955
        %v957 = vpop.f32.mrb[0].mxu0
        %958 = vmatprep.mubr.bf16.mxu0 0
        %959 = vmatmul.mubr.bf16.gmra.mrb[0].mxu0 %v854
        %v960 = vpop.f32.mrb[0].mxu0
        %v961 = vadd.f32 %v811, %v960
        %v962 = vpop.f32.mrb[0].mxu0
        %v963 = vpop.f32.mrb[0].mxu0
        %v964 = vadd.f32 %v811, %v963
        %v965 = vpop.f32.mrb[0].mxu0
        %966 = vmatprep.mubr.bf16.mxu0 0
        %967 = vmatmul.mubr.bf16.gmra.mrb[0].mxu0 %v857
        %v968 = vpop.f32.mrb[0].mxu0
        %v969 = vadd.f32 %v811, %v968
        %v970 = vpop.f32.mrb[0].mxu0
        %v971 = vpop.f32.mrb[0].mxu0
        %v972 = vadd.f32 %v811, %v971
        %v973 = vpop.f32.mrb[0].mxu0
        %974 = vmatprep.mubr.bf16.mxu0 0
        %975 = vmatmul.mubr.bf16.gmra.mrb[0].mxu0 %v860
        %v976 = vpop.f32.mrb[0].mxu0
        %v977 = vadd.f32 %v811, %v976
        %v978 = vpop.f32.mrb[0].mxu0
        %v979 = vpop.f32.mrb[0].mxu0
        %v980 = vadd.f32 %v811, %v979
        %v981 = vpop.f32.mrb[0].mxu0
        %982 = vmatprep.mubr.bf16.mxu0 0
        %983 = vmatmul.mubr.bf16.gmra.mrb[0].mxu0 %v863
        %v984 = vpop.f32.mrb[0].mxu0
        %v985 = vadd.f32 %v811, %v984
        %v986 = vpop.f32.mrb[0].mxu0
        %v987 = vpop.f32.mrb[0].mxu0
        %v988 = vadd.f32 %v811, %v987
        %v989 = vpop.f32.mrb[0].mxu0
        %990 = vmatprep.mubr.bf16.mxu0 0
        %991 = vmatmul.mubr.bf16.gmra.mrb[0].mxu0 %v866
        %v992 = vpop.f32.mrb[0].mxu0
        %v993 = vadd.f32 %v811, %v992
        %v994 = vpop.f32.mrb[0].mxu0
        %v995 = vpop.f32.mrb[0].mxu0
        %v996 = vadd.f32 %v811, %v995
        %v997 = vpop.f32.mrb[0].mxu0
        %998 = vmatprep.mubr.bf16.mxu0 0
        %999 = vmatmul.mubr.bf16.gmra.mrb[0].mxu0 %v869
        %v1000 = vpop.f32.mrb[0].mxu0
        %v1001 = vadd.f32 %v811, %v1000
        %v1002 = vpop.f32.mrb[0].mxu0
        %v1003 = vpop.f32.mrb[0].mxu0
        %v1004 = vadd.f32 %v811, %v1003
        %v1005 = vpop.f32.mrb[0].mxu0
        %1006 = vmatprep.mubr.bf16.mxu0 0
        %1007 = vmatmul.mubr.bf16.gmra.mrb[0].mxu0 %v872
        %v1008 = vpop.f32.mrb[0].mxu0
        %v1009 = vadd.f32 %v811, %v1008
        %v1010 = vpop.f32.mrb[0].mxu0
        %v1011 = vpop.f32.mrb[0].mxu0
        %v1012 = vadd.f32 %v811, %v1011
        %v1013 = vpop.f32.mrb[0].mxu0
        %1014 = vmatprep.mubr.bf16.mxu0 0
        %1015 = vmatmul.mubr.bf16.gmra.mrb[0].mxu0 %v875
        %v1016 = vpop.f32.mrb[0].mxu0
        %v1017 = vadd.f32 %v811, %v1016
        %v1018 = vpop.f32.mrb[0].mxu0
        %v1019 = vpop.f32.mrb[0].mxu0
        %v1020 = vadd.f32 %v811, %v1019
        %v1021 = vpop.f32.mrb[0].mxu0
        %1022 = vmatprep.mubr.bf16.mxu0 0
        %1023 = vmatmul.mubr.bf16.gmra.mrb[0].mxu0 %v878
        %v1024 = vpop.f32.mrb[0].mxu0
        %v1025 = vadd.f32 %v811, %v1024
        %v1026 = vpop.f32.mrb[0].mxu0
        %v1027 = vpop.f32.mrb[0].mxu0
        %v1028 = vadd.f32 %v811, %v1027
        %v1029 = vpop.f32.mrb[0].mxu0
        %1030 = vmatprep.mubr.bf16.mxu0 0
        %1031 = vmatmul.mubr.bf16.gmra.mrb[0].mxu0 %v881
        %v1032 = vpop.f32.mrb[0].mxu0
        %v1033 = vadd.f32 %v811, %v1032
        %v1034 = vpop.f32.mrb[0].mxu0
        %v1035 = vpop.f32.mrb[0].mxu0
        %v1036 = vadd.f32 %v811, %v1035
        %v1037 = vpop.f32.mrb[0].mxu0
        %1038 = vmatprep.mubr.bf16.mxu0 0
        %1039 = vmatmul.mubr.bf16.gmra.mrb[0].mxu0 %v884
        %v1040 = vpop.f32.mrb[0].mxu0
        %v1041 = vadd.f32 %v811, %v1040
        %v1042 = vpop.f32.mrb[0].mxu0
        %v1043 = vpop.f32.mrb[0].mxu0
        %v1044 = vadd.f32 %v811, %v1043
        %v1045 = vpop.f32.mrb[0].mxu0
        %1046 = vdwg.mxu0
        %1047 = vst [vmem:[%s316] sm:$0xff] %v921
        %1048 = vst [vmem:[%s316 + $0x8] sm:$0xff] %v924
        %1049 = vst [vmem:[%s316 + $0x10] sm:$0xff] %v929
        %1050 = vst [vmem:[%s316 + $0x18] sm:$0xff] %v932
        %1051 = vst [vmem:[%s316 + $0x20] sm:$0xff] %v937
        %1052 = vst [vmem:[%s316 + $0x28] sm:$0xff] %v940
        %1053 = vst [vmem:[%s316 + $0x30] sm:$0xff] %v945
        %1054 = vst [vmem:[%s316 + $0x38] sm:$0xff] %v948
        %1055 = vst [vmem:[%s316 + $0x40] sm:$0xff] %v953
        %1056 = vst [vmem:[%s316 + $0x48] sm:$0xff] %v956
        %1057 = vst [vmem:[%s316 + $0x50] sm:$0xff] %v961
        %1058 = vst [vmem:[%s316 + $0x58] sm:$0xff] %v964
        %1059 = vst [vmem:[%s316 + $0x60] sm:$0xff] %v969
        %1060 = vst [vmem:[%s316 + $0x68] sm:$0xff] %v972
        %1061 = vst [vmem:[%s316 + $0x70] sm:$0xff] %v977
        %1062 = vst [vmem:[%s316 + $0x78] sm:$0xff] %v980
        %1063 = vst [vmem:[%s316 + $0x80] sm:$0xff] %v985
        %1064 = vst [vmem:[%s316 + $0x88] sm:$0xff] %v988
        %1065 = vst [vmem:[%s316 + $0x90] sm:$0xff] %v993
        %1066 = vst [vmem:[%s316 + $0x98] sm:$0xff] %v996
        %1067 = vst [vmem:[%s316 + $0xa0] sm:$0xff] %v1001
        %1068 = vst [vmem:[%s316 + $0xa8] sm:$0xff] %v1004
        %1069 = vst [vmem:[%s316 + $0xb0] sm:$0xff] %v1009
        %1070 = vst [vmem:[%s316 + $0xb8] sm:$0xff] %v1012
        %1071 = vst [vmem:[%s316 + $0xc0] sm:$0xff] %v1017
        %1072 = vst [vmem:[%s316 + $0xc8] sm:$0xff] %v1020
        %1073 = vst [vmem:[%s316 + $0xd0] sm:$0xff] %v1025
        %1074 = vst [vmem:[%s316 + $0xd8] sm:$0xff] %v1028
        %1075 = vst [vmem:[%s316 + $0xe0] sm:$0xff] %v1033
        %1076 = vst [vmem:[%s316 + $0xe8] sm:$0xff] %v1036
        %1077 = vst [vmem:[%s316 + $0xf0] sm:$0xff] %v1041
        %1078 = vst [vmem:[%s316 + $0xf8] sm:$0xff] %v1044
        %s1079 = sand.u32 %s158, 1
        %s1080 = scalar_lea.sflag [#allocation4], %s1079
        %s1081 = sand.u32 %s158, 1
        %s1082 = smul.addr %s1081, 256
        %s1083 = scalar_lea.vmem [#allocation11], %s1082
        // Predicated region
        $region61: #{intern_image_layer_forward.4} parent=39 // pred_check
          %p1084 = pneg %p168
        $region62: #{intern_image_layer_forward.4} parent=39 // pred_check_branch
          %1086 = sbr.rel (%p1084) target = $region64
        $region63: #{intern_image_layer_forward.4} parent=39 // pred_region
          %s1087 = sadd.s32 %s28, %s29
          %s1088 = smul.u32 32, %s1087
          %s1090 = ssub.s32 4096, 4096
          %1091 = vsyncadd %s1080, %s1090
          %s1092 = smul.addr %s1088, 128
          %s1093 = scalar_lea.hbm %s5, %s1092
          %s1094 = sshll.u32 %s1083, 4
          %s1095 = int_to_ptr.vmem [resolvable:$true] %s1094
          %1100 = dma.vmem_to_hbm [thread:$0]  %s1095, 4096, %s1093, %s1080, 128, 128, 8
        $region64: #{intern_image_layer_forward.4} parent=39 // pred_fallthru
          _
      $region40: #{intern_image_layer_forward.4} parent=5 // pred_fallthru
        _
      %p1101 = scmp.le.s32.totalorder 2, %s19
      // Predicated region
      $region65: #{intern_image_layer_forward.4} parent=5 // pred_check
        %p1102 = pneg %p1101
      $region66: #{intern_image_layer_forward.4} parent=5 // pred_check_branch
        %1104 = sbr.rel (%p1102) target = $region68
      $region67: #{intern_image_layer_forward.4} parent=5 // pred_region
        %s1105 = ssub.s32 %s19, 2
        // Predicated region
        $region69: #{intern_image_layer_forward.4} parent=67 // pred_check
          %p1106 = pneg %p174
        $region70: #{intern_image_layer_forward.4} parent=67 // pred_check_branch
          %1108 = sbr.rel (%p1106) target = $region72
        $region71: #{intern_image_layer_forward.4} parent=67 // pred_region
          %s1109 = sand.u32 %s159, 1
          %s1110 = scalar_lea.sflag [#allocation4], %s1109
          %s1111 = sand.u32 %s159, 1
          %s1112 = smul.addr %s1111, 256
          %s1113 = scalar_lea.vmem [#allocation11], %s1112
          %1114 = dma.done %s1110, 4096
        $region72: #{intern_image_layer_forward.4} parent=67 // pred_fallthru
          _
      $region68: #{intern_image_layer_forward.4} parent=5 // pred_fallthru
        _
    $region6: #{intern_image_layer_forward.4} parent=1 // loop_footer
      %s23 = sadd.s32 1, %s19
    $region7: #{intern_image_layer_forward.4} parent=1 // loop_footer_branch
      %18 = sbr.rel target = $region3
    $region8: #{intern_image_layer_forward.4} parent=1 // loop_exit
      _
    %1115 = vsyncpa [#allocation3], 1
    %s1116 = scalar_lea.sflag [#allocation3], 1
    %1117 = vsyncpa %s1116, 1
    %1118 = vsyncpa [#allocation6], 1
    %1119 = vsyncpa [#allocation9], 1
    %1120 = vsyncpa [#allocation4], 1
    %s1121 = scalar_lea.sflag [#allocation4], 1
    %1122 = vsyncpa %s1121, 1

// kernel: intern_image_layer_forward.5
$region0: #{intern_image_layer_forward.5}
  #allocation0 [shape = 'u32[]', space=smem, size = 0x4, offset = 0x4, fixed_abs, tag = 'smem constant byte address 0x4 - core index']
  #allocation1 [shape = 'u32[144,128]{1,0:T(1,128)}', space=vmem, size = 0x12000, scoped, tag = 'internal scratch']
  %s0 = inlined_call_operand.hbm [shape: f32[512,64], index: 0, kind: input, shape index: {}]
  %s1 = inlined_call_operand.hbm [shape: bf16[64,64], index: 1, kind: input, shape index: {}]
  %s2 = inlined_call_operand.hbm [shape: f32[64,1], index: 2, kind: input, shape index: {}]
  %s3 = inlined_call_operand.hbm [shape: f32[2,64,256], index: 3, kind: input, shape index: {}]
  %s4 = inlined_call_operand.hbm [shape: f32[64,1], index: 4, kind: input, shape index: {}]
  %s5 = inlined_call_operand.hbm [shape: f32[64,1], index: 5, kind: input, shape index: {}]
  %s6 = inlined_call_operand.hbm [shape: bf16[256,64], index: 6, kind: input, shape index: {}]
  %s7 = inlined_call_operand.hbm [shape: f32[256,1], index: 7, kind: input, shape index: {}]
  %s8 = inlined_call_operand.hbm [shape: bf16[64,256], index: 8, kind: input, shape index: {}]
  %s9 = inlined_call_operand.hbm [shape: f32[64,1], index: 9, kind: input, shape index: {}]
  %s10 = inlined_call_operand.hbm [shape: f32[2,64,256], index: 10, kind: output, shape index: {}]
  %s11 = sld [smem:[#allocation0]]
  $region113: #{intern_image_layer_forward.5} parent=0
    _
  %s13 = ssub.s32 1, %s11
  %s14 = scalar_select 0, %s13, %s11
  $region1: #{intern_image_layer_forward.5} parent=0
    #allocation2 [shape = 'u8[262144]{0}', space=vmem, size = 0x40000, scoped, tag = 'input window, operand 0']
    #allocation3 [shape = 's32[2]{0}', space=sflag, size = 0x8, scoped, tag = 'scoped memory for intern_image_layer_forward.5']
    #allocation4 [shape = 's32[2]{0}', space=sflag, size = 0x8, scoped, tag = 'scoped memory for intern_image_layer_forward.5']
    #allocation5 [shape = 'u8[16384]{0}', space=vmem, size = 0x4000, scoped, tag = 'input window, operand 1, single buffered']
    #allocation6 [shape = 's32[1]{0}', space=sflag, size = 0x4, scoped, tag = 'scoped memory for intern_image_layer_forward.5']
    #allocation7 [shape = 'u8[32768]{0}', space=vmem, size = 0x8000, scoped, tag = 'input window, operand 2, single buffered']
    #allocation8 [shape = 'u8[131072]{0}', space=vmem, size = 0x20000, scoped, tag = 'input window, operand 3']
    #allocation9 [shape = 's32[2]{0}', space=sflag, size = 0x8, scoped, tag = 'scoped memory for intern_image_layer_forward.5']
    #allocation10 [shape = 'u8[32768]{0}', space=vmem, size = 0x8000, scoped, tag = 'input window, operand 4, single buffered']
    #allocation11 [shape = 'u8[32768]{0}', space=vmem, size = 0x8000, scoped, tag = 'input window, operand 5, single buffered']
    #allocation12 [shape = 's32[1]{0}', space=sflag, size = 0x4, scoped, tag = 'scoped memory for intern_image_layer_forward.5']
    #allocation13 [shape = 'u8[65536]{0}', space=vmem, size = 0x10000, scoped, tag = 'input window, operand 6, single buffered']
    #allocation14 [shape = 'u8[131072]{0}', space=vmem, size = 0x20000, scoped, tag = 'input window, operand 7, single buffered']
    #allocation15 [shape = 's32[1]{0}', space=sflag, size = 0x4, scoped, tag = 'scoped memory for intern_image_layer_forward.5']
    #allocation16 [shape = 'u8[32768]{0}', space=vmem, size = 0x8000, scoped, tag = 'input window, operand 8, single buffered']
    #allocation17 [shape = 'u8[32768]{0}', space=vmem, size = 0x8000, scoped, tag = 'input window, operand 9, single buffered']
    #allocation18 [shape = 's32[1]{0}', space=sflag, size = 0x4, scoped, tag = 'scoped memory for intern_image_layer_forward.5']
    #allocation19 [shape = 'u8[131072]{0}', space=vmem, size = 0x20000, scoped, tag = 'output window, operand 0']
    %15 = vsyncpa [#allocation3], 0
    %s16 = scalar_lea.sflag [#allocation3], 1
    %17 = vsyncpa %s16, 0
    %18 = vsyncpa [#allocation6], 0
    %19 = vsyncpa [#allocation9], 0
    %s20 = scalar_lea.sflag [#allocation9], 1
    %21 = vsyncpa %s20, 0
    %22 = vsyncpa [#allocation12], 0
    %23 = vsyncpa [#allocation15], 0
    %24 = vsyncpa [#allocation18], 0
    %25 = vsyncpa [#allocation4], 0
    %s26 = scalar_lea.sflag [#allocation4], 1
    %27 = vsyncpa %s26, 0
    loop: start=0, step=1, limit=4
    $region2: #{intern_image_layer_forward.5} parent=1 // loop_pre_header
      _
    $region3: #{intern_image_layer_forward.5} parent=1 // loop_header
      %s29 = sphi 0, %s33
      %p30 = scmp.ge.s32.totalorder %s29, 4
      %s36 = sphi 0, %s48
      %s37 = sphi 0, %s44
      %s38 = sphi 0, %s36
      %s39 = sphi 0, %s37
      %s40 = sphi 0, %s38
      %s41 = sphi 0, %s39
      %s53 = sphi 0, %s55
      %s56 = sphi 0, %s53
      %s57 = sphi 0, %s56
      %s73 = sphi 0, %s57
      %s77 = sphi 0, %s77
      %s79 = sphi 0, %s77
      %s80 = sphi 0, %s79
      %s94 = sphi 0, %s80
      %s98 = sphi 0, %s98
      %s100 = sphi 0, %s98
      %s101 = sphi 0, %s100
      %s115 = sphi 0, %s101
      %s123 = sphi 0, %s125
      %s126 = sphi 0, %s123
      %s127 = sphi 0, %s126
      %s143 = sphi 0, %s127
      %s147 = sphi 0, %s147
      %s149 = sphi 0, %s147
      %s150 = sphi 0, %s149
      %s164 = sphi 0, %s150
      %s168 = sphi 0, %s168
      %s170 = sphi 0, %s168
      %s171 = sphi 0, %s170
      %s185 = sphi 0, %s171
      %s189 = sphi 0, %s189
      %s191 = sphi 0, %s189
      %s192 = sphi 0, %s191
      %s206 = sphi 0, %s192
      %s210 = sphi 0, %s210
      %s212 = sphi 0, %s210
      %s213 = sphi 0, %s212
      %s227 = sphi 0, %s213
      %s231 = sphi 0, %s231
      %s233 = sphi 0, %s231
      %s234 = sphi 0, %s233
      %s248 = sphi 0, %s234
      %s252 = sphi 0, %s252
      %s254 = sphi 0, %s252
      %s255 = sphi 0, %s254
      %s269 = sphi 0, %s255
      %s277 = sphi 0, %s279
      %s280 = sphi 0, %s277
      %s281 = sphi 0, %s280
      %s297 = sphi 0, %s281
    $region4: #{intern_image_layer_forward.5} parent=1 // loop_header_branch
      %32 = sbr.rel (%p30) target = $region8
    $region5: #{intern_image_layer_forward.5} parent=1 // loop_body
      %s34 = ssub.s32 %s29, 1
      %s35 = ssub.s32 %s29, 2
      %s42 = sadd.s32 1, %s37
      %p43 = scmp.ge.s32.totalorder %s42, 1
      %s44 = scalar_select %p43, 0, %s42
      %s45 = sadd.s32 1, %s36
      %s46 = scalar_select %p43, %s45, %s36
      %p47 = scmp.ge.s32.totalorder %s46, 2
      %s48 = scalar_select %p47, 0, %s46
      %s49 = sadd.s32 %s36, %s37
      %s50 = sadd.s32 %s48, %s44
      %s51 = ssub.s32 %s49, %s50
      %p52 = scmp.eq.s32.totalorder %s51, 0
      %s54 = sadd.s32 %s53, 1
      %s55 = scalar_select %p52, %s53, %s54
      %p58 = pneg %p52
      %p59 = scmp.eq.s32.totalorder %s29, 1
      %p60 = por %p58, %p59
      %p61 = scmp.ne.s32.totalorder %s53, %s56
      %p62 = scmp.eq.s32.totalorder %s29, 0
      %p63 = por %p61, %p62
      %p64 = scmp.ne.s32.totalorder %s53, %s56
      %p65 = scmp.eq.s32.totalorder %s34, 1
      %p66 = por %p64, %p65
      %p67 = scmp.ne.s32.totalorder %s56, %s57
      %p68 = scmp.eq.s32.totalorder %s34, 0
      %p69 = por %p67, %p68
      %p70 = scmp.ne.s32.totalorder %s56, %s57
      %p71 = scmp.eq.s32.totalorder %s35, 1
      %p72 = por %p70, %p71
      %p74 = scmp.ne.s32.totalorder %s57, %s73
      %p75 = scmp.eq.s32.totalorder %s35, 0
      %p76 = por %p74, %p75
      %s78 = sadd.s32 %s77, 1
      %p81 = scmp.eq.s32.totalorder %s29, 1
      %p82 = scmp.ne.s32.totalorder %s77, %s79
      %p83 = scmp.eq.s32.totalorder %s29, 0
      %p84 = por %p82, %p83
      %p85 = scmp.ne.s32.totalorder %s77, %s79
      %p86 = scmp.eq.s32.totalorder %s34, 1
      %p87 = por %p85, %p86
      %p88 = scmp.ne.s32.totalorder %s79, %s80
      %p89 = scmp.eq.s32.totalorder %s34, 0
      %p90 = por %p88, %p89
      %p91 = scmp.ne.s32.totalorder %s79, %s80
      %p92 = scmp.eq.s32.totalorder %s35, 1
      %p93 = por %p91, %p92
      %p95 = scmp.ne.s32.totalorder %s80, %s94
      %p96 = scmp.eq.s32.totalorder %s35, 0
      %p97 = por %p95, %p96
      %s99 = sadd.s32 %s98, 1
      %p102 = scmp.eq.s32.totalorder %s29, 1
      %p103 = scmp.ne.s32.totalorder %s98, %s100
      %p104 = scmp.eq.s32.totalorder %s29, 0
      %p105 = por %p103, %p104
      %p106 = scmp.ne.s32.totalorder %s98, %s100
      %p107 = scmp.eq.s32.totalorder %s34, 1
      %p108 = por %p106, %p107
      %p109 = scmp.ne.s32.totalorder %s100, %s101
      %p110 = scmp.eq.s32.totalorder %s34, 0
      %p111 = por %p109, %p110
      %p112 = scmp.ne.s32.totalorder %s100, %s101
      %p113 = scmp.eq.s32.totalorder %s35, 1
      %p114 = por %p112, %p113
      %p116 = scmp.ne.s32.totalorder %s101, %s115
      %p117 = scmp.eq.s32.totalorder %s35, 0
      %p118 = por %p116, %p117
      %s119 = ssub.s32 %s36, %s48
      %s120 = ssub.s32 %s37, %s44
      %s121 = sor.u32 %s119, %s120
      %p122 = scmp.eq.s32.totalorder %s121, 0
      %s124 = sadd.s32 %s123, 1
      %s125 = scalar_select %p122, %s123, %s124
      %p128 = pneg %p122
      %p129 = scmp.eq.s32.totalorder %s29, 1
      %p130 = por %p128, %p129
      %p131 = scmp.ne.s32.totalorder %s123, %s126
      %p132 = scmp.eq.s32.totalorder %s29, 0
      %p133 = por %p131, %p132
      %p134 = scmp.ne.s32.totalorder %s123, %s126
      %p135 = scmp.eq.s32.totalorder %s34, 1
      %p136 = por %p134, %p135
      %p137 = scmp.ne.s32.totalorder %s126, %s127
      %p138 = scmp.eq.s32.totalorder %s34, 0
      %p139 = por %p137, %p138
      %p140 = scmp.ne.s32.totalorder %s126, %s127
      %p141 = scmp.eq.s32.totalorder %s35, 1
      %p142 = por %p140, %p141
      %p144 = scmp.ne.s32.totalorder %s127, %s143
      %p145 = scmp.eq.s32.totalorder %s35, 0
      %p146 = por %p144, %p145
      %s148 = sadd.s32 %s147, 1
      %p151 = scmp.eq.s32.totalorder %s29, 1
      %p152 = scmp.ne.s32.totalorder %s147, %s149
      %p153 = scmp.eq.s32.totalorder %s29, 0
      %p154 = por %p152, %p153
      %p155 = scmp.ne.s32.totalorder %s147, %s149
      %p156 = scmp.eq.s32.totalorder %s34, 1
      %p157 = por %p155, %p156
      %p158 = scmp.ne.s32.totalorder %s149, %s150
      %p159 = scmp.eq.s32.totalorder %s34, 0
      %p160 = por %p158, %p159
      %p161 = scmp.ne.s32.totalorder %s149, %s150
      %p162 = scmp.eq.s32.totalorder %s35, 1
      %p163 = por %p161, %p162
      %p165 = scmp.ne.s32.totalorder %s150, %s164
      %p166 = scmp.eq.s32.totalorder %s35, 0
      %p167 = por %p165, %p166
      %s169 = sadd.s32 %s168, 1
      %p172 = scmp.eq.s32.totalorder %s29, 1
      %p173 = scmp.ne.s32.totalorder %s168, %s170
      %p174 = scmp.eq.s32.totalorder %s29, 0
      %p175 = por %p173, %p174
      %p176 = scmp.ne.s32.totalorder %s168, %s170
      %p177 = scmp.eq.s32.totalorder %s34, 1
      %p178 = por %p176, %p177
      %p179 = scmp.ne.s32.totalorder %s170, %s171
      %p180 = scmp.eq.s32.totalorder %s34, 0
      %p181 = por %p179, %p180
      %p182 = scmp.ne.s32.totalorder %s170, %s171
      %p183 = scmp.eq.s32.totalorder %s35, 1
      %p184 = por %p182, %p183
      %p186 = scmp.ne.s32.totalorder %s171, %s185
      %p187 = scmp.eq.s32.totalorder %s35, 0
      %p188 = por %p186, %p187
      %s190 = sadd.s32 %s189, 1
      %p193 = scmp.eq.s32.totalorder %s29, 1
      %p194 = scmp.ne.s32.totalorder %s189, %s191
      %p195 = scmp.eq.s32.totalorder %s29, 0
      %p196 = por %p194, %p195
      %p197 = scmp.ne.s32.totalorder %s189, %s191
      %p198 = scmp.eq.s32.totalorder %s34, 1
      %p199 = por %p197, %p198
      %p200 = scmp.ne.s32.totalorder %s191, %s192
      %p201 = scmp.eq.s32.totalorder %s34, 0
      %p202 = por %p200, %p201
      %p203 = scmp.ne.s32.totalorder %s191, %s192
      %p204 = scmp.eq.s32.totalorder %s35, 1
      %p205 = por %p203, %p204
      %p207 = scmp.ne.s32.totalorder %s192, %s206
      %p208 = scmp.eq.s32.totalorder %s35, 0
      %p209 = por %p207, %p208
      %s211 = sadd.s32 %s210, 1
      %p214 = scmp.eq.s32.totalorder %s29, 1
      %p215 = scmp.ne.s32.totalorder %s210, %s212
      %p216 = scmp.eq.s32.totalorder %s29, 0
      %p217 = por %p215, %p216
      %p218 = scmp.ne.s32.totalorder %s210, %s212
      %p219 = scmp.eq.s32.totalorder %s34, 1
      %p220 = por %p218, %p219
      %p221 = scmp.ne.s32.totalorder %s212, %s213
      %p222 = scmp.eq.s32.totalorder %s34, 0
      %p223 = por %p221, %p222
      %p224 = scmp.ne.s32.totalorder %s212, %s213
      %p225 = scmp.eq.s32.totalorder %s35, 1
      %p226 = por %p224, %p225
      %p228 = scmp.ne.s32.totalorder %s213, %s227
      %p229 = scmp.eq.s32.totalorder %s35, 0
      %p230 = por %p228, %p229
      %s232 = sadd.s32 %s231, 1
      %p235 = scmp.eq.s32.totalorder %s29, 1
      %p236 = scmp.ne.s32.totalorder %s231, %s233
      %p237 = scmp.eq.s32.totalorder %s29, 0
      %p238 = por %p236, %p237
      %p239 = scmp.ne.s32.totalorder %s231, %s233
      %p240 = scmp.eq.s32.totalorder %s34, 1
      %p241 = por %p239, %p240
      %p242 = scmp.ne.s32.totalorder %s233, %s234
      %p243 = scmp.eq.s32.totalorder %s34, 0
      %p244 = por %p242, %p243
      %p245 = scmp.ne.s32.totalorder %s233, %s234
      %p246 = scmp.eq.s32.totalorder %s35, 1
      %p247 = por %p245, %p246
      %p249 = scmp.ne.s32.totalorder %s234, %s248
      %p250 = scmp.eq.s32.totalorder %s35, 0
      %p251 = por %p249, %p250
      %s253 = sadd.s32 %s252, 1
      %p256 = scmp.eq.s32.totalorder %s29, 1
      %p257 = scmp.ne.s32.totalorder %s252, %s254
      %p258 = scmp.eq.s32.totalorder %s29, 0
      %p259 = por %p257, %p258
      %p260 = scmp.ne.s32.totalorder %s252, %s254
      %p261 = scmp.eq.s32.totalorder %s34, 1
      %p262 = por %p260, %p261
      %p263 = scmp.ne.s32.totalorder %s254, %s255
      %p264 = scmp.eq.s32.totalorder %s34, 0
      %p265 = por %p263, %p264
      %p266 = scmp.ne.s32.totalorder %s254, %s255
      %p267 = scmp.eq.s32.totalorder %s35, 1
      %p268 = por %p266, %p267
      %p270 = scmp.ne.s32.totalorder %s255, %s269
      %p271 = scmp.eq.s32.totalorder %s35, 0
      %p272 = por %p270, %p271
      %s273 = ssub.s32 %s36, %s48
      %s274 = ssub.s32 %s37, %s44
      %s275 = sor.u32 %s273, %s274
      %p276 = scmp.eq.s32.totalorder %s275, 0
      %s278 = sadd.s32 %s277, 1
      %s279 = scalar_select %p276, %s277, %s278
      %p282 = pneg %p276
      %p283 = scmp.eq.s32.totalorder %s29, 1
      %p284 = por %p282, %p283
      %p285 = scmp.ne.s32.totalorder %s277, %s280
      %p286 = scmp.eq.s32.totalorder %s29, 0
      %p287 = por %p285, %p286
      %p288 = scmp.ne.s32.totalorder %s277, %s280
      %p289 = scmp.eq.s32.totalorder %s34, 1
      %p290 = por %p288, %p289
      %p291 = scmp.ne.s32.totalorder %s280, %s281
      %p292 = scmp.eq.s32.totalorder %s34, 0
      %p293 = por %p291, %p292
      %p294 = scmp.ne.s32.totalorder %s280, %s281
      %p295 = scmp.eq.s32.totalorder %s35, 1
      %p296 = por %p294, %p295
      %p298 = scmp.ne.s32.totalorder %s281, %s297
      %p299 = scmp.eq.s32.totalorder %s35, 0
      %p300 = por %p298, %p299
      %p301 = scmp.le.s32.totalorder 1, %s29
      %p302 = scmp.lt.s32.totalorder %s29, 3
      %p303 = pnand %p301, %p302
      %p304 = pneg %p303
      // Predicated region
      $region9: #{intern_image_layer_forward.5} parent=5 // pred_check
        _
      $region10: #{intern_image_layer_forward.5} parent=5 // pred_check_branch
        %306 = sbr.rel (%p303) target = $region12
      $region11: #{intern_image_layer_forward.5} parent=5 // pred_region
        %s307 = ssub.s32 %s29, 1
        // Predicated region
        $region13: #{intern_image_layer_forward.5} parent=11 // pred_check
          %p308 = pneg %p90
        $region14: #{intern_image_layer_forward.5} parent=11 // pred_check_branch
          %310 = sbr.rel (%p308) target = $region16
        $region15: #{intern_image_layer_forward.5} parent=11 // pred_region
          %s312 = ssub.s32 512, 512
          %313 = vsyncadd [#allocation6], %s312
          %s314 = sshll.u32 [#allocation5], 4
          %s315 = int_to_ptr.vmem [resolvable:$true] %s314
          %320 = dma.hbm_to_vmem [thread:$0]  %s1, 512, %s315, [#allocation6], 64, 64, 4
        $region16: #{intern_image_layer_forward.5} parent=11 // pred_fallthru
          _
        // Predicated region
        $region17: #{intern_image_layer_forward.5} parent=11 // pred_check
          %p321 = pneg %p111
        $region18: #{intern_image_layer_forward.5} parent=11 // pred_check_branch
          %323 = sbr.rel (%p321) target = $region20
        $region19: #{intern_image_layer_forward.5} parent=11 // pred_region
          %s325 = ssub.s32 1024, 1024
          %326 = vsyncadd [#allocation6], %s325
          %s327 = sshll.u32 [#allocation7], 4
          %s328 = int_to_ptr.vmem [resolvable:$true] %s327
          %333 = dma.hbm_to_vmem [thread:$0]  %s2, 1024, %s328, [#allocation6], 128, 128, 8
        $region20: #{intern_image_layer_forward.5} parent=11 // pred_fallthru
          _
        // Predicated region
        $region21: #{intern_image_layer_forward.5} parent=11 // pred_check
          %p334 = pneg %p160
        $region22: #{intern_image_layer_forward.5} parent=11 // pred_check_branch
          %336 = sbr.rel (%p334) target = $region24
        $region23: #{intern_image_layer_forward.5} parent=11 // pred_region
          %s338 = ssub.s32 1024, 1024
          %339 = vsyncadd [#allocation9], %s338
          %s340 = sshll.u32 [#allocation10], 4
          %s341 = int_to_ptr.vmem [resolvable:$true] %s340
          %346 = dma.hbm_to_vmem [thread:$0]  %s4, 1024, %s341, [#allocation9], 128, 128, 8
        $region24: #{intern_image_layer_forward.5} parent=11 // pred_fallthru
          _
        // Predicated region
        $region25: #{intern_image_layer_forward.5} parent=11 // pred_check
          %p347 = pneg %p181
        $region26: #{intern_image_layer_forward.5} parent=11 // pred_check_branch
          %349 = sbr.rel (%p347) target = $region28
        $region27: #{intern_image_layer_forward.5} parent=11 // pred_region
          %s351 = ssub.s32 1024, 1024
          %352 = vsyncadd [#allocation12], %s351
          %s353 = sshll.u32 [#allocation11], 4
          %s354 = int_to_ptr.vmem [resolvable:$true] %s353
          %359 = dma.hbm_to_vmem [thread:$0]  %s5, 1024, %s354, [#allocation12], 128, 128, 8
        $region28: #{intern_image_layer_forward.5} parent=11 // pred_fallthru
          _
        // Predicated region
        $region29: #{intern_image_layer_forward.5} parent=11 // pred_check
          %p360 = pneg %p202
        $region30: #{intern_image_layer_forward.5} parent=11 // pred_check_branch
          %362 = sbr.rel (%p360) target = $region32
        $region31: #{intern_image_layer_forward.5} parent=11 // pred_region
          %s364 = ssub.s32 2048, 2048
          %365 = vsyncadd [#allocation12], %s364
          %s366 = sshll.u32 [#allocation13], 4
          %s367 = int_to_ptr.vmem [resolvable:$true] %s366
          %372 = dma.hbm_to_vmem [thread:$0]  %s6, 2048, %s367, [#allocation12], 64, 64, 4
        $region32: #{intern_image_layer_forward.5} parent=11 // pred_fallthru
          _
        // Predicated region
        $region33: #{intern_image_layer_forward.5} parent=11 // pred_check
          %p373 = pneg %p223
        $region34: #{intern_image_layer_forward.5} parent=11 // pred_check_branch
          %375 = sbr.rel (%p373) target = $region36
        $region35: #{intern_image_layer_forward.5} parent=11 // pred_region
          %s377 = ssub.s32 4096, 4096
          %378 = vsyncadd [#allocation15], %s377
          %s379 = sshll.u32 [#allocation14], 4
          %s380 = int_to_ptr.vmem [resolvable:$true] %s379
          %385 = dma.hbm_to_vmem [thread:$0]  %s7, 4096, %s380, [#allocation15], 128, 128, 8
        $region36: #{intern_image_layer_forward.5} parent=11 // pred_fallthru
          _
        // Predicated region
        $region37: #{intern_image_layer_forward.5} parent=11 // pred_check
          %p386 = pneg %p244
        $region38: #{intern_image_layer_forward.5} parent=11 // pred_check_branch
          %388 = sbr.rel (%p386) target = $region40
        $region39: #{intern_image_layer_forward.5} parent=11 // pred_region
          %s390 = ssub.s32 1024, 1024
          %391 = vsyncadd [#allocation15], %s390
          %s392 = sshll.u32 [#allocation16], 4
          %s393 = int_to_ptr.vmem [resolvable:$true] %s392
          %398 = dma.hbm_to_vmem [thread:$0]  %s8, 1024, %s393, [#allocation15], 128, 128, 8
        $region40: #{intern_image_layer_forward.5} parent=11 // pred_fallthru
          _
        // Predicated region
        $region41: #{intern_image_layer_forward.5} parent=11 // pred_check
          %p399 = pneg %p265
        $region42: #{intern_image_layer_forward.5} parent=11 // pred_check_branch
          %401 = sbr.rel (%p399) target = $region44
        $region43: #{intern_image_layer_forward.5} parent=11 // pred_region
          %s403 = ssub.s32 1024, 1024
          %404 = vsyncadd [#allocation18], %s403
          %s405 = sshll.u32 [#allocation17], 4
          %s406 = int_to_ptr.vmem [resolvable:$true] %s405
          %411 = dma.hbm_to_vmem [thread:$0]  %s9, 1024, %s406, [#allocation18], 128, 128, 8
        $region44: #{intern_image_layer_forward.5} parent=11 // pred_fallthru
          _
      $region12: #{intern_image_layer_forward.5} parent=5 // pred_fallthru
        _
      %p412 = scmp.lt.s32.totalorder %s29, 2
      // Predicated region
      $region45: #{intern_image_layer_forward.5} parent=5 // pred_check
        %p413 = pneg %p412
      $region46: #{intern_image_layer_forward.5} parent=5 // pred_check_branch
        %415 = sbr.rel (%p413) target = $region48
      $region47: #{intern_image_layer_forward.5} parent=5 // pred_region
        // Predicated region
        $region49: #{intern_image_layer_forward.5} parent=47 // pred_check
          %p416 = pneg %p63
        $region50: #{intern_image_layer_forward.5} parent=47 // pred_check_branch
          %418 = sbr.rel (%p416) target = $region52
        $region51: #{intern_image_layer_forward.5} parent=47 // pred_region
          %s419 = sand.u32 %s53, 1
          %s420 = scalar_lea.sflag [#allocation3], %s419
          %s421 = sand.u32 %s53, 1
          %s422 = smul.addr %s421, 256
          %s423 = scalar_lea.vmem [#allocation2], %s422
          %s424 = sadd.s32 %s36, %s37
          %s425 = smul.u32 32, %s424
          %s427 = ssub.s32 4096, 4096
          %428 = vsyncadd %s420, %s427
          %s429 = smul.addr %s425, 128
          %s430 = scalar_lea.hbm %s0, %s429
          %s431 = sshll.u32 %s423, 4
          %s432 = int_to_ptr.vmem [resolvable:$true] %s431
          %437 = dma.hbm_to_vmem [thread:$0]  %s430, 4096, %s432, %s420, 128, 128, 8
        $region52: #{intern_image_layer_forward.5} parent=47 // pred_fallthru
          _
        // Predicated region
        $region53: #{intern_image_layer_forward.5} parent=47 // pred_check
          %p438 = pneg %p133
        $region54: #{intern_image_layer_forward.5} parent=47 // pred_check_branch
          %440 = sbr.rel (%p438) target = $region56
        $region55: #{intern_image_layer_forward.5} parent=47 // pred_region
          %s441 = sand.u32 %s29, 1
          %s442 = scalar_lea.sflag [#allocation9], %s441
          %s443 = sand.u32 %s123, 1
          %s444 = smul.addr %s443, 128
          %s445 = scalar_lea.vmem [#allocation8], %s444
          %s446 = smul.u32 2, %s37
          %s448 = ssub.s32 2048, 2048
          %449 = vsyncadd %s442, %s448
          %s450 = smul.addr %s36, 16
          %s451 = sadd.s32 %s446, %s450
          %s452 = smul.addr %s451, 128
          %s453 = scalar_lea.hbm %s3, %s452
          %s454 = sshll.u32 %s445, 4
          %s455 = int_to_ptr.vmem [resolvable:$true] %s454
          %460 = dma.hbm_to_vmem [thread:$0]  %s453, 2048, %s455, %s442, 256, 256, 16
        $region56: #{intern_image_layer_forward.5} parent=47 // pred_fallthru
          _
      $region48: #{intern_image_layer_forward.5} parent=5 // pred_fallthru
        _
      %p461 = scmp.le.s32.totalorder 1, %s29
      %p462 = scmp.lt.s32.totalorder %s29, 3
      %p463 = pnand %p461, %p462
      %p464 = pneg %p463
      // Predicated region
      $region57: #{intern_image_layer_forward.5} parent=5 // pred_check
        _
      $region58: #{intern_image_layer_forward.5} parent=5 // pred_check_branch
        %466 = sbr.rel (%p463) target = $region60
      $region59: #{intern_image_layer_forward.5} parent=5 // pred_region
        %s467 = ssub.s32 %s29, 1
        %s468 = sand.u32 %s56, 1
        %s469 = scalar_lea.sflag [#allocation3], %s468
        %s470 = sand.u32 %s56, 1
        %s471 = smul.addr %s470, 256
        %s472 = scalar_lea.vmem [#allocation2], %s471
        // Predicated region
        $region61: #{intern_image_layer_forward.5} parent=59 // pred_check
          %p473 = pneg %p69
        $region62: #{intern_image_layer_forward.5} parent=59 // pred_check_branch
          %475 = sbr.rel (%p473) target = $region64
        $region63: #{intern_image_layer_forward.5} parent=59 // pred_region
          %476 = dma.done %s469, 4096
        $region64: #{intern_image_layer_forward.5} parent=59 // pred_fallthru
          _
        // Predicated region
        $region65: #{intern_image_layer_forward.5} parent=59 // pred_check
          %p477 = pneg %p90
        $region66: #{intern_image_layer_forward.5} parent=59 // pred_check_branch
          %479 = sbr.rel (%p477) target = $region68
        $region67: #{intern_image_layer_forward.5} parent=59 // pred_region
          %480 = dma.done [#allocation6], 512
        $region68: #{intern_image_layer_forward.5} parent=59 // pred_fallthru
          _
        // Predicated region
        $region69: #{intern_image_layer_forward.5} parent=59 // pred_check
          %p481 = pneg %p111
        $region70: #{intern_image_layer_forward.5} parent=59 // pred_check_branch
          %483 = sbr.rel (%p481) target = $region72
        $region71: #{intern_image_layer_forward.5} parent=59 // pred_region
          %484 = dma.done [#allocation6], 1024
        $region72: #{intern_image_layer_forward.5} parent=59 // pred_fallthru
          _
        %s485 = sand.u32 %s34, 1
        %s486 = scalar_lea.sflag [#allocation9], %s485
        %s487 = sand.u32 %s126, 1
        %s488 = smul.addr %s487, 128
        %s489 = scalar_lea.vmem [#allocation8], %s488
        // Predicated region
        $region73: #{intern_image_layer_forward.5} parent=59 // pred_check
          %p490 = pneg %p139
        $region74: #{intern_image_layer_forward.5} parent=59 // pred_check_branch
          %492 = sbr.rel (%p490) target = $region76
        $region75: #{intern_image_layer_forward.5} parent=59 // pred_region
          %493 = dma.done %s486, 2048
        $region76: #{intern_image_layer_forward.5} parent=59 // pred_fallthru
          _
        // Predicated region
        $region77: #{intern_image_layer_forward.5} parent=59 // pred_check
          %p494 = pneg %p160
        $region78: #{intern_image_layer_forward.5} parent=59 // pred_check_branch
          %496 = sbr.rel (%p494) target = $region80
        $region79: #{intern_image_layer_forward.5} parent=59 // pred_region
          %497 = dma.done [#allocation9], 1024
        $region80: #{intern_image_layer_forward.5} parent=59 // pred_fallthru
          _
        // Predicated region
        $region81: #{intern_image_layer_forward.5} parent=59 // pred_check
          %p498 = pneg %p181
        $region82: #{intern_image_layer_forward.5} parent=59 // pred_check_branch
          %500 = sbr.rel (%p498) target = $region84
        $region83: #{intern_image_layer_forward.5} parent=59 // pred_region
          %501 = dma.done [#allocation12], 1024
        $region84: #{intern_image_layer_forward.5} parent=59 // pred_fallthru
          _
        // Predicated region
        $region85: #{intern_image_layer_forward.5} parent=59 // pred_check
          %p502 = pneg %p202
        $region86: #{intern_image_layer_forward.5} parent=59 // pred_check_branch
          %504 = sbr.rel (%p502) target = $region88
        $region87: #{intern_image_layer_forward.5} parent=59 // pred_region
          %505 = dma.done [#allocation12], 2048
        $region88: #{intern_image_layer_forward.5} parent=59 // pred_fallthru
          _
        // Predicated region
        $region89: #{intern_image_layer_forward.5} parent=59 // pred_check
          %p506 = pneg %p223
        $region90: #{intern_image_layer_forward.5} parent=59 // pred_check_branch
          %508 = sbr.rel (%p506) target = $region92
        $region91: #{intern_image_layer_forward.5} parent=59 // pred_region
          %509 = dma.done [#allocation15], 4096
        $region92: #{intern_image_layer_forward.5} parent=59 // pred_fallthru
          _
        // Predicated region
        $region93: #{intern_image_layer_forward.5} parent=59 // pred_check
          %p510 = pneg %p244
        $region94: #{intern_image_layer_forward.5} parent=59 // pred_check_branch
          %512 = sbr.rel (%p510) target = $region96
        $region95: #{intern_image_layer_forward.5} parent=59 // pred_region
          %513 = dma.done [#allocation15], 1024
        $region96: #{intern_image_layer_forward.5} parent=59 // pred_fallthru
          _
        // Predicated region
        $region97: #{intern_image_layer_forward.5} parent=59 // pred_check
          %p514 = pneg %p265
        $region98: #{intern_image_layer_forward.5} parent=59 // pred_check_branch
          %516 = sbr.rel (%p514) target = $region100
        $region99: #{intern_image_layer_forward.5} parent=59 // pred_region
          %517 = dma.done [#allocation18], 1024
        $region100: #{intern_image_layer_forward.5} parent=59 // pred_fallthru
          _
        %s518 = sand.u32 %s56, 1
        %s519 = scalar_lea.sflag [#allocation3], %s518
        %s520 = sand.u32 %s56, 1
        %s521 = smul.addr %s520, 256
        %s522 = scalar_lea.vmem [#allocation2], %s521
        %p523 = pneg %p69
        %p524 = pneg %p66
        %p525 = pneg %p90
        %p526 = pneg %p87
        %p527 = pneg %p111
        %p528 = pneg %p108
        %s529 = sand.u32 %s34, 1
        %s530 = scalar_lea.sflag [#allocation9], %s529
        %s531 = sand.u32 %s126, 1
        %s532 = smul.addr %s531, 128
        %s533 = scalar_lea.vmem [#allocation8], %s532
        %p534 = pneg %p139
        %p535 = pneg %p136
        %p536 = pneg %p160
        %p537 = pneg %p157
        %p538 = pneg %p181
        %p539 = pneg %p178
        %p540 = pneg %p202
        %p541 = pneg %p199
        %p542 = pneg %p223
        %p543 = pneg %p220
        %p544 = pneg %p244
        %p545 = pneg %p241
        %p546 = pneg %p265
        %p547 = pneg %p262
        %p548 = pneg %p293
        %p549 = pneg %p290
        %s550 = sand.u32 %s280, 1
        %s551 = scalar_lea.sflag [#allocation4], %s550
        %s552 = sand.u32 %s280, 1
        %s553 = smul.addr %s552, 128
        %s554 = scalar_lea.vmem [#allocation19], %s553
        %s555 = sadd.s32 %s38, %s39
        %s556 = smul.u32 32, %s555
        %s557 = smul.u32 2, %s39
        %s558 = smul.u32 2, %s39
        %v560 = vld [vmem:[%s472] sm:$0xff]
        %v561 = vld [vmem:[%s472 + $0x8] sm:$0xff]
        %v562 = vld [vmem:[%s472 + $0x10] sm:$0xff]
        %v563 = vld [vmem:[%s472 + $0x18] sm:$0xff]
        %v564 = vld [vmem:[%s472 + $0x20] sm:$0xff]
        %v565 = vld [vmem:[%s472 + $0x28] sm:$0xff]
        %v566 = vld [vmem:[%s472 + $0x30] sm:$0xff]
        %v567 = vld [vmem:[%s472 + $0x38] sm:$0xff]
        %v568 = vld [vmem:[%s472 + $0x40] sm:$0xff]
        %v569 = vld [vmem:[%s472 + $0x48] sm:$0xff]
        %v570 = vld [vmem:[%s472 + $0x50] sm:$0xff]
        %v571 = vld [vmem:[%s472 + $0x58] sm:$0xff]
        %v572 = vld [vmem:[%s472 + $0x60] sm:$0xff]
        %v573 = vld [vmem:[%s472 + $0x68] sm:$0xff]
        %v574 = vld [vmem:[%s472 + $0x70] sm:$0xff]
        %v575 = vld [vmem:[%s472 + $0x78] sm:$0xff]
        %v576 = vld [vmem:[%s472 + $0x80] sm:$0xff]
        %v577 = vld [vmem:[%s472 + $0x88] sm:$0xff]
        %v578 = vld [vmem:[%s472 + $0x90] sm:$0xff]
        %v579 = vld [vmem:[%s472 + $0x98] sm:$0xff]
        %v580 = vld [vmem:[%s472 + $0xa0] sm:$0xff]
        %v581 = vld [vmem:[%s472 + $0xa8] sm:$0xff]
        %v582 = vld [vmem:[%s472 + $0xb0] sm:$0xff]
        %v583 = vld [vmem:[%s472 + $0xb8] sm:$0xff]
        %v584 = vld [vmem:[%s472 + $0xc0] sm:$0xff]
        %v585 = vld [vmem:[%s472 + $0xc8] sm:$0xff]
        %v586 = vld [vmem:[%s472 + $0xd0] sm:$0xff]
        %v587 = vld [vmem:[%s472 + $0xd8] sm:$0xff]
        %v588 = vld [vmem:[%s472 + $0xe0] sm:$0xff]
        %v589 = vld [vmem:[%s472 + $0xe8] sm:$0xff]
        %v590 = vld [vmem:[%s472 + $0xf0] sm:$0xff]
        %v591 = vld [vmem:[%s472 + $0xf8] sm:$0xff]
        %v592 = vpack.c.bf16 %v561, %v560
        %v593 = vpack.c.bf16 %v563, %v562
        %v594 = vpack.c.bf16 %v565, %v564
        %v595 = vpack.c.bf16 %v567, %v566
        %v596 = vpack.c.bf16 %v569, %v568
        %v597 = vpack.c.bf16 %v571, %v570
        %v598 = vpack.c.bf16 %v573, %v572
        %v599 = vpack.c.bf16 %v575, %v574
        %v600 = vpack.c.bf16 %v577, %v576
        %v601 = vpack.c.bf16 %v579, %v578
        %v602 = vpack.c.bf16 %v581, %v580
        %v603 = vpack.c.bf16 %v583, %v582
        %v604 = vpack.c.bf16 %v585, %v584
        %v605 = vpack.c.bf16 %v587, %v586
        %v606 = vpack.c.bf16 %v589, %v588
        %v607 = vpack.c.bf16 %v591, %v590
        %v608 = vld [vmem:[#allocation5] sm:$0xf]
        %v609 = vld [vmem:[#allocation5 + $0x4] sm:$0xf]
        %v610 = vld [vmem:[#allocation5 + $0x8] sm:$0xf]
        %v611 = vld [vmem:[#allocation5 + $0xc] sm:$0xf]
        %v612 = vld [vmem:[#allocation5 + $0x10] sm:$0xf]
        %v613 = vld [vmem:[#allocation5 + $0x14] sm:$0xf]
        %v614 = vld [vmem:[#allocation5 + $0x18] sm:$0xf]
        %v615 = vld [vmem:[#allocation5 + $0x1c] sm:$0xf]
        %v624 = vunpack.c.l.b16 %v608
        %v625 = vunpack.c.l.b16 %v609
        %v626 = vunpack.c.l.b16 %v610
        %v627 = vunpack.c.l.b16 %v611
        %v628 = vunpack.c.l.b16 %v612
        %v629 = vunpack.c.l.b16 %v613
        %v630 = vunpack.c.l.b16 %v614
        %v631 = vunpack.c.l.b16 %v615
        %v632 = vpack.c.b16 %v625, %v624
        %v633 = vpack.c.b16 %v627, %v626
        %v634 = vpack.c.b16 %v629, %v628
        %v635 = vpack.c.b16 %v631, %v630
        %vm636 = vcmask 523264
        %v638 = vsel %vm636, %v632, 0
        %v641 = vsel %vm636, %v633, 0
        %v644 = vsel %vm636, %v634, 0
        %v647 = vsel %vm636, %v635, 0
        %v650 = vsel %vm636, %v592, 0
        %v653 = vsel %vm636, %v593, 0
        %v656 = vsel %vm636, %v594, 0
        %v659 = vsel %vm636, %v595, 0
        %v662 = vsel %vm636, %v596, 0
        %v665 = vsel %vm636, %v597, 0
        %v668 = vsel %vm636, %v598, 0
        %v671 = vsel %vm636, %v599, 0
        %v674 = vsel %vm636, %v600, 0
        %v677 = vsel %vm636, %v601, 0
        %v680 = vsel %vm636, %v602, 0
        %v683 = vsel %vm636, %v603, 0
        %v686 = vsel %vm636, %v604, 0
        %v689 = vsel %vm636, %v605, 0
        %v692 = vsel %vm636, %v606, 0
        %v695 = vsel %vm636, %v607, 0
        %697 = vmatprep.subr.bf16.mxu0 0
        %698 = vmatpush1.bf16.xpose.msra.mxu0 %v650
        %699 = vmatprep.subr.bf16.mxu0 0
        %700 = vmatpush1.bf16.xpose.msra.mxu0 %v653
        %701 = vmatprep.subr.bf16.mxu0 0
        %702 = vmatpush1.bf16.xpose.msra.mxu0 %v656
        %703 = vmatprep.subr.bf16.mxu0 0
        %704 = vmatpush1.bf16.xpose.msra.mxu0 %v659
        %705 = vmatprep.subr.bf16.mxu0 0
        %706 = vmatpush1.bf16.xpose.msra.mxu0 %v662
        %707 = vmatprep.subr.bf16.mxu0 0
        %708 = vmatpush1.bf16.xpose.msra.mxu0 %v665
        %709 = vmatprep.subr.bf16.mxu0 0
        %710 = vmatpush1.bf16.xpose.msra.mxu0 %v668
        %711 = vmatprep.subr.bf16.mxu0 0
        %712 = vmatpush1.bf16.xpose.msra.mxu0 %v671
        %713 = vmatprep.subr.bf16.mxu0 0
        %714 = vmatpush1.bf16.xpose.msra.mxu0 %v674
        %715 = vmatprep.subr.bf16.mxu0 0
        %716 = vmatpush1.bf16.xpose.msra.mxu0 %v677
        %717 = vmatprep.subr.bf16.mxu0 0
        %718 = vmatpush1.bf16.xpose.msra.mxu0 %v680
        %719 = vmatprep.subr.bf16.mxu0 0
        %720 = vmatpush1.bf16.xpose.msra.mxu0 %v683
        %721 = vmatprep.subr.bf16.mxu0 0
        %722 = vmatpush1.bf16.xpose.msra.mxu0 %v686
        %723 = vmatprep.subr.bf16.mxu0 0
        %724 = vmatpush1.bf16.xpose.msra.mxu0 %v689
        %725 = vmatprep.subr.bf16.mxu0 0
        %726 = vmatpush1.bf16.xpose.msra.mxu0 %v692
        %727 = vmatprep.subr.bf16.mxu0 0
        %728 = vmatpush1.bf16.xpose.msra.mxu0 %v695
        %729 = vmatprep.mubr.bf16.mxu0 0
        %730 = vmatmul.mubr.bf16.gmra.mrb[0].mxu0 %v638
        %v731 = vpop.f32.mrb[0].mxu0
        %v732 = vadd.f32 0.0, %v731
        %v733 = vpop.f32.mrb[0].mxu0
        %v734 = vadd.f32 0.0, %v733
        %v735 = vpop.f32.mrb[0].mxu0
        %v736 = vadd.f32 0.0, %v735
        %v737 = vpop.f32.mrb[0].mxu0
        %v738 = vadd.f32 0.0, %v737
        %739 = vmatprep.mubr.bf16.mxu0 0
        %740 = vmatmul.mubr.bf16.gmra.mrb[0].mxu0 %v641
        %v741 = vpop.f32.mrb[0].mxu0
        %v742 = vadd.f32 0.0, %v741
        %v743 = vpop.f32.mrb[0].mxu0
        %v744 = vadd.f32 0.0, %v743
        %v745 = vpop.f32.mrb[0].mxu0
        %v746 = vadd.f32 0.0, %v745
        %v747 = vpop.f32.mrb[0].mxu0
        %v748 = vadd.f32 0.0, %v747
        %749 = vmatprep.mubr.bf16.mxu0 0
        %750 = vmatmul.mubr.bf16.gmra.mrb[0].mxu0 %v644
        %v751 = vpop.f32.mrb[0].mxu0
        %v752 = vadd.f32 0.0, %v751
        %v753 = vpop.f32.mrb[0].mxu0
        %v754 = vadd.f32 0.0, %v753
        %v755 = vpop.f32.mrb[0].mxu0
        %v756 = vadd.f32 0.0, %v755
        %v757 = vpop.f32.mrb[0].mxu0
        %v758 = vadd.f32 0.0, %v757
        %759 = vmatprep.mubr.bf16.mxu0 0
        %760 = vmatmul.mubr.bf16.gmra.mrb[0].mxu0 %v647
        %v761 = vpop.f32.mrb[0].mxu0
        %v762 = vadd.f32 0.0, %v761
        %v763 = vpop.f32.mrb[0].mxu0
        %v764 = vadd.f32 0.0, %v763
        %v765 = vpop.f32.mrb[0].mxu0
        %v766 = vadd.f32 0.0, %v765
        %v767 = vpop.f32.mrb[0].mxu0
        %v768 = vadd.f32 0.0, %v767
        %769 = vdwg.mxu0
        %v770 = vld [vmem:[%s489] sm:$0xff]
        %v771 = vld [vmem:[%s489 + $0x8] sm:$0xff]
        %v772 = vld [vmem:[%s489 + $0x10] sm:$0xff]
        %v773 = vld [vmem:[%s489 + $0x18] sm:$0xff]
        %v774 = vld [vmem:[%s489 + $0x20] sm:$0xff]
        %v775 = vld [vmem:[%s489 + $0x28] sm:$0xff]
        %v776 = vld [vmem:[%s489 + $0x30] sm:$0xff]
        %v777 = vld [vmem:[%s489 + $0x38] sm:$0xff]
        %v778 = vld [vmem:[%s489 + $0x40] sm:$0xff]
        %v779 = vld [vmem:[%s489 + $0x48] sm:$0xff]
        %v780 = vld [vmem:[%s489 + $0x50] sm:$0xff]
        %v781 = vld [vmem:[%s489 + $0x58] sm:$0xff]
        %v782 = vld [vmem:[%s489 + $0x60] sm:$0xff]
        %v783 = vld [vmem:[%s489 + $0x68] sm:$0xff]
        %v784 = vld [vmem:[%s489 + $0x70] sm:$0xff]
        %v785 = vld [vmem:[%s489 + $0x78] sm:$0xff]
        %v786 = vadd.f32 %v770, %v732
        %v787 = vadd.f32 %v771, %v734
        %v788 = vadd.f32 %v772, %v736
        %v789 = vadd.f32 %v773, %v738
        %v790 = vadd.f32 %v774, %v742
        %v791 = vadd.f32 %v775, %v744
        %v792 = vadd.f32 %v776, %v746
        %v793 = vadd.f32 %v777, %v748
        %v794 = vadd.f32 %v778, %v752
        %v795 = vadd.f32 %v779, %v754
        %v796 = vadd.f32 %v780, %v756
        %v797 = vadd.f32 %v781, %v758
        %v798 = vadd.f32 %v782, %v762
        %v799 = vadd.f32 %v783, %v764
        %v800 = vadd.f32 %v784, %v766
        %v801 = vadd.f32 %v785, %v768
        %v802 = vld [vmem:[#allocation7] sm:$0xff]
        %v803 = vld [vmem:[#allocation7 + $0x8] sm:$0xff]
        %v804 = vld [vmem:[#allocation7 + $0x10] sm:$0xff]
        %v805 = vld [vmem:[#allocation7 + $0x18] sm:$0xff]
        %v806 = vld [vmem:[#allocation7 + $0x20] sm:$0xff]
        %v807 = vld [vmem:[#allocation7 + $0x28] sm:$0xff]
        %v808 = vld [vmem:[#allocation7 + $0x30] sm:$0xff]
        %v809 = vld [vmem:[#allocation7 + $0x38] sm:$0xff]
        %811 = vset.pattern.permute.xlu0 0
        %812 = vperm.xlu0 %811, %v802
        %v813 = vpop.permute.xlu0 %812
        %816 = vset.pattern.permute.xlu0 0
        %817 = vperm.xlu0 %816, %v803
        %v818 = vpop.permute.xlu0 %817
        %821 = vset.pattern.permute.xlu0 0
        %822 = vperm.xlu0 %821, %v804
        %v823 = vpop.permute.xlu0 %822
        %826 = vset.pattern.permute.xlu0 0
        %827 = vperm.xlu0 %826, %v805
        %v828 = vpop.permute.xlu0 %827
        %831 = vset.pattern.permute.xlu0 0
        %832 = vperm.xlu0 %831, %v806
        %v833 = vpop.permute.xlu0 %832
        %836 = vset.pattern.permute.xlu0 0
        %837 = vperm.xlu0 %836, %v807
        %v838 = vpop.permute.xlu0 %837
        %841 = vset.pattern.permute.xlu0 0
        %842 = vperm.xlu0 %841, %v808
        %v843 = vpop.permute.xlu0 %842
        %846 = vset.pattern.permute.xlu0 0
        %847 = vperm.xlu0 %846, %v809
        %v848 = vpop.permute.xlu0 %847
        %v850 = vadd.f32 %v786, %v813
        %v851 = vadd.f32 %v787, %v813
        %v852 = vadd.f32 %v788, %v818
        %v853 = vadd.f32 %v789, %v818
        %v854 = vadd.f32 %v790, %v823
        %v855 = vadd.f32 %v791, %v823
        %v856 = vadd.f32 %v792, %v828
        %v857 = vadd.f32 %v793, %v828
        %v858 = vadd.f32 %v794, %v833
        %v859 = vadd.f32 %v795, %v833
        %v860 = vadd.f32 %v796, %v838
        %v861 = vadd.f32 %v797, %v838
        %v862 = vadd.f32 %v798, %v843
        %v863 = vadd.f32 %v799, %v843
        %v864 = vadd.f32 %v800, %v848
        %v865 = vadd.f32 %v801, %v848
        %v866 = vld [vmem:[#allocation10] sm:$0xff]
        %v867 = vld [vmem:[#allocation10 + $0x8] sm:$0xff]
        %v868 = vld [vmem:[#allocation10 + $0x10] sm:$0xff]
        %v869 = vld [vmem:[#allocation10 + $0x18] sm:$0xff]
        %v870 = vld [vmem:[#allocation10 + $0x20] sm:$0xff]
        %v871 = vld [vmem:[#allocation10 + $0x28] sm:$0xff]
        %v872 = vld [vmem:[#allocation10 + $0x30] sm:$0xff]
        %v873 = vld [vmem:[#allocation10 + $0x38] sm:$0xff]
        %v874 = vld [vmem:[#allocation11] sm:$0xff]
        %v875 = vld [vmem:[#allocation11 + $0x8] sm:$0xff]
        %v876 = vld [vmem:[#allocation11 + $0x10] sm:$0xff]
        %v877 = vld [vmem:[#allocation11 + $0x18] sm:$0xff]
        %v878 = vld [vmem:[#allocation11 + $0x20] sm:$0xff]
        %v879 = vld [vmem:[#allocation11 + $0x28] sm:$0xff]
        %v880 = vld [vmem:[#allocation11 + $0x30] sm:$0xff]
        %v881 = vld [vmem:[#allocation11 + $0x38] sm:$0xff]
        %v882 = vadd.f32 %v850, %v852
        %v883 = vadd.f32 %v882, %v854
        %v884 = vadd.f32 %v883, %v856
        %v885 = vadd.f32 %v884, %v858
        %v886 = vadd.f32 %v885, %v860
        %v887 = vadd.f32 %v886, %v862
        %v888 = vadd.f32 %v887, %v864
        %v889 = vrot.slane %v888, 4
        %v890 = vadd.f32 %v888, %v889
        %v891 = vrot.slane %v890, 2
        %v892 = vadd.f32 %v890, %v891
        %v893 = vrot.slane %v892, 1
        %v894 = vadd.f32 %v892, %v893
        %v895 = vadd.f32 %v851, %v853
        %v896 = vadd.f32 %v895, %v855
        %v897 = vadd.f32 %v896, %v857
        %v898 = vadd.f32 %v897, %v859
        %v899 = vadd.f32 %v898, %v861
        %v900 = vadd.f32 %v899, %v863
        %v901 = vadd.f32 %v900, %v865
        %v902 = vrot.slane %v901, 4
        %v903 = vadd.f32 %v901, %v902
        %v904 = vrot.slane %v903, 2
        %v905 = vadd.f32 %v903, %v904
        %v906 = vrot.slane %v905, 1
        %v907 = vadd.f32 %v905, %v906
        %v908 = vrcp.pop 64.0
        %v909 = vmul.f32 %v894, %v908
        %v910 = vmul.f32 %v907, %v908
        %v911 = vsub.f32 %v850, %v909
        %v912 = vsub.f32 %v851, %v910
        %v913 = vsub.f32 %v852, %v909
        %v914 = vsub.f32 %v853, %v910
        %v915 = vsub.f32 %v854, %v909
        %v916 = vsub.f32 %v855, %v910
        %v917 = vsub.f32 %v856, %v909
        %v918 = vsub.f32 %v857, %v910
        %v919 = vsub.f32 %v858, %v909
        %v920 = vsub.f32 %v859, %v910
        %v921 = vsub.f32 %v860, %v909
        %v922 = vsub.f32 %v861, %v910
        %v923 = vsub.f32 %v862, %v909
        %v924 = vsub.f32 %v863, %v910
        %v925 = vsub.f32 %v864, %v909
        %v926 = vsub.f32 %v865, %v910
        %v927 = vmul.f32 %v911, %v911
        %v928 = vmul.f32 %v912, %v912
        %v929 = vmul.f32 %v913, %v913
        %v930 = vmul.f32 %v914, %v914
        %v931 = vmul.f32 %v915, %v915
        %v932 = vmul.f32 %v916, %v916
        %v933 = vmul.f32 %v917, %v917
        %v934 = vmul.f32 %v918, %v918
        %v935 = vmul.f32 %v919, %v919
        %v936 = vmul.f32 %v920, %v920
        %v937 = vmul.f32 %v921, %v921
        %v938 = vmul.f32 %v922, %v922
        %v939 = vmul.f32 %v923, %v923
        %v940 = vmul.f32 %v924, %v924
        %v941 = vmul.f32 %v925, %v925
        %v942 = vmul.f32 %v926, %v926
        %v943 = vadd.f32 %v927, %v929
        %v944 = vadd.f32 %v943, %v931
        %v945 = vadd.f32 %v944, %v933
        %v946 = vadd.f32 %v945, %v935
        %v947 = vadd.f32 %v946, %v937
        %v948 = vadd.f32 %v947, %v939
        %v949 = vadd.f32 %v948, %v941
        %v950 = vrot.slane %v949, 4
        %v951 = vadd.f32 %v949, %v950
        %v952 = vrot.slane %v951, 2
        %v953 = vadd.f32 %v951, %v952
        %v954 = vrot.slane %v953, 1
        %v955 = vadd.f32 %v953, %v954
        %v956 = vadd.f32 %v928, %v930
        %v957 = vadd.f32 %v956, %v932
        %v958 = vadd.f32 %v957, %v934
        %v959 = vadd.f32 %v958, %v936
        %v960 = vadd.f32 %v959, %v938
        %v961 = vadd.f32 %v960, %v940
        %v962 = vadd.f32 %v961, %v942
        %v963 = vrot.slane %v962, 4
        %v964 = vadd.f32 %v962, %v963
        %v965 = vrot.slane %v964, 2
        %v966 = vadd.f32 %v964, %v965
        %v967 = vrot.slane %v966, 1
        %v968 = vadd.f32 %v966, %v967
        %v969 = vmul.f32 %v955, %v908
        %v970 = vmul.f32 %v968, %v908
        %v971 = vadd.f32 %v969, 1e-06
        %v972 = vadd.f32 %v970, 1e-06
        %v973 = vrsqrt.pop %v971
        %v974 = vrsqrt.pop %v972
        %v975 = vmul.f32 %v911, %v973
        %v976 = vmul.f32 %v912, %v974
        %v977 = vmul.f32 %v913, %v973
        %v978 = vmul.f32 %v914, %v974
        %v979 = vmul.f32 %v915, %v973
        %v980 = vmul.f32 %v916, %v974
        %v981 = vmul.f32 %v917, %v973
        %v982 = vmul.f32 %v918, %v974
        %v983 = vmul.f32 %v919, %v973
        %v984 = vmul.f32 %v920, %v974
        %v985 = vmul.f32 %v921, %v973
        %v986 = vmul.f32 %v922, %v974
        %v987 = vmul.f32 %v923, %v973
        %v988 = vmul.f32 %v924, %v974
        %v989 = vmul.f32 %v925, %v973
        %v990 = vmul.f32 %v926, %v974
        %992 = vset.pattern.permute.xlu0 0
        %993 = vperm.xlu0 %992, %v866
        %v994 = vpop.permute.xlu0 %993
        %997 = vset.pattern.permute.xlu0 0
        %998 = vperm.xlu0 %997, %v867
        %v999 = vpop.permute.xlu0 %998
        %1002 = vset.pattern.permute.xlu0 0
        %1003 = vperm.xlu0 %1002, %v868
        %v1004 = vpop.permute.xlu0 %1003
        %1007 = vset.pattern.permute.xlu0 0
        %1008 = vperm.xlu0 %1007, %v869
        %v1009 = vpop.permute.xlu0 %1008
        %1012 = vset.pattern.permute.xlu0 0
        %1013 = vperm.xlu0 %1012, %v870
        %v1014 = vpop.permute.xlu0 %1013
        %1017 = vset.pattern.permute.xlu0 0
        %1018 = vperm.xlu0 %1017, %v871
        %v1019 = vpop.permute.xlu0 %1018
        %1022 = vset.pattern.permute.xlu0 0
        %1023 = vperm.xlu0 %1022, %v872
        %v1024 = vpop.permute.xlu0 %1023
        %1027 = vset.pattern.permute.xlu0 0
        %1028 = vperm.xlu0 %1027, %v873
        %v1029 = vpop.permute.xlu0 %1028
        %v1031 = vmul.f32 %v975, %v994
        %v1032 = vmul.f32 %v976, %v994
        %v1033 = vmul.f32 %v977, %v999
        %v1034 = vmul.f32 %v978, %v999
        %v1035 = vmul.f32 %v979, %v1004
        %v1036 = vmul.f32 %v980, %v1004
        %v1037 = vmul.f32 %v981, %v1009
        %v1038 = vmul.f32 %v982, %v1009
        %v1039 = vmul.f32 %v983, %v1014
        %v1040 = vmul.f32 %v984, %v1014
        %v1041 = vmul.f32 %v985, %v1019
        %v1042 = vmul.f32 %v986, %v1019
        %v1043 = vmul.f32 %v987, %v1024
        %v1044 = vmul.f32 %v988, %v1024
        %v1045 = vmul.f32 %v989, %v1029
        %v1046 = vmul.f32 %v990, %v1029
        %1048 = vset.pattern.permute.xlu0 0
        %1049 = vperm.xlu0 %1048, %v874
        %v1050 = vpop.permute.xlu0 %1049
        %1053 = vset.pattern.permute.xlu0 0
        %1054 = vperm.xlu0 %1053, %v875
        %v1055 = vpop.permute.xlu0 %1054
        %1058 = vset.pattern.permute.xlu0 0
        %1059 = vperm.xlu0 %1058, %v876
        %v1060 = vpop.permute.xlu0 %1059
        %1063 = vset.pattern.permute.xlu0 0
        %1064 = vperm.xlu0 %1063, %v877
        %v1065 = vpop.permute.xlu0 %1064
        %1068 = vset.pattern.permute.xlu0 0
        %1069 = vperm.xlu0 %1068, %v878
        %v1070 = vpop.permute.xlu0 %1069
        %1073 = vset.pattern.permute.xlu0 0
        %1074 = vperm.xlu0 %1073, %v879
        %v1075 = vpop.permute.xlu0 %1074
        %1078 = vset.pattern.permute.xlu0 0
        %1079 = vperm.xlu0 %1078, %v880
        %v1080 = vpop.permute.xlu0 %1079
        %1083 = vset.pattern.permute.xlu0 0
        %1084 = vperm.xlu0 %1083, %v881
        %v1085 = vpop.permute.xlu0 %1084
        %v1087 = vadd.f32 %v1031, %v1050
        %v1088 = vadd.f32 %v1032, %v1050
        %v1089 = vadd.f32 %v1033, %v1055
        %v1090 = vadd.f32 %v1034, %v1055
        %v1091 = vadd.f32 %v1035, %v1060
        %v1092 = vadd.f32 %v1036, %v1060
        %v1093 = vadd.f32 %v1037, %v1065
        %v1094 = vadd.f32 %v1038, %v1065
        %v1095 = vadd.f32 %v1039, %v1070
        %v1096 = vadd.f32 %v1040, %v1070
        %v1097 = vadd.f32 %v1041, %v1075
        %v1098 = vadd.f32 %v1042, %v1075
        %v1099 = vadd.f32 %v1043, %v1080
        %v1100 = vadd.f32 %v1044, %v1080
        %v1101 = vadd.f32 %v1045, %v1085
        %v1102 = vadd.f32 %v1046, %v1085
        %v1103 = vld [vmem:[#allocation13] sm:$0xf]
        %v1104 = vld [vmem:[#allocation13 + $0x4] sm:$0xf]
        %v1105 = vld [vmem:[#allocation13 + $0x8] sm:$0xf]
        %v1106 = vld [vmem:[#allocation13 + $0xc] sm:$0xf]
        %v1107 = vld [vmem:[#allocation13 + $0x10] sm:$0xf]
        %v1108 = vld [vmem:[#allocation13 + $0x14] sm:$0xf]
        %v1109 = vld [vmem:[#allocation13 + $0x18] sm:$0xf]
        %v1110 = vld [vmem:[#allocation13 + $0x1c] sm:$0xf]
        %v1111 = vld [vmem:[#allocation13 + $0x20] sm:$0xf]
        %v1112 = vld [vmem:[#allocation13 + $0x24] sm:$0xf]
        %v1113 = vld [vmem:[#allocation13 + $0x28] sm:$0xf]
        %v1114 = vld [vmem:[#allocation13 + $0x2c] sm:$0xf]
        %v1115 = vld [vmem:[#allocation13 + $0x30] sm:$0xf]
        %v1116 = vld [vmem:[#allocation13 + $0x34] sm:$0xf]
        %v1117 = vld [vmem:[#allocation13 + $0x38] sm:$0xf]
        %v1118 = vld [vmem:[#allocation13 + $0x3c] sm:$0xf]
        %v1119 = vld [vmem:[#allocation13 + $0x40] sm:$0xf]
        %v1120 = vld [vmem:[#allocation13 + $0x44] sm:$0xf]
        %v1121 = vld [vmem:[#allocation13 + $0x48] sm:$0xf]
        %v1122 = vld [vmem:[#allocation13 + $0x4c] sm:$0xf]
        %v1123 = vld [vmem:[#allocation13 + $0x50] sm:$0xf]
        %v1124 = vld [vmem:[#allocation13 + $0x54] sm:$0xf]
        %v1125 = vld [vmem:[#allocation13 + $0x58] sm:$0xf]
        %v1126 = vld [vmem:[#allocation13 + $0x5c] sm:$0xf]
        %v1127 = vld [vmem:[#allocation13 + $0x60] sm:$0xf]
        %v1128 = vld [vmem:[#allocation13 + $0x64] sm:$0xf]
        %v1129 = vld [vmem:[#allocation13 + $0x68] sm:$0xf]
        %v1130 = vld [vmem:[#allocation13 + $0x6c] sm:$0xf]
        %v1131 = vld [vmem:[#allocation13 + $0x70] sm:$0xf]
        %v1132 = vld [vmem:[#allocation13 + $0x74] sm:$0xf]
        %v1133 = vld [vmem:[#allocation13 + $0x78] sm:$0xf]
        %v1134 = vld [vmem:[#allocation13 + $0x7c] sm:$0xf]
        %v1135 = vpack.c.bf16 %v1089, %v1087
        %v1136 = vpack.c.bf16 %v1090, %v1088
        %v1137 = vpack.c.bf16 %v1093, %v1091
        %v1138 = vpack.c.bf16 %v1094, %v1092
        %v1139 = vpack.c.bf16 %v1097, %v1095
        %v1140 = vpack.c.bf16 %v1098, %v1096
        %v1141 = vpack.c.bf16 %v1101, %v1099
        %v1142 = vpack.c.bf16 %v1102, %v1100
        %v1143 = vld [vmem:[#allocation14] sm:$0xff]
        %v1144 = vld [vmem:[#allocation14 + $0x8] sm:$0xff]
        %v1145 = vld [vmem:[#allocation14 + $0x10] sm:$0xff]
        %v1146 = vld [vmem:[#allocation14 + $0x18] sm:$0xff]
        %v1147 = vld [vmem:[#allocation14 + $0x20] sm:$0xff]
        %v1148 = vld [vmem:[#allocation14 + $0x28] sm:$0xff]
        %v1149 = vld [vmem:[#allocation14 + $0x30] sm:$0xff]
        %v1150 = vld [vmem:[#allocation14 + $0x38] sm:$0xff]
        %v1151 = vld [vmem:[#allocation14 + $0x40] sm:$0xff]
        %v1152 = vld [vmem:[#allocation14 + $0x48] sm:$0xff]
        %v1153 = vld [vmem:[#allocation14 + $0x50] sm:$0xff]
        %v1154 = vld [vmem:[#allocation14 + $0x58] sm:$0xff]
        %v1155 = vld [vmem:[#allocation14 + $0x60] sm:$0xff]
        %v1156 = vld [vmem:[#allocation14 + $0x68] sm:$0xff]
        %v1157 = vld [vmem:[#allocation14 + $0x70] sm:$0xff]
        %v1158 = vld [vmem:[#allocation14 + $0x78] sm:$0xff]
        %v1159 = vld [vmem:[#allocation14 + $0x80] sm:$0xff]
        %v1160 = vld [vmem:[#allocation14 + $0x88] sm:$0xff]
        %v1161 = vld [vmem:[#allocation14 + $0x90] sm:$0xff]
        %v1162 = vld [vmem:[#allocation14 + $0x98] sm:$0xff]
        %v1163 = vld [vmem:[#allocation14 + $0xa0] sm:$0xff]
        %v1164 = vld [vmem:[#allocation14 + $0xa8] sm:$0xff]
        %v1165 = vld [vmem:[#allocation14 + $0xb0] sm:$0xff]
        %v1166 = vld [vmem:[#allocation14 + $0xb8] sm:$0xff]
        %v1167 = vld [vmem:[#allocation14 + $0xc0] sm:$0xff]
        %v1168 = vld [vmem:[#allocation14 + $0xc8] sm:$0xff]
        %v1169 = vld [vmem:[#allocation14 + $0xd0] sm:$0xff]
        %v1170 = vld [vmem:[#allocation14 + $0xd8] sm:$0xff]
        %v1171 = vld [vmem:[#allocation14 + $0xe0] sm:$0xff]
        %v1172 = vld [vmem:[#allocation14 + $0xe8] sm:$0xff]
        %v1173 = vld [vmem:[#allocation14 + $0xf0] sm:$0xff]
        %v1174 = vld [vmem:[#allocation14 + $0xf8] sm:$0xff]
        %1176 = vset.pattern.permute.xlu0 0
        %1177 = vperm.xlu0 %1176, %v1143
        %v1178 = vpop.permute.xlu0 %1177
        %1181 = vset.pattern.permute.xlu0 0
        %1182 = vperm.xlu0 %1181, %v1144
        %v1183 = vpop.permute.xlu0 %1182
        %1186 = vset.pattern.permute.xlu0 0
        %1187 = vperm.xlu0 %1186, %v1145
        %v1188 = vpop.permute.xlu0 %1187
        %1191 = vset.pattern.permute.xlu0 0
        %1192 = vperm.xlu0 %1191, %v1146
        %v1193 = vpop.permute.xlu0 %1192
        %1196 = vset.pattern.permute.xlu0 0
        %1197 = vperm.xlu0 %1196, %v1147
        %v1198 = vpop.permute.xlu0 %1197
        %1201 = vset.pattern.permute.xlu0 0
        %1202 = vperm.xlu0 %1201, %v1148
        %v1203 = vpop.permute.xlu0 %1202
        %1206 = vset.pattern.permute.xlu0 0
        %1207 = vperm.xlu0 %1206, %v1149
        %v1208 = vpop.permute.xlu0 %1207
        %1211 = vset.pattern.permute.xlu0 0
        %1212 = vperm.xlu0 %1211, %v1150
        %v1213 = vpop.permute.xlu0 %1212
        %1216 = vset.pattern.permute.xlu0 0
        %1217 = vperm.xlu0 %1216, %v1151
        %v1218 = vpop.permute.xlu0 %1217
        %1221 = vset.pattern.permute.xlu0 0
        %1222 = vperm.xlu0 %1221, %v1152
        %v1223 = vpop.permute.xlu0 %1222
        %1226 = vset.pattern.permute.xlu0 0
        %1227 = vperm.xlu0 %1226, %v1153
        %v1228 = vpop.permute.xlu0 %1227
        %1231 = vset.pattern.permute.xlu0 0
        %1232 = vperm.xlu0 %1231, %v1154
        %v1233 = vpop.permute.xlu0 %1232
        %1236 = vset.pattern.permute.xlu0 0
        %1237 = vperm.xlu0 %1236, %v1155
        %v1238 = vpop.permute.xlu0 %1237
        %1241 = vset.pattern.permute.xlu0 0
        %1242 = vperm.xlu0 %1241, %v1156
        %v1243 = vpop.permute.xlu0 %1242
        %1246 = vset.pattern.permute.xlu0 0
        %1247 = vperm.xlu0 %1246, %v1157
        %v1248 = vpop.permute.xlu0 %1247
        %1251 = vset.pattern.permute.xlu0 0
        %1252 = vperm.xlu0 %1251, %v1158
        %v1253 = vpop.permute.xlu0 %1252
        %1256 = vset.pattern.permute.xlu0 0
        %1257 = vperm.xlu0 %1256, %v1159
        %v1258 = vpop.permute.xlu0 %1257
        %1261 = vset.pattern.permute.xlu0 0
        %1262 = vperm.xlu0 %1261, %v1160
        %v1263 = vpop.permute.xlu0 %1262
        %1266 = vset.pattern.permute.xlu0 0
        %1267 = vperm.xlu0 %1266, %v1161
        %v1268 = vpop.permute.xlu0 %1267
        %1271 = vset.pattern.permute.xlu0 0
        %1272 = vperm.xlu0 %1271, %v1162
        %v1273 = vpop.permute.xlu0 %1272
        %1276 = vset.pattern.permute.xlu0 0
        %1277 = vperm.xlu0 %1276, %v1163
        %v1278 = vpop.permute.xlu0 %1277
        %1281 = vset.pattern.permute.xlu0 0
        %1282 = vperm.xlu0 %1281, %v1164
        %v1283 = vpop.permute.xlu0 %1282
        %1286 = vset.pattern.permute.xlu0 0
        %1287 = vperm.xlu0 %1286, %v1165
        %v1288 = vpop.permute.xlu0 %1287
        %1291 = vset.pattern.permute.xlu0 0
        %1292 = vperm.xlu0 %1291, %v1166
        %v1293 = vpop.permute.xlu0 %1292
        %1296 = vset.pattern.permute.xlu0 0
        %1297 = vperm.xlu0 %1296, %v1167
        %v1298 = vpop.permute.xlu0 %1297
        %1301 = vset.pattern.permute.xlu0 0
        %1302 = vperm.xlu0 %1301, %v1168
        %v1303 = vpop.permute.xlu0 %1302
        %1306 = vset.pattern.permute.xlu0 0
        %1307 = vperm.xlu0 %1306, %v1169
        %v1308 = vpop.permute.xlu0 %1307
        %1311 = vset.pattern.permute.xlu0 0
        %1312 = vperm.xlu0 %1311, %v1170
        %v1313 = vpop.permute.xlu0 %1312
        %1316 = vset.pattern.permute.xlu0 0
        %1317 = vperm.xlu0 %1316, %v1171
        %v1318 = vpop.permute.xlu0 %1317
        %1321 = vset.pattern.permute.xlu0 0
        %1322 = vperm.xlu0 %1321, %v1172
        %v1323 = vpop.permute.xlu0 %1322
        %1326 = vset.pattern.permute.xlu0 0
        %1327 = vperm.xlu0 %1326, %v1173
        %v1328 = vpop.permute.xlu0 %1327
        %1331 = vset.pattern.permute.xlu0 0
        %1332 = vperm.xlu0 %1331, %v1174
        %v1333 = vpop.permute.xlu0 %1332
        %v1367 = vunpack.c.l.b16 %v1103
        %v1368 = vunpack.c.l.b16 %v1104
        %v1369 = vunpack.c.l.b16 %v1105
        %v1370 = vunpack.c.l.b16 %v1106
        %v1371 = vunpack.c.l.b16 %v1107
        %v1372 = vunpack.c.l.b16 %v1108
        %v1373 = vunpack.c.l.b16 %v1109
        %v1374 = vunpack.c.l.b16 %v1110
        %v1375 = vunpack.c.l.b16 %v1111
        %v1376 = vunpack.c.l.b16 %v1112
        %v1377 = vunpack.c.l.b16 %v1113
        %v1378 = vunpack.c.l.b16 %v1114
        %v1379 = vunpack.c.l.b16 %v1115
        %v1380 = vunpack.c.l.b16 %v1116
        %v1381 = vunpack.c.l.b16 %v1117
        %v1382 = vunpack.c.l.b16 %v1118
        %v1383 = vunpack.c.l.b16 %v1119
        %v1384 = vunpack.c.l.b16 %v1120
        %v1385 = vunpack.c.l.b16 %v1121
        %v1386 = vunpack.c.l.b16 %v1122
        %v1387 = vunpack.c.l.b16 %v1123
        %v1388 = vunpack.c.l.b16 %v1124
        %v1389 = vunpack.c.l.b16 %v1125
        %v1390 = vunpack.c.l.b16 %v1126
        %v1391 = vunpack.c.l.b16 %v1127
        %v1392 = vunpack.c.l.b16 %v1128
        %v1393 = vunpack.c.l.b16 %v1129
        %v1394 = vunpack.c.l.b16 %v1130
        %v1395 = vunpack.c.l.b16 %v1131
        %v1396 = vunpack.c.l.b16 %v1132
        %v1397 = vunpack.c.l.b16 %v1133
        %v1398 = vunpack.c.l.b16 %v1134
        %v1399 = vpack.c.b16 %v1368, %v1367
        %v1400 = vpack.c.b16 %v1370, %v1369
        %v1401 = vpack.c.b16 %v1372, %v1371
        %v1402 = vpack.c.b16 %v1374, %v1373
        %v1403 = vpack.c.b16 %v1376, %v1375
        %v1404 = vpack.c.b16 %v1378, %v1377
        %v1405 = vpack.c.b16 %v1380, %v1379
        %v1406 = vpack.c.b16 %v1382, %v1381
        %v1407 = vpack.c.b16 %v1384, %v1383
        %v1408 = vpack.c.b16 %v1386, %v1385
        %v1409 = vpack.c.b16 %v1388, %v1387
        %v1410 = vpack.c.b16 %v1390, %v1389
        %v1411 = vpack.c.b16 %v1392, %v1391
        %v1412 = vpack.c.b16 %v1394, %v1393
        %v1413 = vpack.c.b16 %v1396, %v1395
        %v1414 = vpack.c.b16 %v1398, %v1397
        %v1416 = vsel %vm636, %v1399, 0
        %v1419 = vsel %vm636, %v1400, 0
        %v1422 = vsel %vm636, %v1401, 0
        %v1425 = vsel %vm636, %v1402, 0
        %v1428 = vsel %vm636, %v1403, 0
        %v1431 = vsel %vm636, %v1404, 0
        %v1434 = vsel %vm636, %v1405, 0
        %v1437 = vsel %vm636, %v1406, 0
        %v1440 = vsel %vm636, %v1407, 0
        %v1443 = vsel %vm636, %v1408, 0
        %v1446 = vsel %vm636, %v1409, 0
        %v1449 = vsel %vm636, %v1410, 0
        %v1452 = vsel %vm636, %v1411, 0
        %v1455 = vsel %vm636, %v1412, 0
        %v1458 = vsel %vm636, %v1413, 0
        %v1461 = vsel %vm636, %v1414, 0
        %1463 = vmatprep.subr.bf16.mxu0 %v1136
        %1464 = vmatpush1.bf16.msra.mxu0 %v1135
        %1465 = vmatprep.subr.bf16.mxu0 %v1138
        %1466 = vmatpush1.bf16.msra.mxu0 %v1137
        %1467 = vmatprep.subr.bf16.mxu0 %v1140
        %1468 = vmatpush1.bf16.msra.mxu0 %v1139
        %1469 = vmatprep.subr.bf16.mxu0 %v1142
        %1470 = vmatpush1.bf16.msra.mxu0 %v1141
        %1471 = vmatprep.subr.bf16.mxu0 0
        %1472 = vmatpush1.bf16.msra.mxu0 0
        %1473 = vmatprep.subr.bf16.mxu0 0
        %1474 = vmatpush1.bf16.msra.mxu0 0
        %1475 = vmatprep.subr.bf16.mxu0 0
        %1476 = vmatpush1.bf16.msra.mxu0 0
        %1477 = vmatprep.subr.bf16.mxu0 0
        %1478 = vmatpush1.bf16.msra.mxu0 0
        %1479 = vmatprep.subr.bf16.mxu0 0
        %1480 = vmatpush1.bf16.msra.mxu0 0
        %1481 = vmatprep.subr.bf16.mxu0 0
        %1482 = vmatpush1.bf16.msra.mxu0 0
        %1483 = vmatprep.subr.bf16.mxu0 0
        %1484 = vmatpush1.bf16.msra.mxu0 0
        %1485 = vmatprep.subr.bf16.mxu0 0
        %1486 = vmatpush1.bf16.msra.mxu0 0
        %1487 = vmatprep.subr.bf16.mxu0 0
        %1488 = vmatpush1.bf16.msra.mxu0 0
        %1489 = vmatprep.subr.bf16.mxu0 0
        %1490 = vmatpush1.bf16.msra.mxu0 0
        %1491 = vmatprep.subr.bf16.mxu0 0
        %1492 = vmatpush1.bf16.msra.mxu0 0
        %1493 = vmatprep.subr.bf16.mxu0 0
        %1494 = vmatpush1.bf16.msra.mxu0 0
        %1495 = vmatprep.mubr.bf16.mxu0 0
        %1496 = vmatmul.mubr.bf16.gmra.mrb[0].mxu0 %v1416
        %v1497 = vpop.f32.mrb[0].mxu0
        %v1498 = vadd.f32 %v1178, %v1497
        %v1499 = vpop.f32.mrb[0].mxu0
        %v1500 = vadd.f32 %v1178, %v1499
        %v1501 = vpop.f32.mrb[0].mxu0
        %v1502 = vadd.f32 %v1183, %v1501
        %v1503 = vpop.f32.mrb[0].mxu0
        %v1504 = vadd.f32 %v1183, %v1503
        %1505 = vmatprep.mubr.bf16.mxu0 0
        %1506 = vmatmul.mubr.bf16.gmra.mrb[0].mxu0 %v1419
        %v1507 = vpop.f32.mrb[0].mxu0
        %v1508 = vadd.f32 %v1188, %v1507
        %v1509 = vpop.f32.mrb[0].mxu0
        %v1510 = vadd.f32 %v1188, %v1509
        %v1511 = vpop.f32.mrb[0].mxu0
        %v1512 = vadd.f32 %v1193, %v1511
        %v1513 = vpop.f32.mrb[0].mxu0
        %v1514 = vadd.f32 %v1193, %v1513
        %1515 = vmatprep.mubr.bf16.mxu0 0
        %1516 = vmatmul.mubr.bf16.gmra.mrb[0].mxu0 %v1422
        %v1517 = vpop.f32.mrb[0].mxu0
        %v1518 = vadd.f32 %v1198, %v1517
        %v1519 = vpop.f32.mrb[0].mxu0
        %v1520 = vadd.f32 %v1198, %v1519
        %v1521 = vpop.f32.mrb[0].mxu0
        %v1522 = vadd.f32 %v1203, %v1521
        %v1523 = vpop.f32.mrb[0].mxu0
        %v1524 = vadd.f32 %v1203, %v1523
        %1525 = vmatprep.mubr.bf16.mxu0 0
        %1526 = vmatmul.mubr.bf16.gmra.mrb[0].mxu0 %v1425
        %v1527 = vpop.f32.mrb[0].mxu0
        %v1528 = vadd.f32 %v1208, %v1527
        %v1529 = vpop.f32.mrb[0].mxu0
        %v1530 = vadd.f32 %v1208, %v1529
        %v1531 = vpop.f32.mrb[0].mxu0
        %v1532 = vadd.f32 %v1213, %v1531
        %v1533 = vpop.f32.mrb[0].mxu0
        %v1534 = vadd.f32 %v1213, %v1533
        %1535 = vmatprep.mubr.bf16.mxu0 0
        %1536 = vmatmul.mubr.bf16.gmra.mrb[0].mxu0 %v1428
        %v1537 = vpop.f32.mrb[0].mxu0
        %v1538 = vadd.f32 %v1218, %v1537
        %v1539 = vpop.f32.mrb[0].mxu0
        %v1540 = vadd.f32 %v1218, %v1539
        %v1541 = vpop.f32.mrb[0].mxu0
        %v1542 = vadd.f32 %v1223, %v1541
        %v1543 = vpop.f32.mrb[0].mxu0
        %v1544 = vadd.f32 %v1223, %v1543
        %1545 = vmatprep.mubr.bf16.mxu0 0
        %1546 = vmatmul.mubr.bf16.gmra.mrb[0].mxu0 %v1431
        %v1547 = vpop.f32.mrb[0].mxu0
        %v1548 = vadd.f32 %v1228, %v1547
        %v1549 = vpop.f32.mrb[0].mxu0
        %v1550 = vadd.f32 %v1228, %v1549
        %v1551 = vpop.f32.mrb[0].mxu0
        %v1552 = vadd.f32 %v1233, %v1551
        %v1553 = vpop.f32.mrb[0].mxu0
        %v1554 = vadd.f32 %v1233, %v1553
        %1555 = vmatprep.mubr.bf16.mxu0 0
        %1556 = vmatmul.mubr.bf16.gmra.mrb[0].mxu0 %v1434
        %v1557 = vpop.f32.mrb[0].mxu0
        %v1558 = vadd.f32 %v1238, %v1557
        %v1559 = vpop.f32.mrb[0].mxu0
        %v1560 = vadd.f32 %v1238, %v1559
        %v1561 = vpop.f32.mrb[0].mxu0
        %v1562 = vadd.f32 %v1243, %v1561
        %v1563 = vpop.f32.mrb[0].mxu0
        %v1564 = vadd.f32 %v1243, %v1563
        %1565 = vmatprep.mubr.bf16.mxu0 0
        %1566 = vmatmul.mubr.bf16.gmra.mrb[0].mxu0 %v1437
        %v1567 = vpop.f32.mrb[0].mxu0
        %v1568 = vadd.f32 %v1248, %v1567
        %v1569 = vpop.f32.mrb[0].mxu0
        %v1570 = vadd.f32 %v1248, %v1569
        %v1571 = vpop.f32.mrb[0].mxu0
        %v1572 = vadd.f32 %v1253, %v1571
        %v1573 = vpop.f32.mrb[0].mxu0
        %v1574 = vadd.f32 %v1253, %v1573
        %1575 = vmatprep.mubr.bf16.mxu0 0
        %1576 = vmatmul.mubr.bf16.gmra.mrb[0].mxu0 %v1440
        %v1577 = vpop.f32.mrb[0].mxu0
        %v1578 = vadd.f32 %v1258, %v1577
        %v1579 = vpop.f32.mrb[0].mxu0
        %v1580 = vadd.f32 %v1258, %v1579
        %v1581 = vpop.f32.mrb[0].mxu0
        %v1582 = vadd.f32 %v1263, %v1581
        %v1583 = vpop.f32.mrb[0].mxu0
        %v1584 = vadd.f32 %v1263, %v1583
        %1585 = vmatprep.mubr.bf16.mxu0 0
        %1586 = vmatmul.mubr.bf16.gmra.mrb[0].mxu0 %v1443
        %v1587 = vpop.f32.mrb[0].mxu0
        %v1588 = vadd.f32 %v1268, %v1587
        %v1589 = vpop.f32.mrb[0].mxu0
        %v1590 = vadd.f32 %v1268, %v1589
        %v1591 = vpop.f32.mrb[0].mxu0
        %v1592 = vadd.f32 %v1273, %v1591
        %v1593 = vpop.f32.mrb[0].mxu0
        %v1594 = vadd.f32 %v1273, %v1593
        %1595 = vmatprep.mubr.bf16.mxu0 0
        %1596 = vmatmul.mubr.bf16.gmra.mrb[0].mxu0 %v1446
        %v1597 = vpop.f32.mrb[0].mxu0
        %v1598 = vadd.f32 %v1278, %v1597
        %v1599 = vpop.f32.mrb[0].mxu0
        %v1600 = vadd.f32 %v1278, %v1599
        %v1601 = vpop.f32.mrb[0].mxu0
        %v1602 = vadd.f32 %v1283, %v1601
        %v1603 = vpop.f32.mrb[0].mxu0
        %v1604 = vadd.f32 %v1283, %v1603
        %1605 = vmatprep.mubr.bf16.mxu0 0
        %1606 = vmatmul.mubr.bf16.gmra.mrb[0].mxu0 %v1449
        %v1607 = vpop.f32.mrb[0].mxu0
        %v1608 = vadd.f32 %v1288, %v1607
        %v1609 = vpop.f32.mrb[0].mxu0
        %v1610 = vadd.f32 %v1288, %v1609
        %v1611 = vpop.f32.mrb[0].mxu0
        %v1612 = vadd.f32 %v1293, %v1611
        %v1613 = vpop.f32.mrb[0].mxu0
        %v1614 = vadd.f32 %v1293, %v1613
        %1615 = vmatprep.mubr.bf16.mxu0 0
        %1616 = vmatmul.mubr.bf16.gmra.mrb[0].mxu0 %v1452
        %v1617 = vpop.f32.mrb[0].mxu0
        %v1618 = vadd.f32 %v1298, %v1617
        %v1619 = vpop.f32.mrb[0].mxu0
        %v1620 = vadd.f32 %v1298, %v1619
        %v1621 = vpop.f32.mrb[0].mxu0
        %v1622 = vadd.f32 %v1303, %v1621
        %v1623 = vpop.f32.mrb[0].mxu0
        %v1624 = vadd.f32 %v1303, %v1623
        %1625 = vmatprep.mubr.bf16.mxu0 0
        %1626 = vmatmul.mubr.bf16.gmra.mrb[0].mxu0 %v1455
        %v1627 = vpop.f32.mrb[0].mxu0
        %v1628 = vadd.f32 %v1308, %v1627
        %v1629 = vpop.f32.mrb[0].mxu0
        %v1630 = vadd.f32 %v1308, %v1629
        %v1631 = vpop.f32.mrb[0].mxu0
        %v1632 = vadd.f32 %v1313, %v1631
        %v1633 = vpop.f32.mrb[0].mxu0
        %v1634 = vadd.f32 %v1313, %v1633
        %1635 = vmatprep.mubr.bf16.mxu0 0
        %1636 = vmatmul.mubr.bf16.gmra.mrb[0].mxu0 %v1458
        %v1637 = vpop.f32.mrb[0].mxu0
        %v1638 = vadd.f32 %v1318, %v1637
        %v1639 = vpop.f32.mrb[0].mxu0
        %v1640 = vadd.f32 %v1318, %v1639
        %v1641 = vpop.f32.mrb[0].mxu0
        %v1642 = vadd.f32 %v1323, %v1641
        %v1643 = vpop.f32.mrb[0].mxu0
        %v1644 = vadd.f32 %v1323, %v1643
        %1645 = vmatprep.mubr.bf16.mxu0 0
        %1646 = vmatmul.mubr.bf16.gmra.mrb[0].mxu0 %v1461
        %v1647 = vpop.f32.mrb[0].mxu0
        %v1648 = vadd.f32 %v1328, %v1647
        %v1649 = vpop.f32.mrb[0].mxu0
        %v1650 = vadd.f32 %v1328, %v1649
        %v1651 = vpop.f32.mrb[0].mxu0
        %v1652 = vadd.f32 %v1333, %v1651
        %v1653 = vpop.f32.mrb[0].mxu0
        %v1654 = vadd.f32 %v1333, %v1653
        %1655 = vdwg.mxu0
        %v1656 = vmul.f32 %v1498, %v1498
        %v1657 = vmul.f32 %v1500, %v1500
        %v1658 = vmul.f32 %v1502, %v1502
        %v1659 = vmul.f32 %v1504, %v1504
        %v1660 = vmul.f32 %v1508, %v1508
        %v1661 = vmul.f32 %v1510, %v1510
        %v1662 = vmul.f32 %v1512, %v1512
        %v1663 = vmul.f32 %v1514, %v1514
        %v1664 = vmul.f32 %v1518, %v1518
        %v1665 = vmul.f32 %v1520, %v1520
        %v1666 = vmul.f32 %v1522, %v1522
        %v1667 = vmul.f32 %v1524, %v1524
        %v1668 = vmul.f32 %v1528, %v1528
        %v1669 = vmul.f32 %v1530, %v1530
        %v1670 = vmul.f32 %v1532, %v1532
        %v1671 = vmul.f32 %v1534, %v1534
        %v1672 = vmul.f32 %v1538, %v1538
        %v1673 = vmul.f32 %v1540, %v1540
        %v1674 = vmul.f32 %v1542, %v1542
        %v1675 = vmul.f32 %v1544, %v1544
        %v1676 = vmul.f32 %v1548, %v1548
        %v1677 = vmul.f32 %v1550, %v1550
        %v1678 = vmul.f32 %v1552, %v1552
        %v1679 = vmul.f32 %v1554, %v1554
        %v1680 = vmul.f32 %v1558, %v1558
        %v1681 = vmul.f32 %v1560, %v1560
        %v1682 = vmul.f32 %v1562, %v1562
        %v1683 = vmul.f32 %v1564, %v1564
        %v1684 = vmul.f32 %v1568, %v1568
        %v1685 = vmul.f32 %v1570, %v1570
        %v1686 = vmul.f32 %v1572, %v1572
        %v1687 = vmul.f32 %v1574, %v1574
        %v1688 = vmul.f32 %v1578, %v1578
        %v1689 = vmul.f32 %v1580, %v1580
        %v1690 = vmul.f32 %v1582, %v1582
        %v1691 = vmul.f32 %v1584, %v1584
        %v1692 = vmul.f32 %v1588, %v1588
        %v1693 = vmul.f32 %v1590, %v1590
        %v1694 = vmul.f32 %v1592, %v1592
        %v1695 = vmul.f32 %v1594, %v1594
        %v1696 = vmul.f32 %v1598, %v1598
        %v1697 = vmul.f32 %v1600, %v1600
        %v1698 = vmul.f32 %v1602, %v1602
        %v1699 = vmul.f32 %v1604, %v1604
        %v1700 = vmul.f32 %v1608, %v1608
        %v1701 = vmul.f32 %v1610, %v1610
        %v1702 = vmul.f32 %v1612, %v1612
        %v1703 = vmul.f32 %v1614, %v1614
        %v1704 = vmul.f32 %v1618, %v1618
        %v1705 = vmul.f32 %v1620, %v1620
        %v1706 = vmul.f32 %v1622, %v1622
        %v1707 = vmul.f32 %v1624, %v1624
        %v1708 = vmul.f32 %v1628, %v1628
        %v1709 = vmul.f32 %v1630, %v1630
        %v1710 = vmul.f32 %v1632, %v1632
        %v1711 = vmul.f32 %v1634, %v1634
        %v1712 = vmul.f32 %v1638, %v1638
        %v1713 = vmul.f32 %v1640, %v1640
        %v1714 = vmul.f32 %v1642, %v1642
        %v1715 = vmul.f32 %v1644, %v1644
        %v1716 = vmul.f32 %v1648, %v1648
        %v1717 = vmul.f32 %v1650, %v1650
        %v1718 = vmul.f32 %v1652, %v1652
        %v1719 = vmul.f32 %v1654, %v1654
        %v1720 = vmul.f32 %v1498, %v1656
        %v1721 = vmul.f32 %v1500, %v1657
        %v1722 = vmul.f32 %v1502, %v1658
        %v1723 = vmul.f32 %v1504, %v1659
        %v1724 = vmul.f32 %v1508, %v1660
        %v1725 = vmul.f32 %v1510, %v1661
        %v1726 = vmul.f32 %v1512, %v1662
        %v1727 = vmul.f32 %v1514, %v1663
        %v1728 = vmul.f32 %v1518, %v1664
        %v1729 = vmul.f32 %v1520, %v1665
        %v1730 = vmul.f32 %v1522, %v1666
        %v1731 = vmul.f32 %v1524, %v1667
        %v1732 = vmul.f32 %v1528, %v1668
        %v1733 = vmul.f32 %v1530, %v1669
        %v1734 = vmul.f32 %v1532, %v1670
        %v1735 = vmul.f32 %v1534, %v1671
        %v1736 = vmul.f32 %v1538, %v1672
        %v1737 = vmul.f32 %v1540, %v1673
        %v1738 = vmul.f32 %v1542, %v1674
        %v1739 = vmul.f32 %v1544, %v1675
        %v1740 = vmul.f32 %v1548, %v1676
        %v1741 = vmul.f32 %v1550, %v1677
        %v1742 = vmul.f32 %v1552, %v1678
        %v1743 = vmul.f32 %v1554, %v1679
        %v1744 = vmul.f32 %v1558, %v1680
        %v1745 = vmul.f32 %v1560, %v1681
        %v1746 = vmul.f32 %v1562, %v1682
        %v1747 = vmul.f32 %v1564, %v1683
        %v1748 = vmul.f32 %v1568, %v1684
        %v1749 = vmul.f32 %v1570, %v1685
        %v1750 = vmul.f32 %v1572, %v1686
        %v1751 = vmul.f32 %v1574, %v1687
        %v1752 = vmul.f32 %v1578, %v1688
        %v1753 = vmul.f32 %v1580, %v1689
        %v1754 = vmul.f32 %v1582, %v1690
        %v1755 = vmul.f32 %v1584, %v1691
        %v1756 = vmul.f32 %v1588, %v1692
        %v1757 = vmul.f32 %v1590, %v1693
        %v1758 = vmul.f32 %v1592, %v1694
        %v1759 = vmul.f32 %v1594, %v1695
        %v1760 = vmul.f32 %v1598, %v1696
        %v1761 = vmul.f32 %v1600, %v1697
        %v1762 = vmul.f32 %v1602, %v1698
        %v1763 = vmul.f32 %v1604, %v1699
        %v1764 = vmul.f32 %v1608, %v1700
        %v1765 = vmul.f32 %v1610, %v1701
        %v1766 = vmul.f32 %v1612, %v1702
        %v1767 = vmul.f32 %v1614, %v1703
        %v1768 = vmul.f32 %v1618, %v1704
        %v1769 = vmul.f32 %v1620, %v1705
        %v1770 = vmul.f32 %v1622, %v1706
        %v1771 = vmul.f32 %v1624, %v1707
        %v1772 = vmul.f32 %v1628, %v1708
        %v1773 = vmul.f32 %v1630, %v1709
        %v1774 = vmul.f32 %v1632, %v1710
        %v1775 = vmul.f32 %v1634, %v1711
        %v1776 = vmul.f32 %v1638, %v1712
        %v1777 = vmul.f32 %v1640, %v1713
        %v1778 = vmul.f32 %v1642, %v1714
        %v1779 = vmul.f32 %v1644, %v1715
        %v1780 = vmul.f32 %v1648, %v1716
        %v1781 = vmul.f32 %v1650, %v1717
        %v1782 = vmul.f32 %v1652, %v1718
        %v1783 = vmul.f32 %v1654, %v1719
        %v1784 = vmul.f32 %v1720, 0.044715
        %v1785 = vmul.f32 %v1721, 0.044715
        %v1786 = vmul.f32 %v1722, 0.044715
        %v1787 = vmul.f32 %v1723, 0.044715
        %v1788 = vmul.f32 %v1724, 0.044715
        %v1789 = vmul.f32 %v1725, 0.044715
        %v1790 = vmul.f32 %v1726, 0.044715
        %v1791 = vmul.f32 %v1727, 0.044715
        %v1792 = vmul.f32 %v1728, 0.044715
        %v1793 = vmul.f32 %v1729, 0.044715
        %v1794 = vmul.f32 %v1730, 0.044715
        %v1795 = vmul.f32 %v1731, 0.044715
        %v1796 = vmul.f32 %v1732, 0.044715
        %v1797 = vmul.f32 %v1733, 0.044715
        %v1798 = vmul.f32 %v1734, 0.044715
        %v1799 = vmul.f32 %v1735, 0.044715
        %v1800 = vmul.f32 %v1736, 0.044715
        %v1801 = vmul.f32 %v1737, 0.044715
        %v1802 = vmul.f32 %v1738, 0.044715
        %v1803 = vmul.f32 %v1739, 0.044715
        %v1804 = vmul.f32 %v1740, 0.044715
        %v1805 = vmul.f32 %v1741, 0.044715
        %v1806 = vmul.f32 %v1742, 0.044715
        %v1807 = vmul.f32 %v1743, 0.044715
        %v1808 = vmul.f32 %v1744, 0.044715
        %v1809 = vmul.f32 %v1745, 0.044715
        %v1810 = vmul.f32 %v1746, 0.044715
        %v1811 = vmul.f32 %v1747, 0.044715
        %v1812 = vmul.f32 %v1748, 0.044715
        %v1813 = vmul.f32 %v1749, 0.044715
        %v1814 = vmul.f32 %v1750, 0.044715
        %v1815 = vmul.f32 %v1751, 0.044715
        %v1816 = vmul.f32 %v1752, 0.044715
        %v1817 = vmul.f32 %v1753, 0.044715
        %v1818 = vmul.f32 %v1754, 0.044715
        %v1819 = vmul.f32 %v1755, 0.044715
        %v1820 = vmul.f32 %v1756, 0.044715
        %v1821 = vmul.f32 %v1757, 0.044715
        %v1822 = vmul.f32 %v1758, 0.044715
        %v1823 = vmul.f32 %v1759, 0.044715
        %v1824 = vmul.f32 %v1760, 0.044715
        %v1825 = vmul.f32 %v1761, 0.044715
        %v1826 = vmul.f32 %v1762, 0.044715
        %v1827 = vmul.f32 %v1763, 0.044715
        %v1828 = vmul.f32 %v1764, 0.044715
        %v1829 = vmul.f32 %v1765, 0.044715
        %v1830 = vmul.f32 %v1766, 0.044715
        %v1831 = vmul.f32 %v1767, 0.044715
        %v1832 = vmul.f32 %v1768, 0.044715
        %v1833 = vmul.f32 %v1769, 0.044715
        %v1834 = vmul.f32 %v1770, 0.044715
        %v1835 = vmul.f32 %v1771, 0.044715
        %v1836 = vmul.f32 %v1772, 0.044715
        %v1837 = vmul.f32 %v1773, 0.044715
        %v1838 = vmul.f32 %v1774, 0.044715
        %v1839 = vmul.f32 %v1775, 0.044715
        %v1840 = vmul.f32 %v1776, 0.044715
        %v1841 = vmul.f32 %v1777, 0.044715
        %v1842 = vmul.f32 %v1778, 0.044715
        %v1843 = vmul.f32 %v1779, 0.044715
        %v1844 = vmul.f32 %v1780, 0.044715
        %v1845 = vmul.f32 %v1781, 0.044715
        %v1846 = vmul.f32 %v1782, 0.044715
        %v1847 = vmul.f32 %v1783, 0.044715
        %v1848 = vadd.f32 %v1498, %v1784
        %v1849 = vadd.f32 %v1500, %v1785
        %v1850 = vadd.f32 %v1502, %v1786
        %v1851 = vadd.f32 %v1504, %v1787
        %v1852 = vadd.f32 %v1508, %v1788
        %v1853 = vadd.f32 %v1510, %v1789
        %v1854 = vadd.f32 %v1512, %v1790
        %v1855 = vadd.f32 %v1514, %v1791
        %v1856 = vadd.f32 %v1518, %v1792
        %v1857 = vadd.f32 %v1520, %v1793
        %v1858 = vadd.f32 %v1522, %v1794
        %v1859 = vadd.f32 %v1524, %v1795
        %v1860 = vadd.f32 %v1528, %v1796
        %v1861 = vadd.f32 %v1530, %v1797
        %v1862 = vadd.f32 %v1532, %v1798
        %v1863 = vadd.f32 %v1534, %v1799
        %v1864 = vadd.f32 %v1538, %v1800
        %v1865 = vadd.f32 %v1540, %v1801
        %v1866 = vadd.f32 %v1542, %v1802
        %v1867 = vadd.f32 %v1544, %v1803
        %v1868 = vadd.f32 %v1548, %v1804
        %v1869 = vadd.f32 %v1550, %v1805
        %v1870 = vadd.f32 %v1552, %v1806
        %v1871 = vadd.f32 %v1554, %v1807
        %v1872 = vadd.f32 %v1558, %v1808
        %v1873 = vadd.f32 %v1560, %v1809
        %v1874 = vadd.f32 %v1562, %v1810
        %v1875 = vadd.f32 %v1564, %v1811
        %v1876 = vadd.f32 %v1568, %v1812
        %v1877 = vadd.f32 %v1570, %v1813
        %v1878 = vadd.f32 %v1572, %v1814
        %v1879 = vadd.f32 %v1574, %v1815
        %v1880 = vadd.f32 %v1578, %v1816
        %v1881 = vadd.f32 %v1580, %v1817
        %v1882 = vadd.f32 %v1582, %v1818
        %v1883 = vadd.f32 %v1584, %v1819
        %v1884 = vadd.f32 %v1588, %v1820
        %v1885 = vadd.f32 %v1590, %v1821
        %v1886 = vadd.f32 %v1592, %v1822
        %v1887 = vadd.f32 %v1594, %v1823
        %v1888 = vadd.f32 %v1598, %v1824
        %v1889 = vadd.f32 %v1600, %v1825
        %v1890 = vadd.f32 %v1602, %v1826
        %v1891 = vadd.f32 %v1604, %v1827
        %v1892 = vadd.f32 %v1608, %v1828
        %v1893 = vadd.f32 %v1610, %v1829
        %v1894 = vadd.f32 %v1612, %v1830
        %v1895 = vadd.f32 %v1614, %v1831
        %v1896 = vadd.f32 %v1618, %v1832
        %v1897 = vadd.f32 %v1620, %v1833
        %v1898 = vadd.f32 %v1622, %v1834
        %v1899 = vadd.f32 %v1624, %v1835
        %v1900 = vadd.f32 %v1628, %v1836
        %v1901 = vadd.f32 %v1630, %v1837
        %v1902 = vadd.f32 %v1632, %v1838
        %v1903 = vadd.f32 %v1634, %v1839
        %v1904 = vadd.f32 %v1638, %v1840
        %v1905 = vadd.f32 %v1640, %v1841
        %v1906 = vadd.f32 %v1642, %v1842
        %v1907 = vadd.f32 %v1644, %v1843
        %v1908 = vadd.f32 %v1648, %v1844
        %v1909 = vadd.f32 %v1650, %v1845
        %v1910 = vadd.f32 %v1652, %v1846
        %v1911 = vadd.f32 %v1654, %v1847
        %v1912 = vmul.f32 %v1848, 0.7978846
        %v1913 = vmul.f32 %v1849, 0.7978846
        %v1914 = vmul.f32 %v1850, 0.7978846
        %v1915 = vmul.f32 %v1851, 0.7978846
        %v1916 = vmul.f32 %v1852, 0.7978846
        %v1917 = vmul.f32 %v1853, 0.7978846
        %v1918 = vmul.f32 %v1854, 0.7978846
        %v1919 = vmul.f32 %v1855, 0.7978846
        %v1920 = vmul.f32 %v1856, 0.7978846
        %v1921 = vmul.f32 %v1857, 0.7978846
        %v1922 = vmul.f32 %v1858, 0.7978846
        %v1923 = vmul.f32 %v1859, 0.7978846
        %v1924 = vmul.f32 %v1860, 0.7978846
        %v1925 = vmul.f32 %v1861, 0.7978846
        %v1926 = vmul.f32 %v1862, 0.7978846
        %v1927 = vmul.f32 %v1863, 0.7978846
        %v1928 = vmul.f32 %v1864, 0.7978846
        %v1929 = vmul.f32 %v1865, 0.7978846
        %v1930 = vmul.f32 %v1866, 0.7978846
        %v1931 = vmul.f32 %v1867, 0.7978846
        %v1932 = vmul.f32 %v1868, 0.7978846
        %v1933 = vmul.f32 %v1869, 0.7978846
        %v1934 = vmul.f32 %v1870, 0.7978846
        %v1935 = vmul.f32 %v1871, 0.7978846
        %v1936 = vmul.f32 %v1872, 0.7978846
        %v1937 = vmul.f32 %v1873, 0.7978846
        %v1938 = vmul.f32 %v1874, 0.7978846
        %v1939 = vmul.f32 %v1875, 0.7978846
        %v1940 = vmul.f32 %v1876, 0.7978846
        %v1941 = vmul.f32 %v1877, 0.7978846
        %v1942 = vmul.f32 %v1878, 0.7978846
        %v1943 = vmul.f32 %v1879, 0.7978846
        %v1944 = vmul.f32 %v1880, 0.7978846
        %v1945 = vmul.f32 %v1881, 0.7978846
        %v1946 = vmul.f32 %v1882, 0.7978846
        %v1947 = vmul.f32 %v1883, 0.7978846
        %v1948 = vmul.f32 %v1884, 0.7978846
        %v1949 = vmul.f32 %v1885, 0.7978846
        %v1950 = vmul.f32 %v1886, 0.7978846
        %v1951 = vmul.f32 %v1887, 0.7978846
        %v1952 = vmul.f32 %v1888, 0.7978846
        %v1953 = vmul.f32 %v1889, 0.7978846
        %v1954 = vmul.f32 %v1890, 0.7978846
        %v1955 = vmul.f32 %v1891, 0.7978846
        %v1956 = vmul.f32 %v1892, 0.7978846
        %v1957 = vmul.f32 %v1893, 0.7978846
        %v1958 = vmul.f32 %v1894, 0.7978846
        %v1959 = vmul.f32 %v1895, 0.7978846
        %v1960 = vmul.f32 %v1896, 0.7978846
        %v1961 = vmul.f32 %v1897, 0.7978846
        %v1962 = vmul.f32 %v1898, 0.7978846
        %v1963 = vmul.f32 %v1899, 0.7978846
        %v1964 = vmul.f32 %v1900, 0.7978846
        %v1965 = vmul.f32 %v1901, 0.7978846
        %v1966 = vmul.f32 %v1902, 0.7978846
        %v1967 = vmul.f32 %v1903, 0.7978846
        %v1968 = vmul.f32 %v1904, 0.7978846
        %v1969 = vmul.f32 %v1905, 0.7978846
        %v1970 = vmul.f32 %v1906, 0.7978846
        %v1971 = vmul.f32 %v1907, 0.7978846
        %v1972 = vmul.f32 %v1908, 0.7978846
        %v1973 = vmul.f32 %v1909, 0.7978846
        %v1974 = vmul.f32 %v1910, 0.7978846
        %v1975 = vmul.f32 %v1911, 0.7978846
        %v1976 = vtanh.pop %v1912
        %v1977 = vtanh.pop %v1913
        %v1978 = vtanh.pop %v1914
        %v1979 = vtanh.pop %v1915
        %v1980 = vtanh.pop %v1916
        %v1981 = vtanh.pop %v1917
        %v1982 = vtanh.pop %v1918
        %v1983 = vtanh.pop %v1919
        %v1984 = vtanh.pop %v1920
        %v1985 = vtanh.pop %v1921
        %v1986 = vtanh.pop %v1922
        %v1987 = vtanh.pop %v1923
        %v1988 = vtanh.pop %v1924
        %v1989 = vtanh.pop %v1925
        %v1990 = vtanh.pop %v1926
        %v1991 = vtanh.pop %v1927
        %v1992 = vtanh.pop %v1928
        %v1993 = vtanh.pop %v1929
        %v1994 = vtanh.pop %v1930
        %v1995 = vtanh.pop %v1931
        %v1996 = vtanh.pop %v1932
        %v1997 = vtanh.pop %v1933
        %v1998 = vtanh.pop %v1934
        %v1999 = vtanh.pop %v1935
        %v2000 = vtanh.pop %v1936
        %v2001 = vtanh.pop %v1937
        %v2002 = vtanh.pop %v1938
        %v2003 = vtanh.pop %v1939
        %v2004 = vtanh.pop %v1940
        %v2005 = vtanh.pop %v1941
        %v2006 = vtanh.pop %v1942
        %v2007 = vtanh.pop %v1943
        %v2008 = vtanh.pop %v1944
        %v2009 = vtanh.pop %v1945
        %v2010 = vtanh.pop %v1946
        %v2011 = vtanh.pop %v1947
        %v2012 = vtanh.pop %v1948
        %v2013 = vtanh.pop %v1949
        %v2014 = vtanh.pop %v1950
        %v2015 = vtanh.pop %v1951
        %v2016 = vtanh.pop %v1952
        %v2017 = vtanh.pop %v1953
        %v2018 = vtanh.pop %v1954
        %v2019 = vtanh.pop %v1955
        %v2020 = vtanh.pop %v1956
        %v2021 = vtanh.pop %v1957
        %v2022 = vtanh.pop %v1958
        %v2023 = vtanh.pop %v1959
        %v2024 = vtanh.pop %v1960
        %v2025 = vtanh.pop %v1961
        %v2026 = vtanh.pop %v1962
        %v2027 = vtanh.pop %v1963
        %v2028 = vtanh.pop %v1964
        %v2029 = vtanh.pop %v1965
        %v2030 = vtanh.pop %v1966
        %v2031 = vtanh.pop %v1967
        %v2032 = vtanh.pop %v1968
        %v2033 = vtanh.pop %v1969
        %v2034 = vtanh.pop %v1970
        %v2035 = vtanh.pop %v1971
        %v2036 = vtanh.pop %v1972
        %v2037 = vtanh.pop %v1973
        %v2038 = vtanh.pop %v1974
        %v2039 = vtanh.pop %v1975
        %v2040 = vadd.f32 %v1976, 1.0
        %v2041 = vadd.f32 %v1977, 1.0
        %v2042 = vadd.f32 %v1978, 1.0
        %v2043 = vadd.f32 %v1979, 1.0
        %v2044 = vadd.f32 %v1980, 1.0
        %v2045 = vadd.f32 %v1981, 1.0
        %v2046 = vadd.f32 %v1982, 1.0
        %v2047 = vadd.f32 %v1983, 1.0
        %v2048 = vadd.f32 %v1984, 1.0
        %v2049 = vadd.f32 %v1985, 1.0
        %v2050 = vadd.f32 %v1986, 1.0
        %v2051 = vadd.f32 %v1987, 1.0
        %v2052 = vadd.f32 %v1988, 1.0
        %v2053 = vadd.f32 %v1989, 1.0
        %v2054 = vadd.f32 %v1990, 1.0
        %v2055 = vadd.f32 %v1991, 1.0
        %v2056 = vadd.f32 %v1992, 1.0
        %v2057 = vadd.f32 %v1993, 1.0
        %v2058 = vadd.f32 %v1994, 1.0
        %v2059 = vadd.f32 %v1995, 1.0
        %v2060 = vadd.f32 %v1996, 1.0
        %v2061 = vadd.f32 %v1997, 1.0
        %v2062 = vadd.f32 %v1998, 1.0
        %v2063 = vadd.f32 %v1999, 1.0
        %v2064 = vadd.f32 %v2000, 1.0
        %v2065 = vadd.f32 %v2001, 1.0
        %v2066 = vadd.f32 %v2002, 1.0
        %v2067 = vadd.f32 %v2003, 1.0
        %v2068 = vadd.f32 %v2004, 1.0
        %v2069 = vadd.f32 %v2005, 1.0
        %v2070 = vadd.f32 %v2006, 1.0
        %v2071 = vadd.f32 %v2007, 1.0
        %v2072 = vadd.f32 %v2008, 1.0
        %v2073 = vadd.f32 %v2009, 1.0
        %v2074 = vadd.f32 %v2010, 1.0
        %v2075 = vadd.f32 %v2011, 1.0
        %v2076 = vadd.f32 %v2012, 1.0
        %v2077 = vadd.f32 %v2013, 1.0
        %v2078 = vadd.f32 %v2014, 1.0
        %v2079 = vadd.f32 %v2015, 1.0
        %v2080 = vadd.f32 %v2016, 1.0
        %v2081 = vadd.f32 %v2017, 1.0
        %v2082 = vadd.f32 %v2018, 1.0
        %v2083 = vadd.f32 %v2019, 1.0
        %v2084 = vadd.f32 %v2020, 1.0
        %v2085 = vadd.f32 %v2021, 1.0
        %v2086 = vadd.f32 %v2022, 1.0
        %v2087 = vadd.f32 %v2023, 1.0
        %v2088 = vadd.f32 %v2024, 1.0
        %v2089 = vadd.f32 %v2025, 1.0
        %v2090 = vadd.f32 %v2026, 1.0
        %v2091 = vadd.f32 %v2027, 1.0
        %v2092 = vadd.f32 %v2028, 1.0
        %v2093 = vadd.f32 %v2029, 1.0
        %v2094 = vadd.f32 %v2030, 1.0
        %v2095 = vadd.f32 %v2031, 1.0
        %v2096 = vadd.f32 %v2032, 1.0
        %v2097 = vadd.f32 %v2033, 1.0
        %v2098 = vadd.f32 %v2034, 1.0
        %v2099 = vadd.f32 %v2035, 1.0
        %v2100 = vadd.f32 %v2036, 1.0
        %v2101 = vadd.f32 %v2037, 1.0
        %v2102 = vadd.f32 %v2038, 1.0
        %v2103 = vadd.f32 %v2039, 1.0
        %v2104 = vmul.f32 %v2040, 0.5
        %v2105 = vmul.f32 %v2041, 0.5
        %v2106 = vmul.f32 %v2042, 0.5
        %v2107 = vmul.f32 %v2043, 0.5
        %v2108 = vmul.f32 %v2044, 0.5
        %v2109 = vmul.f32 %v2045, 0.5
        %v2110 = vmul.f32 %v2046, 0.5
        %v2111 = vmul.f32 %v2047, 0.5
        %v2112 = vmul.f32 %v2048, 0.5
        %v2113 = vmul.f32 %v2049, 0.5
        %v2114 = vmul.f32 %v2050, 0.5
        %v2115 = vmul.f32 %v2051, 0.5
        %v2116 = vmul.f32 %v2052, 0.5
        %v2117 = vmul.f32 %v2053, 0.5
        %v2118 = vmul.f32 %v2054, 0.5
        %v2119 = vmul.f32 %v2055, 0.5
        %v2120 = vmul.f32 %v2056, 0.5
        %v2121 = vmul.f32 %v2057, 0.5
        %v2122 = vmul.f32 %v2058, 0.5
        %v2123 = vmul.f32 %v2059, 0.5
        %v2124 = vmul.f32 %v2060, 0.5
        %v2125 = vmul.f32 %v2061, 0.5
        %v2126 = vmul.f32 %v2062, 0.5
        %v2127 = vmul.f32 %v2063, 0.5
        %v2128 = vmul.f32 %v2064, 0.5
        %v2129 = vmul.f32 %v2065, 0.5
        %v2130 = vmul.f32 %v2066, 0.5
        %v2131 = vmul.f32 %v2067, 0.5
        %v2132 = vmul.f32 %v2068, 0.5
        %v2133 = vmul.f32 %v2069, 0.5
        %v2134 = vmul.f32 %v2070, 0.5
        %v2135 = vmul.f32 %v2071, 0.5
        %v2136 = vmul.f32 %v2072, 0.5
        %v2137 = vmul.f32 %v2073, 0.5
        %v2138 = vmul.f32 %v2074, 0.5
        %v2139 = vmul.f32 %v2075, 0.5
        %v2140 = vmul.f32 %v2076, 0.5
        %v2141 = vmul.f32 %v2077, 0.5
        %v2142 = vmul.f32 %v2078, 0.5
        %v2143 = vmul.f32 %v2079, 0.5
        %v2144 = vmul.f32 %v2080, 0.5
        %v2145 = vmul.f32 %v2081, 0.5
        %v2146 = vmul.f32 %v2082, 0.5
        %v2147 = vmul.f32 %v2083, 0.5
        %v2148 = vmul.f32 %v2084, 0.5
        %v2149 = vmul.f32 %v2085, 0.5
        %v2150 = vmul.f32 %v2086, 0.5
        %v2151 = vmul.f32 %v2087, 0.5
        %v2152 = vmul.f32 %v2088, 0.5
        %v2153 = vmul.f32 %v2089, 0.5
        %v2154 = vmul.f32 %v2090, 0.5
        %v2155 = vmul.f32 %v2091, 0.5
        %v2156 = vmul.f32 %v2092, 0.5
        %v2157 = vmul.f32 %v2093, 0.5
        %v2158 = vmul.f32 %v2094, 0.5
        %v2159 = vmul.f32 %v2095, 0.5
        %v2160 = vmul.f32 %v2096, 0.5
        %v2161 = vmul.f32 %v2097, 0.5
        %v2162 = vmul.f32 %v2098, 0.5
        %v2163 = vmul.f32 %v2099, 0.5
        %v2164 = vmul.f32 %v2100, 0.5
        %v2165 = vmul.f32 %v2101, 0.5
        %v2166 = vmul.f32 %v2102, 0.5
        %v2167 = vmul.f32 %v2103, 0.5
        %v2168 = vmul.f32 %v1498, %v2104
        %v2169 = vmul.f32 %v1500, %v2105
        %v2170 = vmul.f32 %v1502, %v2106
        %v2171 = vmul.f32 %v1504, %v2107
        %v2172 = vmul.f32 %v1508, %v2108
        %v2173 = vmul.f32 %v1510, %v2109
        %v2174 = vmul.f32 %v1512, %v2110
        %v2175 = vmul.f32 %v1514, %v2111
        %v2176 = vmul.f32 %v1518, %v2112
        %v2177 = vmul.f32 %v1520, %v2113
        %v2178 = vmul.f32 %v1522, %v2114
        %v2179 = vmul.f32 %v1524, %v2115
        %v2180 = vmul.f32 %v1528, %v2116
        %v2181 = vmul.f32 %v1530, %v2117
        %v2182 = vmul.f32 %v1532, %v2118
        %v2183 = vmul.f32 %v1534, %v2119
        %v2184 = vmul.f32 %v1538, %v2120
        %v2185 = vmul.f32 %v1540, %v2121
        %v2186 = vmul.f32 %v1542, %v2122
        %v2187 = vmul.f32 %v1544, %v2123
        %v2188 = vmul.f32 %v1548, %v2124
        %v2189 = vmul.f32 %v1550, %v2125
        %v2190 = vmul.f32 %v1552, %v2126
        %v2191 = vmul.f32 %v1554, %v2127
        %v2192 = vmul.f32 %v1558, %v2128
        %v2193 = vmul.f32 %v1560, %v2129
        %v2194 = vmul.f32 %v1562, %v2130
        %v2195 = vmul.f32 %v1564, %v2131
        %v2196 = vmul.f32 %v1568, %v2132
        %v2197 = vmul.f32 %v1570, %v2133
        %v2198 = vmul.f32 %v1572, %v2134
        %v2199 = vmul.f32 %v1574, %v2135
        %v2200 = vmul.f32 %v1578, %v2136
        %v2201 = vmul.f32 %v1580, %v2137
        %v2202 = vmul.f32 %v1582, %v2138
        %v2203 = vmul.f32 %v1584, %v2139
        %v2204 = vmul.f32 %v1588, %v2140
        %v2205 = vmul.f32 %v1590, %v2141
        %v2206 = vmul.f32 %v1592, %v2142
        %v2207 = vmul.f32 %v1594, %v2143
        %v2208 = vmul.f32 %v1598, %v2144
        %v2209 = vmul.f32 %v1600, %v2145
        %v2210 = vmul.f32 %v1602, %v2146
        %v2211 = vmul.f32 %v1604, %v2147
        %v2212 = vmul.f32 %v1608, %v2148
        %v2213 = vmul.f32 %v1610, %v2149
        %v2214 = vmul.f32 %v1612, %v2150
        %v2215 = vmul.f32 %v1614, %v2151
        %v2216 = vmul.f32 %v1618, %v2152
        %v2217 = vmul.f32 %v1620, %v2153
        %v2218 = vmul.f32 %v1622, %v2154
        %v2219 = vmul.f32 %v1624, %v2155
        %v2220 = vmul.f32 %v1628, %v2156
        %v2221 = vmul.f32 %v1630, %v2157
        %v2222 = vmul.f32 %v1632, %v2158
        %v2223 = vmul.f32 %v1634, %v2159
        %v2224 = vmul.f32 %v1638, %v2160
        %v2225 = vmul.f32 %v1640, %v2161
        %v2226 = vmul.f32 %v1642, %v2162
        %v2227 = vmul.f32 %v1644, %v2163
        %v2228 = vmul.f32 %v1648, %v2164
        %v2229 = vmul.f32 %v1650, %v2165
        %v2230 = vmul.f32 %v1652, %v2166
        %v2231 = vmul.f32 %v1654, %v2167
        %v2232 = vld [vmem:[#allocation16] sm:$0xff]
        %v2233 = vld [vmem:[#allocation16 + $0x8] sm:$0xff]
        %v2234 = vld [vmem:[#allocation16 + $0x10] sm:$0xff]
        %v2235 = vld [vmem:[#allocation16 + $0x18] sm:$0xff]
        %v2236 = vld [vmem:[#allocation16 + $0x20] sm:$0xff]
        %v2237 = vld [vmem:[#allocation16 + $0x28] sm:$0xff]
        %v2238 = vld [vmem:[#allocation16 + $0x30] sm:$0xff]
        %v2239 = vld [vmem:[#allocation16 + $0x38] sm:$0xff]
        %v2240 = vpack.c.bf16 %v2170, %v2168
        %v2241 = vpack.c.bf16 %v2171, %v2169
        %v2242 = vpack.c.bf16 %v2174, %v2172
        %v2243 = vpack.c.bf16 %v2175, %v2173
        %v2244 = vpack.c.bf16 %v2178, %v2176
        %v2245 = vpack.c.bf16 %v2179, %v2177
        %v2246 = vpack.c.bf16 %v2182, %v2180
        %v2247 = vpack.c.bf16 %v2183, %v2181
        %v2248 = vpack.c.bf16 %v2186, %v2184
        %v2249 = vpack.c.bf16 %v2187, %v2185
        %v2250 = vpack.c.bf16 %v2190, %v2188
        %v2251 = vpack.c.bf16 %v2191, %v2189
        %v2252 = vpack.c.bf16 %v2194, %v2192
        %v2253 = vpack.c.bf16 %v2195, %v2193
        %v2254 = vpack.c.bf16 %v2198, %v2196
        %v2255 = vpack.c.bf16 %v2199, %v2197
        %v2256 = vpack.c.bf16 %v2202, %v2200
        %v2257 = vpack.c.bf16 %v2203, %v2201
        %v2258 = vpack.c.bf16 %v2206, %v2204
        %v2259 = vpack.c.bf16 %v2207, %v2205
        %v2260 = vpack.c.bf16 %v2210, %v2208
        %v2261 = vpack.c.bf16 %v2211, %v2209
        %v2262 = vpack.c.bf16 %v2214, %v2212
        %v2263 = vpack.c.bf16 %v2215, %v2213
        %v2264 = vpack.c.bf16 %v2218, %v2216
        %v2265 = vpack.c.bf16 %v2219, %v2217
        %v2266 = vpack.c.bf16 %v2222, %v2220
        %v2267 = vpack.c.bf16 %v2223, %v2221
        %v2268 = vpack.c.bf16 %v2226, %v2224
        %v2269 = vpack.c.bf16 %v2227, %v2225
        %v2270 = vpack.c.bf16 %v2230, %v2228
        %v2271 = vpack.c.bf16 %v2231, %v2229
        %v2272 = vld [vmem:[#allocation17] sm:$0xff]
        %v2273 = vld [vmem:[#allocation17 + $0x8] sm:$0xff]
        %v2274 = vld [vmem:[#allocation17 + $0x10] sm:$0xff]
        %v2275 = vld [vmem:[#allocation17 + $0x18] sm:$0xff]
        %v2276 = vld [vmem:[#allocation17 + $0x20] sm:$0xff]
        %v2277 = vld [vmem:[#allocation17 + $0x28] sm:$0xff]
        %v2278 = vld [vmem:[#allocation17 + $0x30] sm:$0xff]
        %v2279 = vld [vmem:[#allocation17 + $0x38] sm:$0xff]
        %2281 = vset.pattern.permute.xlu0 0
        %2282 = vperm.xlu0 %2281, %v2272
        %v2283 = vpop.permute.xlu0 %2282
        %2286 = vset.pattern.permute.xlu0 0
        %2287 = vperm.xlu0 %2286, %v2273
        %v2288 = vpop.permute.xlu0 %2287
        %2291 = vset.pattern.permute.xlu0 0
        %2292 = vperm.xlu0 %2291, %v2274
        %v2293 = vpop.permute.xlu0 %2292
        %2296 = vset.pattern.permute.xlu0 0
        %2297 = vperm.xlu0 %2296, %v2275
        %v2298 = vpop.permute.xlu0 %2297
        %2301 = vset.pattern.permute.xlu0 0
        %2302 = vperm.xlu0 %2301, %v2276
        %v2303 = vpop.permute.xlu0 %2302
        %2306 = vset.pattern.permute.xlu0 0
        %2307 = vperm.xlu0 %2306, %v2277
        %v2308 = vpop.permute.xlu0 %2307
        %2311 = vset.pattern.permute.xlu0 0
        %2312 = vperm.xlu0 %2311, %v2278
        %v2313 = vpop.permute.xlu0 %2312
        %2316 = vset.pattern.permute.xlu0 0
        %2317 = vperm.xlu0 %2316, %v2279
        %v2318 = vpop.permute.xlu0 %2317
        %v2328 = vunpack.c.l.b16 %v2232
        %v2329 = vunpack.c.h.b16 %v2232
        %v2330 = vunpack.c.l.b16 %v2233
        %v2331 = vunpack.c.h.b16 %v2233
        %v2332 = vunpack.c.l.b16 %v2234
        %v2333 = vunpack.c.h.b16 %v2234
        %v2334 = vunpack.c.l.b16 %v2235
        %v2335 = vunpack.c.h.b16 %v2235
        %v2336 = vunpack.c.l.b16 %v2236
        %v2337 = vunpack.c.h.b16 %v2236
        %v2338 = vunpack.c.l.b16 %v2237
        %v2339 = vunpack.c.h.b16 %v2237
        %v2340 = vunpack.c.l.b16 %v2238
        %v2341 = vunpack.c.h.b16 %v2238
        %v2342 = vunpack.c.l.b16 %v2239
        %v2343 = vunpack.c.h.b16 %v2239
        %v2344 = vpack.c.b16 %v2330, %v2328
        %v2345 = vpack.c.b16 %v2331, %v2329
        %v2346 = vpack.c.b16 %v2334, %v2332
        %v2347 = vpack.c.b16 %v2335, %v2333
        %v2348 = vpack.c.b16 %v2338, %v2336
        %v2349 = vpack.c.b16 %v2339, %v2337
        %v2350 = vpack.c.b16 %v2342, %v2340
        %v2351 = vpack.c.b16 %v2343, %v2341
        %2360 = vmatprep.subr.bf16.mxu0 %v2241
        %2361 = vmatpush1.bf16.msra.mxu0 %v2240
        %2362 = vmatprep.subr.bf16.mxu0 %v2243
        %2363 = vmatpush1.bf16.msra.mxu0 %v2242
        %2364 = vmatprep.subr.bf16.mxu0 %v2245
        %2365 = vmatpush1.bf16.msra.mxu0 %v2244
        %2366 = vmatprep.subr.bf16.mxu0 %v2247
        %2367 = vmatpush1.bf16.msra.mxu0 %v2246
        %2368 = vmatprep.subr.bf16.mxu0 %v2249
        %2369 = vmatpush1.bf16.msra.mxu0 %v2248
        %2370 = vmatprep.subr.bf16.mxu0 %v2251
        %2371 = vmatpush1.bf16.msra.mxu0 %v2250
        %2372 = vmatprep.subr.bf16.mxu0 %v2253
        %2373 = vmatpush1.bf16.msra.mxu0 %v2252
        %2374 = vmatprep.subr.bf16.mxu0 %v2255
        %2375 = vmatpush1.bf16.msra.mxu0 %v2254
        %2376 = vmatprep.subr.bf16.mxu0 %v2257
        %2377 = vmatpush1.bf16.msra.mxu0 %v2256
        %2378 = vmatprep.subr.bf16.mxu0 %v2259
        %2379 = vmatpush1.bf16.msra.mxu0 %v2258
        %2380 = vmatprep.subr.bf16.mxu0 %v2261
        %2381 = vmatpush1.bf16.msra.mxu0 %v2260
        %2382 = vmatprep.subr.bf16.mxu0 %v2263
        %2383 = vmatpush1.bf16.msra.mxu0 %v2262
        %2384 = vmatprep.subr.bf16.mxu0 %v2265
        %2385 = vmatpush1.bf16.msra.mxu0 %v2264
        %2386 = vmatprep.subr.bf16.mxu0 %v2267
        %2387 = vmatpush1.bf16.msra.mxu0 %v2266
        %2388 = vmatprep.subr.bf16.mxu0 %v2269
        %2389 = vmatpush1.bf16.msra.mxu0 %v2268
        %2390 = vmatprep.subr.bf16.mxu0 %v2271
        %2391 = vmatpush1.bf16.msra.mxu0 %v2270
        %2392 = vmatprep.mubr.bf16.mxu0 %v2345
        %2393 = vmatmul.mubr.bf16.gmra.mrb[0].mxu0 %v2344
        %v2394 = vpop.f32.mrb[0].mxu0
        %v2395 = vadd.f32 %v2283, %v2394
        %v2396 = vpop.f32.mrb[0].mxu0
        %v2397 = vadd.f32 %v2283, %v2396
        %v2398 = vpop.f32.mrb[0].mxu0
        %v2399 = vadd.f32 %v2288, %v2398
        %v2400 = vpop.f32.mrb[0].mxu0
        %v2401 = vadd.f32 %v2288, %v2400
        %2402 = vmatprep.mubr.bf16.mxu0 %v2347
        %2403 = vmatmul.mubr.bf16.gmra.mrb[0].mxu0 %v2346
        %v2404 = vpop.f32.mrb[0].mxu0
        %v2405 = vadd.f32 %v2293, %v2404
        %v2406 = vpop.f32.mrb[0].mxu0
        %v2407 = vadd.f32 %v2293, %v2406
        %v2408 = vpop.f32.mrb[0].mxu0
        %v2409 = vadd.f32 %v2298, %v2408
        %v2410 = vpop.f32.mrb[0].mxu0
        %v2411 = vadd.f32 %v2298, %v2410
        %2412 = vmatprep.mubr.bf16.mxu0 %v2349
        %2413 = vmatmul.mubr.bf16.gmra.mrb[0].mxu0 %v2348
        %v2414 = vpop.f32.mrb[0].mxu0
        %v2415 = vadd.f32 %v2303, %v2414
        %v2416 = vpop.f32.mrb[0].mxu0
        %v2417 = vadd.f32 %v2303, %v2416
        %v2418 = vpop.f32.mrb[0].mxu0
        %v2419 = vadd.f32 %v2308, %v2418
        %v2420 = vpop.f32.mrb[0].mxu0
        %v2421 = vadd.f32 %v2308, %v2420
        %2422 = vmatprep.mubr.bf16.mxu0 %v2351
        %2423 = vmatmul.mubr.bf16.gmra.mrb[0].mxu0 %v2350
        %v2424 = vpop.f32.mrb[0].mxu0
        %v2425 = vadd.f32 %v2313, %v2424
        %v2426 = vpop.f32.mrb[0].mxu0
        %v2427 = vadd.f32 %v2313, %v2426
        %v2428 = vpop.f32.mrb[0].mxu0
        %v2429 = vadd.f32 %v2318, %v2428
        %v2430 = vpop.f32.mrb[0].mxu0
        %v2431 = vadd.f32 %v2318, %v2430
        %2432 = vdwg.mxu0
        %v2433 = vadd.f32 %v850, %v2395
        %v2434 = vadd.f32 %v851, %v2397
        %v2435 = vadd.f32 %v852, %v2399
        %v2436 = vadd.f32 %v853, %v2401
        %v2437 = vadd.f32 %v854, %v2405
        %v2438 = vadd.f32 %v855, %v2407
        %v2439 = vadd.f32 %v856, %v2409
        %v2440 = vadd.f32 %v857, %v2411
        %v2441 = vadd.f32 %v858, %v2415
        %v2442 = vadd.f32 %v859, %v2417
        %v2443 = vadd.f32 %v860, %v2419
        %v2444 = vadd.f32 %v861, %v2421
        %v2445 = vadd.f32 %v862, %v2425
        %v2446 = vadd.f32 %v863, %v2427
        %v2447 = vadd.f32 %v864, %v2429
        %v2448 = vadd.f32 %v865, %v2431
        %2449 = vst [vmem:[%s554] sm:$0xff] %v2433
        %2450 = vst [vmem:[%s554 + $0x8] sm:$0xff] %v2434
        %2451 = vst [vmem:[%s554 + $0x10] sm:$0xff] %v2435
        %2452 = vst [vmem:[%s554 + $0x18] sm:$0xff] %v2436
        %2453 = vst [vmem:[%s554 + $0x20] sm:$0xff] %v2437
        %2454 = vst [vmem:[%s554 + $0x28] sm:$0xff] %v2438
        %2455 = vst [vmem:[%s554 + $0x30] sm:$0xff] %v2439
        %2456 = vst [vmem:[%s554 + $0x38] sm:$0xff] %v2440
        %2457 = vst [vmem:[%s554 + $0x40] sm:$0xff] %v2441
        %2458 = vst [vmem:[%s554 + $0x48] sm:$0xff] %v2442
        %2459 = vst [vmem:[%s554 + $0x50] sm:$0xff] %v2443
        %2460 = vst [vmem:[%s554 + $0x58] sm:$0xff] %v2444
        %2461 = vst [vmem:[%s554 + $0x60] sm:$0xff] %v2445
        %2462 = vst [vmem:[%s554 + $0x68] sm:$0xff] %v2446
        %2463 = vst [vmem:[%s554 + $0x70] sm:$0xff] %v2447
        %2464 = vst [vmem:[%s554 + $0x78] sm:$0xff] %v2448
        %s2465 = sand.u32 %s280, 1
        %s2466 = scalar_lea.sflag [#allocation4], %s2465
        %s2467 = sand.u32 %s280, 1
        %s2468 = smul.addr %s2467, 128
        %s2469 = scalar_lea.vmem [#allocation19], %s2468
        // Predicated region
        $region101: #{intern_image_layer_forward.5} parent=59 // pred_check
          %p2470 = pneg %p290
        $region102: #{intern_image_layer_forward.5} parent=59 // pred_check_branch
          %2472 = sbr.rel (%p2470) target = $region104
        $region103: #{intern_image_layer_forward.5} parent=59 // pred_region
          %s2473 = smul.u32 2, %s39
          %s2475 = ssub.s32 2048, 2048
          %2476 = vsyncadd %s2466, %s2475
          %s2477 = smul.addr %s38, 16
          %s2478 = sadd.s32 %s2473, %s2477
          %s2479 = smul.addr %s2478, 128
          %s2480 = scalar_lea.hbm %s10, %s2479
          %s2481 = sshll.u32 %s2469, 4
          %s2482 = int_to_ptr.vmem [resolvable:$true] %s2481
          %2487 = dma.vmem_to_hbm [thread:$0]  %s2482, 2048, %s2480, %s2466, 256, 256, 16
        $region104: #{intern_image_layer_forward.5} parent=59 // pred_fallthru
          _
      $region60: #{intern_image_layer_forward.5} parent=5 // pred_fallthru
        _
      %p2488 = scmp.le.s32.totalorder 2, %s29
      // Predicated region
      $region105: #{intern_image_layer_forward.5} parent=5 // pred_check
        %p2489 = pneg %p2488
      $region106: #{intern_image_layer_forward.5} parent=5 // pred_check_branch
        %2491 = sbr.rel (%p2489) target = $region108
      $region107: #{intern_image_layer_forward.5} parent=5 // pred_region
        %s2492 = ssub.s32 %s29, 2
        // Predicated region
        $region109: #{intern_image_layer_forward.5} parent=107 // pred_check
          %p2493 = pneg %p296
        $region110: #{intern_image_layer_forward.5} parent=107 // pred_check_branch
          %2495 = sbr.rel (%p2493) target = $region112
        $region111: #{intern_image_layer_forward.5} parent=107 // pred_region
          %s2496 = sand.u32 %s281, 1
          %s2497 = scalar_lea.sflag [#allocation4], %s2496
          %s2498 = sand.u32 %s281, 1
          %s2499 = smul.addr %s2498, 128
          %s2500 = scalar_lea.vmem [#allocation19], %s2499
          %2501 = dma.done %s2497, 2048
        $region112: #{intern_image_layer_forward.5} parent=107 // pred_fallthru
          _
      $region108: #{intern_image_layer_forward.5} parent=5 // pred_fallthru
        _
    $region6: #{intern_image_layer_forward.5} parent=1 // loop_footer
      %s33 = sadd.s32 1, %s29
    $region7: #{intern_image_layer_forward.5} parent=1 // loop_footer_branch
      %28 = sbr.rel target = $region3
    $region8: #{intern_image_layer_forward.5} parent=1 // loop_exit
      _
    %2502 = vsyncpa [#allocation3], 1
    %s2503 = scalar_lea.sflag [#allocation3], 1
    %2504 = vsyncpa %s2503, 1
    %2505 = vsyncpa [#allocation6], 1
    %2506 = vsyncpa [#allocation9], 1
    %s2507 = scalar_lea.sflag [#allocation9], 1
    %2508 = vsyncpa %s2507, 1
    %2509 = vsyncpa [#allocation12], 1
    %2510 = vsyncpa [#allocation15], 1
    %2511 = vsyncpa [#allocation18], 1
    %2512 = vsyncpa [#allocation4], 1
    %s2513 = scalar_lea.sflag [#allocation4], 1
    %2514 = vsyncpa %s2513, 1

</llo_original>
